<compile_context>
chip_gen: v7x
topology: tpu7x:2x2x1
jax: 0.10.0
libtpu: 0.0.40
codegen_flags: <defaults>
</compile_context>

<pallas_src>
import jax
import jax.numpy as jnp
from jax import lax
from jax.experimental import pallas as pl
from jax.experimental.pallas import tpu as pltpu


# ------------------------------- Pallas kernel -------------------------------

def _spp_kernel(x_ref, o13_ref, o9_ref, o5_ref, pad_ref):
    """One channels-last (H, W, Cb) slab -> the three pooled branches.

    x_ref, o*_ref : (H, W, Cb)      VMEM blocks (batch dim squeezed away)
    pad_ref       : (H+4, W+4, Cb)  -inf padded VMEM scratch
    """
    H, W, Cb = x_ref.shape
    dt = pad_ref.dtype

    # Border-only -inf init (MaxPool2d "same" padding semantics).  The interior
    # is overwritten by every pool; the border columns of the interior rows are
    # re-written with -inf by the full-width H-pass store, and the border rows
    # are never touched, so the -inf invariant holds across the chained pools.
    pad_ref[0:2, :, :] = jnp.full((2, W + 4, Cb), -jnp.inf, dt)
    pad_ref[H + 2:H + 4, :, :] = jnp.full((2, W + 4, Cb), -jnp.inf, dt)
    pad_ref[2:H + 2, 0:2, :] = jnp.full((H, 2, Cb), -jnp.inf, dt)
    pad_ref[2:H + 2, W + 2:W + 4, :] = jnp.full((H, 2, Cb), -jnp.inf, dt)

    def pool5(src_ref, dst_ref):
        """5x5 max pool, stride 1, padding 2 (-inf), separable rows then cols.

        Reads src_ref, writes dst_ref (write-through: nothing stays live across
        pools).  Every window tap is a static shifted slice + jnp.maximum.
        """
        pad_ref[2:H + 2, 2:W + 2, :] = src_ref[...]
        # --- H pass: full padded width -> sublane-offset-0 taps and store.
        t = pad_ref[0:H, :, :]
        for dh in range(1, 5):
            t = jnp.maximum(t, pad_ref[dh:dh + H, :, :])
        pad_ref[2:H + 2, :, :] = t        # border cols stay -inf (all taps -inf)
        # --- W pass.
        r = pad_ref[2:H + 2, 0:W, :]
        for dw in range(1, 5):
            r = jnp.maximum(r, pad_ref[2:H + 2, dw:dw + W, :])
        dst_ref[...] = r

    pool5(x_ref, o5_ref)       # k=5
    pool5(o5_ref, o9_ref)      # k=9  == mp5 o mp5
    pool5(o9_ref, o13_ref)     # k=13 == mp5 o mp5 o mp5


# ------------------------------ wrapper helpers -------------------------------

def _pick_c_blk(N, C, H, W, itemsize, min_grid_steps=2,
                vmem_budget=12 * 1024 * 1024):
    """Largest 128-multiple divisor of C that fits the VMEM budget, lowered only
    if needed to keep >= `min_grid_steps` grid steps (v7x has 2 TensorCores)."""
    if C % 128 != 0:
        return C  # small / ragged channel counts: one full-C lane-padded block

    def footprint(cb):
        slab = H * W * cb * itemsize
        pad = (H + 4) * (W + 4) * cb * itemsize
        # in (x2 double-buffer) + 3 outs (x2) + pad scratch + working temps.
        return 2 * slab + 6 * slab + pad + 3 * slab

    divs = [d for d in range(128, C + 1, 128)
            if C % d == 0 and footprint(d) <= vmem_budget] or [128]
    c_blk = divs[-1]
    if N * (C // c_blk) < min_grid_steps:
        for d in reversed(divs):
            if N * (C // d) >= min_grid_steps:
                c_blk = d
                break
    return c_blk


def _spp_pools_nhwc(x, c_blk=None):
    """x: (N, H, W, C) channels-last -> (mp13, mp9, mp5), each (N, H, W, C)."""
    if not jnp.issubdtype(x.dtype, jnp.floating):
        raise TypeError("SPP uses -inf max-pool padding; input must be floating point")
    N, H, W, C = x.shape
    if c_blk is None:
        c_blk = _pick_c_blk(N, C, H, W, jnp.dtype(x.dtype).itemsize)

    spec = pl.BlockSpec((None, H, W, c_blk), lambda n, c: (n, 0, 0, c))
    branch = jax.ShapeDtypeStruct((N, H, W, C), x.dtype)

    return pl.pallas_call(
        _spp_kernel,
        out_shape=(branch, branch, branch),
        grid=(N, pl.cdiv(C, c_blk)),
        in_specs=[spec],
        out_specs=(spec, spec, spec),
        scratch_shapes=[pltpu.VMEM((H + 4, W + 4, c_blk), x.dtype)],
        compiler_params=pltpu.CompilerParams(
            dimension_semantics=("parallel", "parallel"),
            vmem_limit_bytes=32 * 1024 * 1024),
    )(x)


def spp_nhwc(x, c_blk=None):
    """Fast path, zero layout plumbing.

    x: (N, H, W, C) -> (N, H, W, 4*C), channel blocks ordered [mp13, mp9, mp5, x]
    (the NHWC image of the PyTorch channel concat).  The identity branch reuses
    the input array directly.
    """
    p13, p9, p5 = _spp_pools_nhwc(x, c_blk)
    return jnp.concatenate([p13, p9, p5, x], axis=-1)


def spp(x, c_blk=None):
    """Module-faithful path. x: (N, C, H, W) -> (N, 4*C, H, W), order [13, 9, 5, id].

    Keeps the PyTorch NCHW contract; the output-side relayout is the cost of an
    NCHW consumer of a channels-last kernel — use spp_nhwc() for NHWC pipelines.
    The identity branch reuses `x` directly (already NCHW, no kernel write).
    """
    if not jnp.issubdtype(x.dtype, jnp.floating):
        raise TypeError("SPP uses -inf max-pool padding; input must be floating point")
    x_cl = jnp.transpose(x, (0, 2, 3, 1))          # (N, H, W, C)
    p13, p9, p5 = _spp_pools_nhwc(x_cl, c_blk)
    to_nchw = lambda a: jnp.transpose(a, (0, 3, 1, 2))
    return jnp.concatenate([to_nchw(p13), to_nchw(p9), to_nchw(p5), x], axis=1)


# ----------------------------- pure-JAX reference -----------------------------

def _ref_maxpool(x, k):
    p = k // 2
    init = jnp.asarray(-jnp.inf, dtype=x.dtype)
    return lax.reduce_window(
        x, init, lax.max,
        window_dimensions=(1, 1, k, k),
        window_strides=(1, 1, 1, 1),
        padding=((0, 0), (0, 0), (p, p), (p, p)))


def _ref_spp(x):
    return jnp.concatenate(
        [_ref_maxpool(x, 13), _ref_maxpool(x, 9), _ref_maxpool(x, 5), x], axis=1)


# ------------------------------------ test ------------------------------------

if __name__ == "__main__":
    key = jax.random.PRNGKey(0)
    k1, k2, k3 = jax.random.split(key, 3)

    # Small shape from the module spec (full-C, non-128 channel block path).
    x = jax.random.normal(k1, (2, 4, 16, 16), dtype=jnp.float32)
    out = jax.block_until_ready(spp(x))
    ref = jax.block_until_ready(_ref_spp(x))
    assert out.shape == (2, 16, 16, 16), out.shape
    assert jnp.allclose(out, ref), "NCHW mismatch at (2, 4, 16, 16)"

    # Realistic YOLOv4 SPP shape: multi-block channel grid (c_blk=256, 2 steps).
    x = jax.random.normal(k2, (1, 512, 13, 13), dtype=jnp.float32)
    out = jax.block_until_ready(spp(x))
    ref = jax.block_until_ready(_ref_spp(x))
    assert out.shape == (1, 2048, 13, 13), out.shape
    assert jnp.allclose(out, ref), "NCHW mismatch at (1, 512, 13, 13)"

    # NHWC fast path (no layout plumbing) + bf16 (max pooling is exact in bf16).
    x = jax.random.normal(k3, (2, 384, 19, 19), dtype=jnp.bfloat16)
    x_nhwc = jnp.transpose(x, (0, 2, 3, 1))
    out_nhwc = jax.block_until_ready(spp_nhwc(x_nhwc))
    ref_nhwc = jnp.transpose(_ref_spp(x), (0, 2, 3, 1))
    assert out_nhwc.shape == (2, 19, 19, 4 * 384), out_nhwc.shape
    assert jnp.allclose(out_nhwc, ref_nhwc), "NHWC mismatch at (2, 384, 19, 19) bf16"

    print("KERNEL_OK")
</pallas_src>

<mosaic_0001>
module attributes {stable_mosaic.version = 11 : i64} {
  func.func @_spp_kernel(%arg0: i32, %arg1: i32, %arg2: memref<1x16x16x4xf32, #tpu.memory_space<vmem>>, %arg3: memref<1x16x16x4xf32, #tpu.memory_space<vmem>>, %arg4: memref<1x16x16x4xf32, #tpu.memory_space<vmem>>, %arg5: memref<1x16x16x4xf32, #tpu.memory_space<vmem>>, %arg6: memref<20x20x4xf32, #tpu.memory_space<vmem>>) attributes {dimension_semantics = [#tpu.dimension_semantics<parallel>, #tpu.dimension_semantics<parallel>], iteration_bounds = array<i64: 2, 1>, scalar_prefetch = 0 : i64, scratch_operands = 1 : i64, tpu.core_type = #tpu.core_type<tc>, window_params = [{transform_indices = @transform_0, window_bounds = array<i64: 1, 16, 16, 4>}, {transform_indices = @transform_1, window_bounds = array<i64: 1, 16, 16, 4>}, {transform_indices = @transform_2, window_bounds = array<i64: 1, 16, 16, 4>}, {transform_indices = @transform_3, window_bounds = array<i64: 1, 16, 16, 4>}]} {
    %cst = arith.constant 0xFF800000 : f32
    %0 = vector.broadcast %cst : f32 to vector<2x20x4xf32>
    %c0 = arith.constant 0 : index
    %c0_0 = arith.constant 0 : index
    %c0_1 = arith.constant 0 : index
    %1 = vector.load %arg6[%c0, %c0_0, %c0_1] : memref<20x20x4xf32, #tpu.memory_space<vmem>>, vector<2x20x4xf32>
    tpu.vector_store %arg6[%c0, %c0_0, %c0_1], %0 {strides = array<i32>} : memref<20x20x4xf32, #tpu.memory_space<vmem>>, vector<2x20x4xf32>,
    %cst_2 = arith.constant 0xFF800000 : f32
    %2 = vector.broadcast %cst_2 : f32 to vector<2x20x4xf32>
    %c18 = arith.constant 18 : index
    %c0_3 = arith.constant 0 : index
    %c0_4 = arith.constant 0 : index
    %3 = vector.load %arg6[%c18, %c0_3, %c0_4] : memref<20x20x4xf32, #tpu.memory_space<vmem>>, vector<2x20x4xf32>
    tpu.vector_store %arg6[%c18, %c0_3, %c0_4], %2 {strides = array<i32>} : memref<20x20x4xf32, #tpu.memory_space<vmem>>, vector<2x20x4xf32>,
    %cst_5 = arith.constant 0xFF800000 : f32
    %4 = vector.broadcast %cst_5 : f32 to vector<16x2x4xf32>
    %c2 = arith.constant 2 : index
    %c0_6 = arith.constant 0 : index
    %c0_7 = arith.constant 0 : index
    %5 = vector.load %arg6[%c2, %c0_6, %c0_7] : memref<20x20x4xf32, #tpu.memory_space<vmem>>, vector<16x2x4xf32>
    tpu.vector_store %arg6[%c2, %c0_6, %c0_7], %4 {strides = array<i32>} : memref<20x20x4xf32, #tpu.memory_space<vmem>>, vector<16x2x4xf32>,
    %cst_8 = arith.constant 0xFF800000 : f32
    %6 = vector.broadcast %cst_8 : f32 to vector<16x2x4xf32>
    %c2_9 = arith.constant 2 : index
    %c18_10 = arith.constant 18 : index
    %c0_11 = arith.constant 0 : index
    %7 = vector.load %arg6[%c2_9, %c18_10, %c0_11] : memref<20x20x4xf32, #tpu.memory_space<vmem>>, vector<16x2x4xf32>
    tpu.vector_store %arg6[%c2_9, %c18_10, %c0_11], %6 {strides = array<i32>} : memref<20x20x4xf32, #tpu.memory_space<vmem>>, vector<16x2x4xf32>,
    %c0_12 = arith.constant 0 : index
    %c0_13 = arith.constant 0 : index
    %c0_14 = arith.constant 0 : index
    %c0_15 = arith.constant 0 : index
    %8 = vector.load %arg2[%c0_12, %c0_13, %c0_14, %c0_15] : memref<1x16x16x4xf32, #tpu.memory_space<vmem>>, vector<1x16x16x4xf32>
    %9 = vector.shape_cast %8 : vector<1x16x16x4xf32> to vector<16x16x4xf32>
    %c2_16 = arith.constant 2 : index
    %c2_17 = arith.constant 2 : index
    %c0_18 = arith.constant 0 : index
    %10 = vector.load %arg6[%c2_16, %c2_17, %c0_18] : memref<20x20x4xf32, #tpu.memory_space<vmem>>, vector<16x16x4xf32>
    tpu.vector_store %arg6[%c2_16, %c2_17, %c0_18], %9 {strides = array<i32>} : memref<20x20x4xf32, #tpu.memory_space<vmem>>, vector<16x16x4xf32>,
    %c0_19 = arith.constant 0 : index
    %c0_20 = arith.constant 0 : index
    %c0_21 = arith.constant 0 : index
    %11 = vector.load %arg6[%c0_19, %c0_20, %c0_21] : memref<20x20x4xf32, #tpu.memory_space<vmem>>, vector<16x20x4xf32>
    %c1 = arith.constant 1 : index
    %c0_22 = arith.constant 0 : index
    %c0_23 = arith.constant 0 : index
    %12 = vector.load %arg6[%c1, %c0_22, %c0_23] : memref<20x20x4xf32, #tpu.memory_space<vmem>>, vector<16x20x4xf32>
    %13 = arith.maximumf %11, %12 : vector<16x20x4xf32>
    %c2_24 = arith.constant 2 : index
    %c0_25 = arith.constant 0 : index
    %c0_26 = arith.constant 0 : index
    %14 = vector.load %arg6[%c2_24, %c0_25, %c0_26] : memref<20x20x4xf32, #tpu.memory_space<vmem>>, vector<16x20x4xf32>
    %15 = arith.maximumf %13, %14 : vector<16x20x4xf32>
    %c3 = arith.constant 3 : index
    %c0_27 = arith.constant 0 : index
    %c0_28 = arith.constant 0 : index
    %16 = vector.load %arg6[%c3, %c0_27, %c0_28] : memref<20x20x4xf32, #tpu.memory_space<vmem>>, vector<16x20x4xf32>
    %17 = arith.maximumf %15, %16 : vector<16x20x4xf32>
    %c4 = arith.constant 4 : index
    %c0_29 = arith.constant 0 : index
    %c0_30 = arith.constant 0 : index
    %18 = vector.load %arg6[%c4, %c0_29, %c0_30] : memref<20x20x4xf32, #tpu.memory_space<vmem>>, vector<16x20x4xf32>
    %19 = arith.maximumf %17, %18 : vector<16x20x4xf32>
    %c2_31 = arith.constant 2 : index
    %c0_32 = arith.constant 0 : index
    %c0_33 = arith.constant 0 : index
    %20 = vector.load %arg6[%c2_31, %c0_32, %c0_33] : memref<20x20x4xf32, #tpu.memory_space<vmem>>, vector<16x20x4xf32>
    tpu.vector_store %arg6[%c2_31, %c0_32, %c0_33], %19 {strides = array<i32>} : memref<20x20x4xf32, #tpu.memory_space<vmem>>, vector<16x20x4xf32>,
    %c2_34 = arith.constant 2 : index
    %c0_35 = arith.constant 0 : index
    %c0_36 = arith.constant 0 : index
    %21 = vector.load %arg6[%c2_34, %c0_35, %c0_36] : memref<20x20x4xf32, #tpu.memory_space<vmem>>, vector<16x16x4xf32>
    %c2_37 = arith.constant 2 : index
    %c1_38 = arith.constant 1 : index
    %c0_39 = arith.constant 0 : index
    %22 = vector.load %arg6[%c2_37, %c1_38, %c0_39] : memref<20x20x4xf32, #tpu.memory_space<vmem>>, vector<16x16x4xf32>
    %23 = arith.maximumf %21, %22 : vector<16x16x4xf32>
    %c2_40 = arith.constant 2 : index
    %c2_41 = arith.constant 2 : index
    %c0_42 = arith.constant 0 : index
    %24 = vector.load %arg6[%c2_40, %c2_41, %c0_42] : memref<20x20x4xf32, #tpu.memory_space<vmem>>, vector<16x16x4xf32>
    %25 = arith.maximumf %23, %24 : vector<16x16x4xf32>
    %c2_43 = arith.constant 2 : index
    %c3_44 = arith.constant 3 : index
    %c0_45 = arith.constant 0 : index
    %26 = vector.load %arg6[%c2_43, %c3_44, %c0_45] : memref<20x20x4xf32, #tpu.memory_space<vmem>>, vector<16x16x4xf32>
    %27 = arith.maximumf %25, %26 : vector<16x16x4xf32>
    %c2_46 = arith.constant 2 : index
    %c4_47 = arith.constant 4 : index
    %c0_48 = arith.constant 0 : index
    %28 = vector.load %arg6[%c2_46, %c4_47, %c0_48] : memref<20x20x4xf32, #tpu.memory_space<vmem>>, vector<16x16x4xf32>
    %29 = arith.maximumf %27, %28 : vector<16x16x4xf32>
    %c0_49 = arith.constant 0 : index
    %c0_50 = arith.constant 0 : index
    %c0_51 = arith.constant 0 : index
    %c0_52 = arith.constant 0 : index
    %30 = vector.load %arg5[%c0_49, %c0_50, %c0_51, %c0_52] : memref<1x16x16x4xf32, #tpu.memory_space<vmem>>, vector<1x16x16x4xf32>
    %31 = vector.shape_cast %30 : vector<1x16x16x4xf32> to vector<16x16x4xf32>
    %32 = vector.shape_cast %29 : vector<16x16x4xf32> to vector<1x16x16x4xf32>
    tpu.vector_store %arg5[%c0_49, %c0_50, %c0_51, %c0_52], %32 {strides = array<i32>} : memref<1x16x16x4xf32, #tpu.memory_space<vmem>>, vector<1x16x16x4xf32>,
    %c0_53 = arith.constant 0 : index
    %c0_54 = arith.constant 0 : index
    %c0_55 = arith.constant 0 : index
    %c0_56 = arith.constant 0 : index
    %33 = vector.load %arg5[%c0_53, %c0_54, %c0_55, %c0_56] : memref<1x16x16x4xf32, #tpu.memory_space<vmem>>, vector<1x16x16x4xf32>
    %34 = vector.shape_cast %33 : vector<1x16x16x4xf32> to vector<16x16x4xf32>
    %c2_57 = arith.constant 2 : index
    %c2_58 = arith.constant 2 : index
    %c0_59 = arith.constant 0 : index
    %35 = vector.load %arg6[%c2_57, %c2_58, %c0_59] : memref<20x20x4xf32, #tpu.memory_space<vmem>>, vector<16x16x4xf32>
    tpu.vector_store %arg6[%c2_57, %c2_58, %c0_59], %34 {strides = array<i32>} : memref<20x20x4xf32, #tpu.memory_space<vmem>>, vector<16x16x4xf32>,
    %c0_60 = arith.constant 0 : index
    %c0_61 = arith.constant 0 : index
    %c0_62 = arith.constant 0 : index
    %36 = vector.load %arg6[%c0_60, %c0_61, %c0_62] : memref<20x20x4xf32, #tpu.memory_space<vmem>>, vector<16x20x4xf32>
    %c1_63 = arith.constant 1 : index
    %c0_64 = arith.constant 0 : index
    %c0_65 = arith.constant 0 : index
    %37 = vector.load %arg6[%c1_63, %c0_64, %c0_65] : memref<20x20x4xf32, #tpu.memory_space<vmem>>, vector<16x20x4xf32>
    %38 = arith.maximumf %36, %37 : vector<16x20x4xf32>
    %c2_66 = arith.constant 2 : index
    %c0_67 = arith.constant 0 : index
    %c0_68 = arith.constant 0 : index
    %39 = vector.load %arg6[%c2_66, %c0_67, %c0_68] : memref<20x20x4xf32, #tpu.memory_space<vmem>>, vector<16x20x4xf32>
    %40 = arith.maximumf %38, %39 : vector<16x20x4xf32>
    %c3_69 = arith.constant 3 : index
    %c0_70 = arith.constant 0 : index
    %c0_71 = arith.constant 0 : index
    %41 = vector.load %arg6[%c3_69, %c0_70, %c0_71] : memref<20x20x4xf32, #tpu.memory_space<vmem>>, vector<16x20x4xf32>
    %42 = arith.maximumf %40, %41 : vector<16x20x4xf32>
    %c4_72 = arith.constant 4 : index
    %c0_73 = arith.constant 0 : index
    %c0_74 = arith.constant 0 : index
    %43 = vector.load %arg6[%c4_72, %c0_73, %c0_74] : memref<20x20x4xf32, #tpu.memory_space<vmem>>, vector<16x20x4xf32>
    %44 = arith.maximumf %42, %43 : vector<16x20x4xf32>
    %c2_75 = arith.constant 2 : index
    %c0_76 = arith.constant 0 : index
    %c0_77 = arith.constant 0 : index
    %45 = vector.load %arg6[%c2_75, %c0_76, %c0_77] : memref<20x20x4xf32, #tpu.memory_space<vmem>>, vector<16x20x4xf32>
    tpu.vector_store %arg6[%c2_75, %c0_76, %c0_77], %44 {strides = array<i32>} : memref<20x20x4xf32, #tpu.memory_space<vmem>>, vector<16x20x4xf32>,
    %c2_78 = arith.constant 2 : index
    %c0_79 = arith.constant 0 : index
    %c0_80 = arith.constant 0 : index
    %46 = vector.load %arg6[%c2_78, %c0_79, %c0_80] : memref<20x20x4xf32, #tpu.memory_space<vmem>>, vector<16x16x4xf32>
    %c2_81 = arith.constant 2 : index
    %c1_82 = arith.constant 1 : index
    %c0_83 = arith.constant 0 : index
    %47 = vector.load %arg6[%c2_81, %c1_82, %c0_83] : memref<20x20x4xf32, #tpu.memory_space<vmem>>, vector<16x16x4xf32>
    %48 = arith.maximumf %46, %47 : vector<16x16x4xf32>
    %c2_84 = arith.constant 2 : index
    %c2_85 = arith.constant 2 : index
    %c0_86 = arith.constant 0 : index
    %49 = vector.load %arg6[%c2_84, %c2_85, %c0_86] : memref<20x20x4xf32, #tpu.memory_space<vmem>>, vector<16x16x4xf32>
    %50 = arith.maximumf %48, %49 : vector<16x16x4xf32>
    %c2_87 = arith.constant 2 : index
    %c3_88 = arith.constant 3 : index
    %c0_89 = arith.constant 0 : index
    %51 = vector.load %arg6[%c2_87, %c3_88, %c0_89] : memref<20x20x4xf32, #tpu.memory_space<vmem>>, vector<16x16x4xf32>
    %52 = arith.maximumf %50, %51 : vector<16x16x4xf32>
    %c2_90 = arith.constant 2 : index
    %c4_91 = arith.constant 4 : index
    %c0_92 = arith.constant 0 : index
    %53 = vector.load %arg6[%c2_90, %c4_91, %c0_92] : memref<20x20x4xf32, #tpu.memory_space<vmem>>, vector<16x16x4xf32>
    %54 = arith.maximumf %52, %53 : vector<16x16x4xf32>
    %c0_93 = arith.constant 0 : index
    %c0_94 = arith.constant 0 : index
    %c0_95 = arith.constant 0 : index
    %c0_96 = arith.constant 0 : index
    %55 = vector.load %arg4[%c0_93, %c0_94, %c0_95, %c0_96] : memref<1x16x16x4xf32, #tpu.memory_space<vmem>>, vector<1x16x16x4xf32>
    %56 = vector.shape_cast %55 : vector<1x16x16x4xf32> to vector<16x16x4xf32>
    %57 = vector.shape_cast %54 : vector<16x16x4xf32> to vector<1x16x16x4xf32>
    tpu.vector_store %arg4[%c0_93, %c0_94, %c0_95, %c0_96], %57 {strides = array<i32>} : memref<1x16x16x4xf32, #tpu.memory_space<vmem>>, vector<1x16x16x4xf32>,
    %c0_97 = arith.constant 0 : index
    %c0_98 = arith.constant 0 : index
    %c0_99 = arith.constant 0 : index
    %c0_100 = arith.constant 0 : index
    %58 = vector.load %arg4[%c0_97, %c0_98, %c0_99, %c0_100] : memref<1x16x16x4xf32, #tpu.memory_space<vmem>>, vector<1x16x16x4xf32>
    %59 = vector.shape_cast %58 : vector<1x16x16x4xf32> to vector<16x16x4xf32>
    %c2_101 = arith.constant 2 : index
    %c2_102 = arith.constant 2 : index
    %c0_103 = arith.constant 0 : index
    %60 = vector.load %arg6[%c2_101, %c2_102, %c0_103] : memref<20x20x4xf32, #tpu.memory_space<vmem>>, vector<16x16x4xf32>
    tpu.vector_store %arg6[%c2_101, %c2_102, %c0_103], %59 {strides = array<i32>} : memref<20x20x4xf32, #tpu.memory_space<vmem>>, vector<16x16x4xf32>,
    %c0_104 = arith.constant 0 : index
    %c0_105 = arith.constant 0 : index
    %c0_106 = arith.constant 0 : index
    %61 = vector.load %arg6[%c0_104, %c0_105, %c0_106] : memref<20x20x4xf32, #tpu.memory_space<vmem>>, vector<16x20x4xf32>
    %c1_107 = arith.constant 1 : index
    %c0_108 = arith.constant 0 : index
    %c0_109 = arith.constant 0 : index
    %62 = vector.load %arg6[%c1_107, %c0_108, %c0_109] : memref<20x20x4xf32, #tpu.memory_space<vmem>>, vector<16x20x4xf32>
    %63 = arith.maximumf %61, %62 : vector<16x20x4xf32>
    %c2_110 = arith.constant 2 : index
    %c0_111 = arith.constant 0 : index
    %c0_112 = arith.constant 0 : index
    %64 = vector.load %arg6[%c2_110, %c0_111, %c0_112] : memref<20x20x4xf32, #tpu.memory_space<vmem>>, vector<16x20x4xf32>
    %65 = arith.maximumf %63, %64 : vector<16x20x4xf32>
    %c3_113 = arith.constant 3 : index
    %c0_114 = arith.constant 0 : index
    %c0_115 = arith.constant 0 : index
    %66 = vector.load %arg6[%c3_113, %c0_114, %c0_115] : memref<20x20x4xf32, #tpu.memory_space<vmem>>, vector<16x20x4xf32>
    %67 = arith.maximumf %65, %66 : vector<16x20x4xf32>
    %c4_116 = arith.constant 4 : index
    %c0_117 = arith.constant 0 : index
    %c0_118 = arith.constant 0 : index
    %68 = vector.load %arg6[%c4_116, %c0_117, %c0_118] : memref<20x20x4xf32, #tpu.memory_space<vmem>>, vector<16x20x4xf32>
    %69 = arith.maximumf %67, %68 : vector<16x20x4xf32>
    %c2_119 = arith.constant 2 : index
    %c0_120 = arith.constant 0 : index
    %c0_121 = arith.constant 0 : index
    %70 = vector.load %arg6[%c2_119, %c0_120, %c0_121] : memref<20x20x4xf32, #tpu.memory_space<vmem>>, vector<16x20x4xf32>
    tpu.vector_store %arg6[%c2_119, %c0_120, %c0_121], %69 {strides = array<i32>} : memref<20x20x4xf32, #tpu.memory_space<vmem>>, vector<16x20x4xf32>,
    %c2_122 = arith.constant 2 : index
    %c0_123 = arith.constant 0 : index
    %c0_124 = arith.constant 0 : index
    %71 = vector.load %arg6[%c2_122, %c0_123, %c0_124] : memref<20x20x4xf32, #tpu.memory_space<vmem>>, vector<16x16x4xf32>
    %c2_125 = arith.constant 2 : index
    %c1_126 = arith.constant 1 : index
    %c0_127 = arith.constant 0 : index
    %72 = vector.load %arg6[%c2_125, %c1_126, %c0_127] : memref<20x20x4xf32, #tpu.memory_space<vmem>>, vector<16x16x4xf32>
    %73 = arith.maximumf %71, %72 : vector<16x16x4xf32>
    %c2_128 = arith.constant 2 : index
    %c2_129 = arith.constant 2 : index
    %c0_130 = arith.constant 0 : index
    %74 = vector.load %arg6[%c2_128, %c2_129, %c0_130] : memref<20x20x4xf32, #tpu.memory_space<vmem>>, vector<16x16x4xf32>
    %75 = arith.maximumf %73, %74 : vector<16x16x4xf32>
    %c2_131 = arith.constant 2 : index
    %c3_132 = arith.constant 3 : index
    %c0_133 = arith.constant 0 : index
    %76 = vector.load %arg6[%c2_131, %c3_132, %c0_133] : memref<20x20x4xf32, #tpu.memory_space<vmem>>, vector<16x16x4xf32>
    %77 = arith.maximumf %75, %76 : vector<16x16x4xf32>
    %c2_134 = arith.constant 2 : index
    %c4_135 = arith.constant 4 : index
    %c0_136 = arith.constant 0 : index
    %78 = vector.load %arg6[%c2_134, %c4_135, %c0_136] : memref<20x20x4xf32, #tpu.memory_space<vmem>>, vector<16x16x4xf32>
    %79 = arith.maximumf %77, %78 : vector<16x16x4xf32>
    %c0_137 = arith.constant 0 : index
    %c0_138 = arith.constant 0 : index
    %c0_139 = arith.constant 0 : index
    %c0_140 = arith.constant 0 : index
    %80 = vector.load %arg3[%c0_137, %c0_138, %c0_139, %c0_140] : memref<1x16x16x4xf32, #tpu.memory_space<vmem>>, vector<1x16x16x4xf32>
    %81 = vector.shape_cast %80 : vector<1x16x16x4xf32> to vector<16x16x4xf32>
    %82 = vector.shape_cast %79 : vector<16x16x4xf32> to vector<1x16x16x4xf32>
    tpu.vector_store %arg3[%c0_137, %c0_138, %c0_139, %c0_140], %82 {strides = array<i32>} : memref<1x16x16x4xf32, #tpu.memory_space<vmem>>, vector<1x16x16x4xf32>,
    return
  }
  func.func @transform_0(%arg0: i32, %arg1: i32) -> (i32, i32, i32, i32) {
    %c0_i32 = arith.constant 0 : i32
    %c0_i32_0 = arith.constant 0 : i32
    %c0_i32_1 = arith.constant 0 : i32
    return %arg0, %c0_i32, %c0_i32_0, %arg1 : i32, i32, i32, i32
  }
  func.func @transform_1(%arg0: i32, %arg1: i32) -> (i32, i32, i32, i32) {
    %c0_i32 = arith.constant 0 : i32
    %c0_i32_0 = arith.constant 0 : i32
    %c0_i32_1 = arith.constant 0 : i32
    return %arg0, %c0_i32, %c0_i32_0, %arg1 : i32, i32, i32, i32
  }
  func.func @transform_2(%arg0: i32, %arg1: i32) -> (i32, i32, i32, i32) {
    %c0_i32 = arith.constant 0 : i32
    %c0_i32_0 = arith.constant 0 : i32
    %c0_i32_1 = arith.constant 0 : i32
    return %arg0, %c0_i32, %c0_i32_0, %arg1 : i32, i32, i32, i32
  }
  func.func @transform_3(%arg0: i32, %arg1: i32) -> (i32, i32, i32, i32) {
    %c0_i32 = arith.constant 0 : i32
    %c0_i32_0 = arith.constant 0 : i32
    %c0_i32_1 = arith.constant 0 : i32
    return %arg0, %c0_i32, %c0_i32_0, %arg1 : i32, i32, i32, i32
  }
}

</mosaic_0001>

<llo_original>
// kernel: tpu_custom_call.1
$region0: #{tpu_custom_call.1}
  #allocation0 [shape = 'u32[]', space=smem, size = 0x4, offset = 0x4, fixed_abs, tag = 'smem constant byte address 0x4 - core index']
  #allocation1 [shape = 'u32[144,128]{1,0:T(1,128)}', space=vmem, size = 0x12000, scoped, tag = 'internal scratch']
  #allocation2 [shape = 'f32[20,20,4]{2,1,0:T(8,128)}', space=vmem, size = 0x3c000, scoped, tag = 'scratch operand']
  %s0 = inlined_call_operand.vmem [shape: f32[2,16,16,4], index: 0, kind: input, shape index: {}]
  %s1 = inlined_call_operand.vmem [shape: f32[2,16,16,4], index: 1, kind: output, shape index: {0}]
  %s2 = inlined_call_operand.vmem [shape: f32[2,16,16,4], index: 2, kind: output, shape index: {1}]
  %s3 = inlined_call_operand.vmem [shape: f32[2,16,16,4], index: 3, kind: output, shape index: {2}]
  %4 = xla_tuple %s1, %s2, %s3
  %s5 = sld [smem:[#allocation0]]
  $region53: #{tpu_custom_call.1} parent=0
    _
  %s7 = ssub.s32 1, %s5
  %s8 = scalar_select 0, %s7, %s5
  loop: start=0, step=1, limit=4
  $region2: #{tpu_custom_call.1} parent=0 // loop_pre_header
    _
  $region3: #{tpu_custom_call.1} parent=0 // loop_header
    %s10 = sphi 0, %s14
    %p11 = scmp.ge.s32.totalorder %s10, 4
    %s17 = sphi 0, %s29
    %s18 = sphi 0, %s25
    %s19 = sphi 0, %s17
    %s20 = sphi 0, %s18
    %s21 = sphi 0, %s19
    %s22 = sphi 0, %s20
    %s34 = sphi 0, %s36
    %s37 = sphi 0, %s34
    %s38 = sphi 0, %s37
    %s54 = sphi 0, %s38
    %s62 = sphi 0, %s64
    %s65 = sphi 0, %s62
    %s66 = sphi 0, %s65
    %s82 = sphi 0, %s66
    %s90 = sphi 0, %s92
    %s93 = sphi 0, %s90
    %s94 = sphi 0, %s93
    %s110 = sphi 0, %s94
    %s118 = sphi 0, %s120
    %s121 = sphi 0, %s118
    %s122 = sphi 0, %s121
    %s138 = sphi 0, %s122
  $region4: #{tpu_custom_call.1} parent=0 // loop_header_branch
    %13 = sbr.rel (%p11) target = $region8
  $region5: #{tpu_custom_call.1} parent=0 // loop_body
    %s15 = ssub.s32 %s10, 1
    %s16 = ssub.s32 %s10, 2
    %s23 = sadd.s32 1, %s18
    %p24 = scmp.ge.s32.totalorder %s23, 1
    %s25 = scalar_select %p24, 0, %s23
    %s26 = sadd.s32 1, %s17
    %s27 = scalar_select %p24, %s26, %s17
    %p28 = scmp.ge.s32.totalorder %s27, 2
    %s29 = scalar_select %p28, 0, %s27
    %s30 = ssub.s32 %s17, %s29
    %s31 = ssub.s32 %s18, %s25
    %s32 = sor.u32 %s30, %s31
    %p33 = scmp.eq.s32.totalorder %s32, 0
    %s35 = sadd.s32 %s34, 1
    %s36 = scalar_select %p33, %s34, %s35
    %p39 = pneg %p33
    %p40 = scmp.eq.s32.totalorder %s10, 1
    %p41 = por %p39, %p40
    %p42 = scmp.ne.s32.totalorder %s34, %s37
    %p43 = scmp.eq.s32.totalorder %s10, 0
    %p44 = por %p42, %p43
    %p45 = scmp.ne.s32.totalorder %s34, %s37
    %p46 = scmp.eq.s32.totalorder %s15, 1
    %p47 = por %p45, %p46
    %p48 = scmp.ne.s32.totalorder %s37, %s38
    %p49 = scmp.eq.s32.totalorder %s15, 0
    %p50 = por %p48, %p49
    %p51 = scmp.ne.s32.totalorder %s37, %s38
    %p52 = scmp.eq.s32.totalorder %s16, 1
    %p53 = por %p51, %p52
    %p55 = scmp.ne.s32.totalorder %s38, %s54
    %p56 = scmp.eq.s32.totalorder %s16, 0
    %p57 = por %p55, %p56
    %s58 = ssub.s32 %s17, %s29
    %s59 = ssub.s32 %s18, %s25
    %s60 = sor.u32 %s58, %s59
    %p61 = scmp.eq.s32.totalorder %s60, 0
    %s63 = sadd.s32 %s62, 1
    %s64 = scalar_select %p61, %s62, %s63
    %p67 = pneg %p61
    %p68 = scmp.eq.s32.totalorder %s10, 1
    %p69 = por %p67, %p68
    %p70 = scmp.ne.s32.totalorder %s62, %s65
    %p71 = scmp.eq.s32.totalorder %s10, 0
    %p72 = por %p70, %p71
    %p73 = scmp.ne.s32.totalorder %s62, %s65
    %p74 = scmp.eq.s32.totalorder %s15, 1
    %p75 = por %p73, %p74
    %p76 = scmp.ne.s32.totalorder %s65, %s66
    %p77 = scmp.eq.s32.totalorder %s15, 0
    %p78 = por %p76, %p77
    %p79 = scmp.ne.s32.totalorder %s65, %s66
    %p80 = scmp.eq.s32.totalorder %s16, 1
    %p81 = por %p79, %p80
    %p83 = scmp.ne.s32.totalorder %s66, %s82
    %p84 = scmp.eq.s32.totalorder %s16, 0
    %p85 = por %p83, %p84
    %s86 = ssub.s32 %s17, %s29
    %s87 = ssub.s32 %s18, %s25
    %s88 = sor.u32 %s86, %s87
    %p89 = scmp.eq.s32.totalorder %s88, 0
    %s91 = sadd.s32 %s90, 1
    %s92 = scalar_select %p89, %s90, %s91
    %p95 = pneg %p89
    %p96 = scmp.eq.s32.totalorder %s10, 1
    %p97 = por %p95, %p96
    %p98 = scmp.ne.s32.totalorder %s90, %s93
    %p99 = scmp.eq.s32.totalorder %s10, 0
    %p100 = por %p98, %p99
    %p101 = scmp.ne.s32.totalorder %s90, %s93
    %p102 = scmp.eq.s32.totalorder %s15, 1
    %p103 = por %p101, %p102
    %p104 = scmp.ne.s32.totalorder %s93, %s94
    %p105 = scmp.eq.s32.totalorder %s15, 0
    %p106 = por %p104, %p105
    %p107 = scmp.ne.s32.totalorder %s93, %s94
    %p108 = scmp.eq.s32.totalorder %s16, 1
    %p109 = por %p107, %p108
    %p111 = scmp.ne.s32.totalorder %s94, %s110
    %p112 = scmp.eq.s32.totalorder %s16, 0
    %p113 = por %p111, %p112
    %s114 = ssub.s32 %s17, %s29
    %s115 = ssub.s32 %s18, %s25
    %s116 = sor.u32 %s114, %s115
    %p117 = scmp.eq.s32.totalorder %s116, 0
    %s119 = sadd.s32 %s118, 1
    %s120 = scalar_select %p117, %s118, %s119
    %p123 = pneg %p117
    %p124 = scmp.eq.s32.totalorder %s10, 1
    %p125 = por %p123, %p124
    %p126 = scmp.ne.s32.totalorder %s118, %s121
    %p127 = scmp.eq.s32.totalorder %s10, 0
    %p128 = por %p126, %p127
    %p129 = scmp.ne.s32.totalorder %s118, %s121
    %p130 = scmp.eq.s32.totalorder %s15, 1
    %p131 = por %p129, %p130
    %p132 = scmp.ne.s32.totalorder %s121, %s122
    %p133 = scmp.eq.s32.totalorder %s15, 0
    %p134 = por %p132, %p133
    %p135 = scmp.ne.s32.totalorder %s121, %s122
    %p136 = scmp.eq.s32.totalorder %s16, 1
    %p137 = por %p135, %p136
    %p139 = scmp.ne.s32.totalorder %s122, %s138
    %p140 = scmp.eq.s32.totalorder %s16, 0
    %p141 = por %p139, %p140
    %p142 = scmp.le.s32.totalorder 1, %s10
    %p143 = scmp.lt.s32.totalorder %s10, 3
    %p144 = pnand %p142, %p143
    %p145 = pneg %p144
    // Predicated region
    $region9: #{tpu_custom_call.1} parent=5 // pred_check
      _
    $region10: #{tpu_custom_call.1} parent=5 // pred_check_branch
      %147 = sbr.rel (%p144) target = $region12
    $region11: #{tpu_custom_call.1} parent=5 // pred_region
      %s148 = ssub.s32 %s10, 1
    $region12: #{tpu_custom_call.1} parent=5 // pred_fallthru
      _
    %p149 = scmp.lt.s32.totalorder %s10, 2
    // Predicated region
    $region13: #{tpu_custom_call.1} parent=5 // pred_check
      %p150 = pneg %p149
    $region14: #{tpu_custom_call.1} parent=5 // pred_check_branch
      %152 = sbr.rel (%p150) target = $region16
    $region15: #{tpu_custom_call.1} parent=5 // pred_region
      // Predicated region
      $region17: #{tpu_custom_call.1} parent=15 // pred_check
        %p153 = pneg %p44
      $region18: #{tpu_custom_call.1} parent=15 // pred_check_branch
        %155 = sbr.rel (%p153) target = $region20
      $region19: #{tpu_custom_call.1} parent=15 // pred_region
        %p156 = scmp.lt.s32.totalorder %s17, 1
        %s157 = scalar_select %p156, %s17, 1
        %p158 = scmp.lt.s32.totalorder %s18, 0
        %s159 = scalar_select %p158, %s18, 0
        %s160 = smul.addr %s157, 32
        %s161 = sadd.s32 %s159, %s160
        %s162 = smul.addr %s161, 8
        %s163 = scalar_lea.vmem %s0, %s162
      $region20: #{tpu_custom_call.1} parent=15 // pred_fallthru
        _
    $region16: #{tpu_custom_call.1} parent=5 // pred_fallthru
      _
    %p164 = scmp.le.s32.totalorder 1, %s10
    %p165 = scmp.lt.s32.totalorder %s10, 3
    %p166 = pnand %p164, %p165
    %p167 = pneg %p166
    // Predicated region
    $region21: #{tpu_custom_call.1} parent=5 // pred_check
      _
    $region22: #{tpu_custom_call.1} parent=5 // pred_check_branch
      %169 = sbr.rel (%p166) target = $region24
    $region23: #{tpu_custom_call.1} parent=5 // pred_region
      %s170 = ssub.s32 %s10, 1
      %p171 = scmp.lt.s32.totalorder %s19, 1
      %s172 = scalar_select %p171, %s19, 1
      %p173 = scmp.lt.s32.totalorder %s20, 0
      %s174 = scalar_select %p173, %s20, 0
      %s175 = smul.addr %s172, 32
      %s176 = sadd.s32 %s174, %s175
      %s177 = smul.addr %s176, 8
      %s178 = scalar_lea.vmem %s0, %s177
      %p179 = pneg %p50
      %p180 = pneg %p47
      %p181 = pneg %p78
      %p182 = pneg %p75
      %p183 = scmp.lt.s32.totalorder %s19, 1
      %s184 = scalar_select %p183, %s19, 1
      %p185 = scmp.lt.s32.totalorder %s20, 0
      %s186 = scalar_select %p185, %s20, 0
      %s187 = smul.addr %s184, 32
      %s188 = sadd.s32 %s186, %s187
      %s189 = smul.addr %s188, 8
      %s190 = scalar_lea.vmem %s1, %s189
      %p191 = pneg %p106
      %p192 = pneg %p103
      %p193 = scmp.lt.s32.totalorder %s19, 1
      %s194 = scalar_select %p193, %s19, 1
      %p195 = scmp.lt.s32.totalorder %s20, 0
      %s196 = scalar_select %p195, %s20, 0
      %s197 = smul.addr %s194, 32
      %s198 = sadd.s32 %s196, %s197
      %s199 = smul.addr %s198, 8
      %s200 = scalar_lea.vmem %s2, %s199
      %p201 = pneg %p134
      %p202 = pneg %p131
      %p203 = scmp.lt.s32.totalorder %s19, 1
      %s204 = scalar_select %p203, %s19, 1
      %p205 = scmp.lt.s32.totalorder %s20, 0
      %s206 = scalar_select %p205, %s20, 0
      %s207 = smul.addr %s204, 32
      %s208 = sadd.s32 %s206, %s207
      %s209 = smul.addr %s208, 8
      %s210 = scalar_lea.vmem %s3, %s209
      %p211 = scmp.lt.s32.totalorder %s19, 1
      %s212 = scalar_select %p211, %s19, 1
      %p213 = scmp.lt.s32.totalorder %s20, 0
      %s214 = scalar_select %p213, %s20, 0
      %s215 = smul.addr %s212, 32
      %s216 = sadd.s32 %s214, %s215
      %s217 = smul.addr %s216, 8
      %s218 = scalar_lea.vmem %s0, %s217
      %p219 = scmp.lt.s32.totalorder %s19, 1
      %s220 = scalar_select %p219, %s19, 1
      %p221 = scmp.lt.s32.totalorder %s20, 0
      %s222 = scalar_select %p221, %s20, 0
      %s223 = smul.addr %s220, 32
      %s224 = sadd.s32 %s222, %s223
      %s225 = smul.addr %s224, 8
      %s226 = scalar_lea.vmem %s1, %s225
      %p227 = scmp.lt.s32.totalorder %s19, 1
      %s228 = scalar_select %p227, %s19, 1
      %p229 = scmp.lt.s32.totalorder %s20, 0
      %s230 = scalar_select %p229, %s20, 0
      %s231 = smul.addr %s228, 32
      %s232 = sadd.s32 %s230, %s231
      %s233 = smul.addr %s232, 8
      %s234 = scalar_lea.vmem %s2, %s233
      %p235 = scmp.lt.s32.totalorder %s19, 1
      %s236 = scalar_select %p235, %s19, 1
      %p237 = scmp.lt.s32.totalorder %s20, 0
      %s238 = scalar_select %p237, %s20, 0
      %s239 = smul.addr %s236, 32
      %s240 = sadd.s32 %s238, %s239
      %s241 = smul.addr %s240, 8
      %s242 = scalar_lea.vmem %s3, %s241
      %vm243 = vcmask 31744
      %244 = vst.msk [vmem:[#allocation2] sm:$0xff] %vm243, -inf
      %245 = vst.msk [vmem:[#allocation2 + $0x8] sm:$0xff] %vm243, -inf
      %vm246 = vcmask 27648
      %247 = vst.msk [vmem:[#allocation2 + $0x10] sm:$0xf] %vm246, -inf
      %248 = vst.msk [vmem:[#allocation2 + $0x18] sm:$0xff] %vm243, -inf
      %249 = vst.msk [vmem:[#allocation2 + $0x20] sm:$0xff] %vm243, -inf
      %250 = vst.msk [vmem:[#allocation2 + $0x28] sm:$0xf] %vm246, -inf
      %s251 = scalar_lea.vmem [#allocation2], 432
      %252 = vst.msk [vmem:[%s251] sm:$0xff] %vm243, -inf
      %253 = vst.msk [vmem:[%s251 + $0x8] sm:$0xff] %vm243, -inf
      %254 = vst.msk [vmem:[%s251 + $0x10] sm:$0xf] %vm246, -inf
      %255 = vst.msk [vmem:[%s251 + $0x18] sm:$0xff] %vm243, -inf
      %256 = vst.msk [vmem:[%s251 + $0x20] sm:$0xff] %vm243, -inf
      %257 = vst.msk [vmem:[%s251 + $0x28] sm:$0xf] %vm246, -inf
      %s258 = scalar_lea.vmem [#allocation2], 48
      %vm259 = vcmask 25600
      %260 = vst.msk [vmem:[%s258] sm:$0x3] %vm259, -inf
      %261 = vst.msk [vmem:[%s258 + $0x18] sm:$0x3] %vm259, -inf
      %262 = vst.msk [vmem:[%s258 + $0x30] sm:$0x3] %vm259, -inf
      %263 = vst.msk [vmem:[%s258 + $0x48] sm:$0x3] %vm259, -inf
      %264 = vst.msk [vmem:[%s258 + $0x60] sm:$0x3] %vm259, -inf
      %265 = vst.msk [vmem:[%s258 + $0x78] sm:$0x3] %vm259, -inf
      %266 = vst.msk [vmem:[%s258 + $0x90] sm:$0x3] %vm259, -inf
      %267 = vst.msk [vmem:[%s258 + $0xa8] sm:$0x3] %vm259, -inf
      %268 = vst.msk [vmem:[%s258 + $0xc0] sm:$0x3] %vm259, -inf
      %269 = vst.msk [vmem:[%s258 + $0xd8] sm:$0x3] %vm259, -inf
      %270 = vst.msk [vmem:[%s258 + $0xf0] sm:$0x3] %vm259, -inf
      %271 = vst.msk [vmem:[%s258 + $0x108] sm:$0x3] %vm259, -inf
      %272 = vst.msk [vmem:[%s258 + $0x120] sm:$0x3] %vm259, -inf
      %273 = vst.msk [vmem:[%s258 + $0x138] sm:$0x3] %vm259, -inf
      %274 = vst.msk [vmem:[%s258 + $0x150] sm:$0x3] %vm259, -inf
      %275 = vst.msk [vmem:[%s258 + $0x168] sm:$0x3] %vm259, -inf
      %276 = vst.msk [vmem:[%s258 + $0x12] sm:$0x3] %vm259, -inf
      %277 = vst.msk [vmem:[%s258 + $0x2a] sm:$0x3] %vm259, -inf
      %278 = vst.msk [vmem:[%s258 + $0x42] sm:$0x3] %vm259, -inf
      %279 = vst.msk [vmem:[%s258 + $0x5a] sm:$0x3] %vm259, -inf
      %280 = vst.msk [vmem:[%s258 + $0x72] sm:$0x3] %vm259, -inf
      %281 = vst.msk [vmem:[%s258 + $0x8a] sm:$0x3] %vm259, -inf
      %282 = vst.msk [vmem:[%s258 + $0xa2] sm:$0x3] %vm259, -inf
      %283 = vst.msk [vmem:[%s258 + $0xba] sm:$0x3] %vm259, -inf
      %284 = vst.msk [vmem:[%s258 + $0xd2] sm:$0x3] %vm259, -inf
      %285 = vst.msk [vmem:[%s258 + $0xea] sm:$0x3] %vm259, -inf
      %286 = vst.msk [vmem:[%s258 + $0x102] sm:$0x3] %vm259, -inf
      %287 = vst.msk [vmem:[%s258 + $0x11a] sm:$0x3] %vm259, -inf
      %288 = vst.msk [vmem:[%s258 + $0x132] sm:$0x3] %vm259, -inf
      %289 = vst.msk [vmem:[%s258 + $0x14a] sm:$0x3] %vm259, -inf
      %290 = vst.msk [vmem:[%s258 + $0x162] sm:$0x3] %vm259, -inf
      %291 = vst.msk [vmem:[%s258 + $0x17a] sm:$0x3] %vm259, -inf
      %v292 = vld [vmem:[%s218] sm:$0xff]
      %v293 = vld [vmem:[%s218 + $0x8] sm:$0xff]
      %v294 = vld [vmem:[%s218 + $0x10] sm:$0xff]
      %v295 = vld [vmem:[%s218 + $0x18] sm:$0xff]
      %v296 = vld [vmem:[%s218 + $0x20] sm:$0xff]
      %v297 = vld [vmem:[%s218 + $0x28] sm:$0xff]
      %v298 = vld [vmem:[%s218 + $0x30] sm:$0xff]
      %v299 = vld [vmem:[%s218 + $0x38] sm:$0xff]
      %v300 = vld [vmem:[%s218 + $0x40] sm:$0xff]
      %v301 = vld [vmem:[%s218 + $0x48] sm:$0xff]
      %v302 = vld [vmem:[%s218 + $0x50] sm:$0xff]
      %v303 = vld [vmem:[%s218 + $0x58] sm:$0xff]
      %v304 = vld [vmem:[%s218 + $0x60] sm:$0xff]
      %v305 = vld [vmem:[%s218 + $0x68] sm:$0xff]
      %v306 = vld [vmem:[%s218 + $0x70] sm:$0xff]
      %v307 = vld [vmem:[%s218 + $0x78] sm:$0xff]
      %v308 = vld [vmem:[%s218 + $0x80] sm:$0xff]
      %v309 = vld [vmem:[%s218 + $0x88] sm:$0xff]
      %v310 = vld [vmem:[%s218 + $0x90] sm:$0xff]
      %v311 = vld [vmem:[%s218 + $0x98] sm:$0xff]
      %v312 = vld [vmem:[%s218 + $0xa0] sm:$0xff]
      %v313 = vld [vmem:[%s218 + $0xa8] sm:$0xff]
      %v314 = vld [vmem:[%s218 + $0xb0] sm:$0xff]
      %v315 = vld [vmem:[%s218 + $0xb8] sm:$0xff]
      %v316 = vld [vmem:[%s218 + $0xc0] sm:$0xff]
      %v317 = vld [vmem:[%s218 + $0xc8] sm:$0xff]
      %v318 = vld [vmem:[%s218 + $0xd0] sm:$0xff]
      %v319 = vld [vmem:[%s218 + $0xd8] sm:$0xff]
      %v320 = vld [vmem:[%s218 + $0xe0] sm:$0xff]
      %v321 = vld [vmem:[%s218 + $0xe8] sm:$0xff]
      %v322 = vld [vmem:[%s218 + $0xf0] sm:$0xff]
      %v323 = vld [vmem:[%s218 + $0xf8] sm:$0xff]
      %324 = vst.msk [vmem:[%s258 + $0x2] sm:$0xff] %vm243, %v292
      %325 = vst.msk [vmem:[%s258 + $0xa] sm:$0xff] %vm243, %v293
      %326 = vst.msk [vmem:[%s258 + $0x1a] sm:$0xff] %vm243, %v294
      %327 = vst.msk [vmem:[%s258 + $0x22] sm:$0xff] %vm243, %v295
      %328 = vst.msk [vmem:[%s258 + $0x32] sm:$0xff] %vm243, %v296
      %329 = vst.msk [vmem:[%s258 + $0x3a] sm:$0xff] %vm243, %v297
      %330 = vst.msk [vmem:[%s258 + $0x4a] sm:$0xff] %vm243, %v298
      %331 = vst.msk [vmem:[%s258 + $0x52] sm:$0xff] %vm243, %v299
      %332 = vst.msk [vmem:[%s258 + $0x62] sm:$0xff] %vm243, %v300
      %333 = vst.msk [vmem:[%s258 + $0x6a] sm:$0xff] %vm243, %v301
      %334 = vst.msk [vmem:[%s258 + $0x7a] sm:$0xff] %vm243, %v302
      %335 = vst.msk [vmem:[%s258 + $0x82] sm:$0xff] %vm243, %v303
      %336 = vst.msk [vmem:[%s258 + $0x92] sm:$0xff] %vm243, %v304
      %337 = vst.msk [vmem:[%s258 + $0x9a] sm:$0xff] %vm243, %v305
      %338 = vst.msk [vmem:[%s258 + $0xaa] sm:$0xff] %vm243, %v306
      %339 = vst.msk [vmem:[%s258 + $0xb2] sm:$0xff] %vm243, %v307
      %340 = vst.msk [vmem:[%s258 + $0xc2] sm:$0xff] %vm243, %v308
      %341 = vst.msk [vmem:[%s258 + $0xca] sm:$0xff] %vm243, %v309
      %342 = vst.msk [vmem:[%s258 + $0xda] sm:$0xff] %vm243, %v310
      %343 = vst.msk [vmem:[%s258 + $0xe2] sm:$0xff] %vm243, %v311
      %344 = vst.msk [vmem:[%s258 + $0xf2] sm:$0xff] %vm243, %v312
      %345 = vst.msk [vmem:[%s258 + $0xfa] sm:$0xff] %vm243, %v313
      %346 = vst.msk [vmem:[%s258 + $0x10a] sm:$0xff] %vm243, %v314
      %347 = vst.msk [vmem:[%s258 + $0x112] sm:$0xff] %vm243, %v315
      %348 = vst.msk [vmem:[%s258 + $0x122] sm:$0xff] %vm243, %v316
      %349 = vst.msk [vmem:[%s258 + $0x12a] sm:$0xff] %vm243, %v317
      %350 = vst.msk [vmem:[%s258 + $0x13a] sm:$0xff] %vm243, %v318
      %351 = vst.msk [vmem:[%s258 + $0x142] sm:$0xff] %vm243, %v319
      %352 = vst.msk [vmem:[%s258 + $0x152] sm:$0xff] %vm243, %v320
      %353 = vst.msk [vmem:[%s258 + $0x15a] sm:$0xff] %vm243, %v321
      %354 = vst.msk [vmem:[%s258 + $0x16a] sm:$0xff] %vm243, %v322
      %355 = vst.msk [vmem:[%s258 + $0x172] sm:$0xff] %vm243, %v323
      %v356 = vld [vmem:[#allocation2] sm:$0xff]
      %v357 = vld [vmem:[#allocation2 + $0x8] sm:$0xff]
      %v358 = vld [vmem:[#allocation2 + $0x10] sm:$0xf]
      %v359 = vld [vmem:[#allocation2 + $0x18] sm:$0xff]
      %v360 = vld [vmem:[#allocation2 + $0x20] sm:$0xff]
      %v361 = vld [vmem:[#allocation2 + $0x28] sm:$0xf]
      %v362 = vld [vmem:[#allocation2 + $0x30] sm:$0xff]
      %v363 = vld [vmem:[#allocation2 + $0x38] sm:$0xff]
      %v364 = vld [vmem:[#allocation2 + $0x40] sm:$0xf]
      %v365 = vld [vmem:[#allocation2 + $0x48] sm:$0xff]
      %v366 = vld [vmem:[#allocation2 + $0x50] sm:$0xff]
      %v367 = vld [vmem:[#allocation2 + $0x58] sm:$0xf]
      %v368 = vld [vmem:[#allocation2 + $0x60] sm:$0xff]
      %v369 = vld [vmem:[#allocation2 + $0x68] sm:$0xff]
      %v370 = vld [vmem:[#allocation2 + $0x70] sm:$0xf]
      %v371 = vld [vmem:[#allocation2 + $0x78] sm:$0xff]
      %v372 = vld [vmem:[#allocation2 + $0x80] sm:$0xff]
      %v373 = vld [vmem:[#allocation2 + $0x88] sm:$0xf]
      %v374 = vld [vmem:[#allocation2 + $0x90] sm:$0xff]
      %v375 = vld [vmem:[#allocation2 + $0x98] sm:$0xff]
      %v376 = vld [vmem:[#allocation2 + $0xa0] sm:$0xf]
      %v377 = vld [vmem:[#allocation2 + $0xa8] sm:$0xff]
      %v378 = vld [vmem:[#allocation2 + $0xb0] sm:$0xff]
      %v379 = vld [vmem:[#allocation2 + $0xb8] sm:$0xf]
      %v380 = vld [vmem:[#allocation2 + $0xc0] sm:$0xff]
      %v381 = vld [vmem:[#allocation2 + $0xc8] sm:$0xff]
      %v382 = vld [vmem:[#allocation2 + $0xd0] sm:$0xf]
      %v383 = vld [vmem:[#allocation2 + $0xd8] sm:$0xff]
      %v384 = vld [vmem:[#allocation2 + $0xe0] sm:$0xff]
      %v385 = vld [vmem:[#allocation2 + $0xe8] sm:$0xf]
      %v386 = vld [vmem:[#allocation2 + $0xf0] sm:$0xff]
      %v387 = vld [vmem:[#allocation2 + $0xf8] sm:$0xff]
      %v388 = vld [vmem:[#allocation2 + $0x100] sm:$0xf]
      %v389 = vld [vmem:[#allocation2 + $0x108] sm:$0xff]
      %v390 = vld [vmem:[#allocation2 + $0x110] sm:$0xff]
      %v391 = vld [vmem:[#allocation2 + $0x118] sm:$0xf]
      %v392 = vld [vmem:[#allocation2 + $0x120] sm:$0xff]
      %v393 = vld [vmem:[#allocation2 + $0x128] sm:$0xff]
      %v394 = vld [vmem:[#allocation2 + $0x130] sm:$0xf]
      %v395 = vld [vmem:[#allocation2 + $0x138] sm:$0xff]
      %v396 = vld [vmem:[#allocation2 + $0x140] sm:$0xff]
      %v397 = vld [vmem:[#allocation2 + $0x148] sm:$0xf]
      %v398 = vld [vmem:[#allocation2 + $0x150] sm:$0xff]
      %v399 = vld [vmem:[#allocation2 + $0x158] sm:$0xff]
      %v400 = vld [vmem:[#allocation2 + $0x160] sm:$0xf]
      %v401 = vld [vmem:[#allocation2 + $0x168] sm:$0xff]
      %v402 = vld [vmem:[#allocation2 + $0x170] sm:$0xff]
      %v403 = vld [vmem:[#allocation2 + $0x178] sm:$0xf]
      %s404 = scalar_lea.vmem [#allocation2], 24
      %v405 = vld [vmem:[%s404] sm:$0xff]
      %v406 = vld [vmem:[%s404 + $0x8] sm:$0xff]
      %v407 = vld [vmem:[%s404 + $0x10] sm:$0xf]
      %v408 = vld [vmem:[%s404 + $0x18] sm:$0xff]
      %v409 = vld [vmem:[%s404 + $0x20] sm:$0xff]
      %v410 = vld [vmem:[%s404 + $0x28] sm:$0xf]
      %v411 = vld [vmem:[%s404 + $0x30] sm:$0xff]
      %v412 = vld [vmem:[%s404 + $0x38] sm:$0xff]
      %v413 = vld [vmem:[%s404 + $0x40] sm:$0xf]
      %v414 = vld [vmem:[%s404 + $0x48] sm:$0xff]
      %v415 = vld [vmem:[%s404 + $0x50] sm:$0xff]
      %v416 = vld [vmem:[%s404 + $0x58] sm:$0xf]
      %v417 = vld [vmem:[%s404 + $0x60] sm:$0xff]
      %v418 = vld [vmem:[%s404 + $0x68] sm:$0xff]
      %v419 = vld [vmem:[%s404 + $0x70] sm:$0xf]
      %v420 = vld [vmem:[%s404 + $0x78] sm:$0xff]
      %v421 = vld [vmem:[%s404 + $0x80] sm:$0xff]
      %v422 = vld [vmem:[%s404 + $0x88] sm:$0xf]
      %v423 = vld [vmem:[%s404 + $0x90] sm:$0xff]
      %v424 = vld [vmem:[%s404 + $0x98] sm:$0xff]
      %v425 = vld [vmem:[%s404 + $0xa0] sm:$0xf]
      %v426 = vld [vmem:[%s404 + $0xa8] sm:$0xff]
      %v427 = vld [vmem:[%s404 + $0xb0] sm:$0xff]
      %v428 = vld [vmem:[%s404 + $0xb8] sm:$0xf]
      %v429 = vld [vmem:[%s404 + $0xc0] sm:$0xff]
      %v430 = vld [vmem:[%s404 + $0xc8] sm:$0xff]
      %v431 = vld [vmem:[%s404 + $0xd0] sm:$0xf]
      %v432 = vld [vmem:[%s404 + $0xd8] sm:$0xff]
      %v433 = vld [vmem:[%s404 + $0xe0] sm:$0xff]
      %v434 = vld [vmem:[%s404 + $0xe8] sm:$0xf]
      %v435 = vld [vmem:[%s404 + $0xf0] sm:$0xff]
      %v436 = vld [vmem:[%s404 + $0xf8] sm:$0xff]
      %v437 = vld [vmem:[%s404 + $0x100] sm:$0xf]
      %v438 = vld [vmem:[%s404 + $0x108] sm:$0xff]
      %v439 = vld [vmem:[%s404 + $0x110] sm:$0xff]
      %v440 = vld [vmem:[%s404 + $0x118] sm:$0xf]
      %v441 = vld [vmem:[%s404 + $0x120] sm:$0xff]
      %v442 = vld [vmem:[%s404 + $0x128] sm:$0xff]
      %v443 = vld [vmem:[%s404 + $0x130] sm:$0xf]
      %v444 = vld [vmem:[%s404 + $0x138] sm:$0xff]
      %v445 = vld [vmem:[%s404 + $0x140] sm:$0xff]
      %v446 = vld [vmem:[%s404 + $0x148] sm:$0xf]
      %v447 = vld [vmem:[%s404 + $0x150] sm:$0xff]
      %v448 = vld [vmem:[%s404 + $0x158] sm:$0xff]
      %v449 = vld [vmem:[%s404 + $0x160] sm:$0xf]
      %v450 = vld [vmem:[%s404 + $0x168] sm:$0xff]
      %v451 = vld [vmem:[%s404 + $0x170] sm:$0xff]
      %v452 = vld [vmem:[%s404 + $0x178] sm:$0xf]
      %v453 = vmax.f32 %v356, %v405
      %v454 = vmax.f32 %v357, %v406
      %v455 = vmax.f32 %v358, %v407
      %v456 = vmax.f32 %v359, %v408
      %v457 = vmax.f32 %v360, %v409
      %v458 = vmax.f32 %v361, %v410
      %v459 = vmax.f32 %v362, %v411
      %v460 = vmax.f32 %v363, %v412
      %v461 = vmax.f32 %v364, %v413
      %v462 = vmax.f32 %v365, %v414
      %v463 = vmax.f32 %v366, %v415
      %v464 = vmax.f32 %v367, %v416
      %v465 = vmax.f32 %v368, %v417
      %v466 = vmax.f32 %v369, %v418
      %v467 = vmax.f32 %v370, %v419
      %v468 = vmax.f32 %v371, %v420
      %v469 = vmax.f32 %v372, %v421
      %v470 = vmax.f32 %v373, %v422
      %v471 = vmax.f32 %v374, %v423
      %v472 = vmax.f32 %v375, %v424
      %v473 = vmax.f32 %v376, %v425
      %v474 = vmax.f32 %v377, %v426
      %v475 = vmax.f32 %v378, %v427
      %v476 = vmax.f32 %v379, %v428
      %v477 = vmax.f32 %v380, %v429
      %v478 = vmax.f32 %v381, %v430
      %v479 = vmax.f32 %v382, %v431
      %v480 = vmax.f32 %v383, %v432
      %v481 = vmax.f32 %v384, %v433
      %v482 = vmax.f32 %v385, %v434
      %v483 = vmax.f32 %v386, %v435
      %v484 = vmax.f32 %v387, %v436
      %v485 = vmax.f32 %v388, %v437
      %v486 = vmax.f32 %v389, %v438
      %v487 = vmax.f32 %v390, %v439
      %v488 = vmax.f32 %v391, %v440
      %v489 = vmax.f32 %v392, %v441
      %v490 = vmax.f32 %v393, %v442
      %v491 = vmax.f32 %v394, %v443
      %v492 = vmax.f32 %v395, %v444
      %v493 = vmax.f32 %v396, %v445
      %v494 = vmax.f32 %v397, %v446
      %v495 = vmax.f32 %v398, %v447
      %v496 = vmax.f32 %v399, %v448
      %v497 = vmax.f32 %v400, %v449
      %v498 = vmax.f32 %v401, %v450
      %v499 = vmax.f32 %v402, %v451
      %v500 = vmax.f32 %v403, %v452
      %v501 = vld [vmem:[%s258] sm:$0xff]
      %v502 = vld [vmem:[%s258 + $0x8] sm:$0xff]
      %v503 = vld [vmem:[%s258 + $0x10] sm:$0xf]
      %v504 = vld [vmem:[%s258 + $0x18] sm:$0xff]
      %v505 = vld [vmem:[%s258 + $0x20] sm:$0xff]
      %v506 = vld [vmem:[%s258 + $0x28] sm:$0xf]
      %v507 = vld [vmem:[%s258 + $0x30] sm:$0xff]
      %v508 = vld [vmem:[%s258 + $0x38] sm:$0xff]
      %v509 = vld [vmem:[%s258 + $0x40] sm:$0xf]
      %v510 = vld [vmem:[%s258 + $0x48] sm:$0xff]
      %v511 = vld [vmem:[%s258 + $0x50] sm:$0xff]
      %v512 = vld [vmem:[%s258 + $0x58] sm:$0xf]
      %v513 = vld [vmem:[%s258 + $0x60] sm:$0xff]
      %v514 = vld [vmem:[%s258 + $0x68] sm:$0xff]
      %v515 = vld [vmem:[%s258 + $0x70] sm:$0xf]
      %v516 = vld [vmem:[%s258 + $0x78] sm:$0xff]
      %v517 = vld [vmem:[%s258 + $0x80] sm:$0xff]
      %v518 = vld [vmem:[%s258 + $0x88] sm:$0xf]
      %v519 = vld [vmem:[%s258 + $0x90] sm:$0xff]
      %v520 = vld [vmem:[%s258 + $0x98] sm:$0xff]
      %v521 = vld [vmem:[%s258 + $0xa0] sm:$0xf]
      %v522 = vld [vmem:[%s258 + $0xa8] sm:$0xff]
      %v523 = vld [vmem:[%s258 + $0xb0] sm:$0xff]
      %v524 = vld [vmem:[%s258 + $0xb8] sm:$0xf]
      %v525 = vld [vmem:[%s258 + $0xc0] sm:$0xff]
      %v526 = vld [vmem:[%s258 + $0xc8] sm:$0xff]
      %v527 = vld [vmem:[%s258 + $0xd0] sm:$0xf]
      %v528 = vld [vmem:[%s258 + $0xd8] sm:$0xff]
      %v529 = vld [vmem:[%s258 + $0xe0] sm:$0xff]
      %v530 = vld [vmem:[%s258 + $0xe8] sm:$0xf]
      %v531 = vld [vmem:[%s258 + $0xf0] sm:$0xff]
      %v532 = vld [vmem:[%s258 + $0xf8] sm:$0xff]
      %v533 = vld [vmem:[%s258 + $0x100] sm:$0xf]
      %v534 = vld [vmem:[%s258 + $0x108] sm:$0xff]
      %v535 = vld [vmem:[%s258 + $0x110] sm:$0xff]
      %v536 = vld [vmem:[%s258 + $0x118] sm:$0xf]
      %v537 = vld [vmem:[%s258 + $0x120] sm:$0xff]
      %v538 = vld [vmem:[%s258 + $0x128] sm:$0xff]
      %v539 = vld [vmem:[%s258 + $0x130] sm:$0xf]
      %v540 = vld [vmem:[%s258 + $0x138] sm:$0xff]
      %v541 = vld [vmem:[%s258 + $0x140] sm:$0xff]
      %v542 = vld [vmem:[%s258 + $0x148] sm:$0xf]
      %v543 = vld [vmem:[%s258 + $0x150] sm:$0xff]
      %v544 = vld [vmem:[%s258 + $0x158] sm:$0xff]
      %v545 = vld [vmem:[%s258 + $0x160] sm:$0xf]
      %v546 = vld [vmem:[%s258 + $0x168] sm:$0xff]
      %v547 = vld [vmem:[%s258 + $0x170] sm:$0xff]
      %v548 = vld [vmem:[%s258 + $0x178] sm:$0xf]
      %v549 = vmax.f32 %v453, %v501
      %v550 = vmax.f32 %v454, %v502
      %v551 = vmax.f32 %v455, %v503
      %v552 = vmax.f32 %v456, %v504
      %v553 = vmax.f32 %v457, %v505
      %v554 = vmax.f32 %v458, %v506
      %v555 = vmax.f32 %v459, %v507
      %v556 = vmax.f32 %v460, %v508
      %v557 = vmax.f32 %v461, %v509
      %v558 = vmax.f32 %v462, %v510
      %v559 = vmax.f32 %v463, %v511
      %v560 = vmax.f32 %v464, %v512
      %v561 = vmax.f32 %v465, %v513
      %v562 = vmax.f32 %v466, %v514
      %v563 = vmax.f32 %v467, %v515
      %v564 = vmax.f32 %v468, %v516
      %v565 = vmax.f32 %v469, %v517
      %v566 = vmax.f32 %v470, %v518
      %v567 = vmax.f32 %v471, %v519
      %v568 = vmax.f32 %v472, %v520
      %v569 = vmax.f32 %v473, %v521
      %v570 = vmax.f32 %v474, %v522
      %v571 = vmax.f32 %v475, %v523
      %v572 = vmax.f32 %v476, %v524
      %v573 = vmax.f32 %v477, %v525
      %v574 = vmax.f32 %v478, %v526
      %v575 = vmax.f32 %v479, %v527
      %v576 = vmax.f32 %v480, %v528
      %v577 = vmax.f32 %v481, %v529
      %v578 = vmax.f32 %v482, %v530
      %v579 = vmax.f32 %v483, %v531
      %v580 = vmax.f32 %v484, %v532
      %v581 = vmax.f32 %v485, %v533
      %v582 = vmax.f32 %v486, %v534
      %v583 = vmax.f32 %v487, %v535
      %v584 = vmax.f32 %v488, %v536
      %v585 = vmax.f32 %v489, %v537
      %v586 = vmax.f32 %v490, %v538
      %v587 = vmax.f32 %v491, %v539
      %v588 = vmax.f32 %v492, %v540
      %v589 = vmax.f32 %v493, %v541
      %v590 = vmax.f32 %v494, %v542
      %v591 = vmax.f32 %v495, %v543
      %v592 = vmax.f32 %v496, %v544
      %v593 = vmax.f32 %v497, %v545
      %v594 = vmax.f32 %v498, %v546
      %v595 = vmax.f32 %v499, %v547
      %v596 = vmax.f32 %v500, %v548
      %s597 = scalar_lea.vmem [#allocation2], 72
      %v598 = vld [vmem:[%s597] sm:$0xff]
      %v599 = vld [vmem:[%s597 + $0x8] sm:$0xff]
      %v600 = vld [vmem:[%s597 + $0x10] sm:$0xf]
      %v601 = vld [vmem:[%s597 + $0x18] sm:$0xff]
      %v602 = vld [vmem:[%s597 + $0x20] sm:$0xff]
      %v603 = vld [vmem:[%s597 + $0x28] sm:$0xf]
      %v604 = vld [vmem:[%s597 + $0x30] sm:$0xff]
      %v605 = vld [vmem:[%s597 + $0x38] sm:$0xff]
      %v606 = vld [vmem:[%s597 + $0x40] sm:$0xf]
      %v607 = vld [vmem:[%s597 + $0x48] sm:$0xff]
      %v608 = vld [vmem:[%s597 + $0x50] sm:$0xff]
      %v609 = vld [vmem:[%s597 + $0x58] sm:$0xf]
      %v610 = vld [vmem:[%s597 + $0x60] sm:$0xff]
      %v611 = vld [vmem:[%s597 + $0x68] sm:$0xff]
      %v612 = vld [vmem:[%s597 + $0x70] sm:$0xf]
      %v613 = vld [vmem:[%s597 + $0x78] sm:$0xff]
      %v614 = vld [vmem:[%s597 + $0x80] sm:$0xff]
      %v615 = vld [vmem:[%s597 + $0x88] sm:$0xf]
      %v616 = vld [vmem:[%s597 + $0x90] sm:$0xff]
      %v617 = vld [vmem:[%s597 + $0x98] sm:$0xff]
      %v618 = vld [vmem:[%s597 + $0xa0] sm:$0xf]
      %v619 = vld [vmem:[%s597 + $0xa8] sm:$0xff]
      %v620 = vld [vmem:[%s597 + $0xb0] sm:$0xff]
      %v621 = vld [vmem:[%s597 + $0xb8] sm:$0xf]
      %v622 = vld [vmem:[%s597 + $0xc0] sm:$0xff]
      %v623 = vld [vmem:[%s597 + $0xc8] sm:$0xff]
      %v624 = vld [vmem:[%s597 + $0xd0] sm:$0xf]
      %v625 = vld [vmem:[%s597 + $0xd8] sm:$0xff]
      %v626 = vld [vmem:[%s597 + $0xe0] sm:$0xff]
      %v627 = vld [vmem:[%s597 + $0xe8] sm:$0xf]
      %v628 = vld [vmem:[%s597 + $0xf0] sm:$0xff]
      %v629 = vld [vmem:[%s597 + $0xf8] sm:$0xff]
      %v630 = vld [vmem:[%s597 + $0x100] sm:$0xf]
      %v631 = vld [vmem:[%s597 + $0x108] sm:$0xff]
      %v632 = vld [vmem:[%s597 + $0x110] sm:$0xff]
      %v633 = vld [vmem:[%s597 + $0x118] sm:$0xf]
      %v634 = vld [vmem:[%s597 + $0x120] sm:$0xff]
      %v635 = vld [vmem:[%s597 + $0x128] sm:$0xff]
      %v636 = vld [vmem:[%s597 + $0x130] sm:$0xf]
      %v637 = vld [vmem:[%s597 + $0x138] sm:$0xff]
      %v638 = vld [vmem:[%s597 + $0x140] sm:$0xff]
      %v639 = vld [vmem:[%s597 + $0x148] sm:$0xf]
      %v640 = vld [vmem:[%s597 + $0x150] sm:$0xff]
      %v641 = vld [vmem:[%s597 + $0x158] sm:$0xff]
      %v642 = vld [vmem:[%s597 + $0x160] sm:$0xf]
      %v643 = vld [vmem:[%s597 + $0x168] sm:$0xff]
      %v644 = vld [vmem:[%s597 + $0x170] sm:$0xff]
      %v645 = vld [vmem:[%s597 + $0x178] sm:$0xf]
      %v646 = vmax.f32 %v549, %v598
      %v647 = vmax.f32 %v550, %v599
      %v648 = vmax.f32 %v551, %v600
      %v649 = vmax.f32 %v552, %v601
      %v650 = vmax.f32 %v553, %v602
      %v651 = vmax.f32 %v554, %v603
      %v652 = vmax.f32 %v555, %v604
      %v653 = vmax.f32 %v556, %v605
      %v654 = vmax.f32 %v557, %v606
      %v655 = vmax.f32 %v558, %v607
      %v656 = vmax.f32 %v559, %v608
      %v657 = vmax.f32 %v560, %v609
      %v658 = vmax.f32 %v561, %v610
      %v659 = vmax.f32 %v562, %v611
      %v660 = vmax.f32 %v563, %v612
      %v661 = vmax.f32 %v564, %v613
      %v662 = vmax.f32 %v565, %v614
      %v663 = vmax.f32 %v566, %v615
      %v664 = vmax.f32 %v567, %v616
      %v665 = vmax.f32 %v568, %v617
      %v666 = vmax.f32 %v569, %v618
      %v667 = vmax.f32 %v570, %v619
      %v668 = vmax.f32 %v571, %v620
      %v669 = vmax.f32 %v572, %v621
      %v670 = vmax.f32 %v573, %v622
      %v671 = vmax.f32 %v574, %v623
      %v672 = vmax.f32 %v575, %v624
      %v673 = vmax.f32 %v576, %v625
      %v674 = vmax.f32 %v577, %v626
      %v675 = vmax.f32 %v578, %v627
      %v676 = vmax.f32 %v579, %v628
      %v677 = vmax.f32 %v580, %v629
      %v678 = vmax.f32 %v581, %v630
      %v679 = vmax.f32 %v582, %v631
      %v680 = vmax.f32 %v583, %v632
      %v681 = vmax.f32 %v584, %v633
      %v682 = vmax.f32 %v585, %v634
      %v683 = vmax.f32 %v586, %v635
      %v684 = vmax.f32 %v587, %v636
      %v685 = vmax.f32 %v588, %v637
      %v686 = vmax.f32 %v589, %v638
      %v687 = vmax.f32 %v590, %v639
      %v688 = vmax.f32 %v591, %v640
      %v689 = vmax.f32 %v592, %v641
      %v690 = vmax.f32 %v593, %v642
      %v691 = vmax.f32 %v594, %v643
      %v692 = vmax.f32 %v595, %v644
      %v693 = vmax.f32 %v596, %v645
      %s694 = scalar_lea.vmem [#allocation2], 96
      %v695 = vld [vmem:[%s694] sm:$0xff]
      %v696 = vld [vmem:[%s694 + $0x8] sm:$0xff]
      %v697 = vld [vmem:[%s694 + $0x10] sm:$0xf]
      %v698 = vld [vmem:[%s694 + $0x18] sm:$0xff]
      %v699 = vld [vmem:[%s694 + $0x20] sm:$0xff]
      %v700 = vld [vmem:[%s694 + $0x28] sm:$0xf]
      %v701 = vld [vmem:[%s694 + $0x30] sm:$0xff]
      %v702 = vld [vmem:[%s694 + $0x38] sm:$0xff]
      %v703 = vld [vmem:[%s694 + $0x40] sm:$0xf]
      %v704 = vld [vmem:[%s694 + $0x48] sm:$0xff]
      %v705 = vld [vmem:[%s694 + $0x50] sm:$0xff]
      %v706 = vld [vmem:[%s694 + $0x58] sm:$0xf]
      %v707 = vld [vmem:[%s694 + $0x60] sm:$0xff]
      %v708 = vld [vmem:[%s694 + $0x68] sm:$0xff]
      %v709 = vld [vmem:[%s694 + $0x70] sm:$0xf]
      %v710 = vld [vmem:[%s694 + $0x78] sm:$0xff]
      %v711 = vld [vmem:[%s694 + $0x80] sm:$0xff]
      %v712 = vld [vmem:[%s694 + $0x88] sm:$0xf]
      %v713 = vld [vmem:[%s694 + $0x90] sm:$0xff]
      %v714 = vld [vmem:[%s694 + $0x98] sm:$0xff]
      %v715 = vld [vmem:[%s694 + $0xa0] sm:$0xf]
      %v716 = vld [vmem:[%s694 + $0xa8] sm:$0xff]
      %v717 = vld [vmem:[%s694 + $0xb0] sm:$0xff]
      %v718 = vld [vmem:[%s694 + $0xb8] sm:$0xf]
      %v719 = vld [vmem:[%s694 + $0xc0] sm:$0xff]
      %v720 = vld [vmem:[%s694 + $0xc8] sm:$0xff]
      %v721 = vld [vmem:[%s694 + $0xd0] sm:$0xf]
      %v722 = vld [vmem:[%s694 + $0xd8] sm:$0xff]
      %v723 = vld [vmem:[%s694 + $0xe0] sm:$0xff]
      %v724 = vld [vmem:[%s694 + $0xe8] sm:$0xf]
      %v725 = vld [vmem:[%s694 + $0xf0] sm:$0xff]
      %v726 = vld [vmem:[%s694 + $0xf8] sm:$0xff]
      %v727 = vld [vmem:[%s694 + $0x100] sm:$0xf]
      %v728 = vld [vmem:[%s694 + $0x108] sm:$0xff]
      %v729 = vld [vmem:[%s694 + $0x110] sm:$0xff]
      %v730 = vld [vmem:[%s694 + $0x118] sm:$0xf]
      %v731 = vld [vmem:[%s694 + $0x120] sm:$0xff]
      %v732 = vld [vmem:[%s694 + $0x128] sm:$0xff]
      %v733 = vld [vmem:[%s694 + $0x130] sm:$0xf]
      %v734 = vld [vmem:[%s694 + $0x138] sm:$0xff]
      %v735 = vld [vmem:[%s694 + $0x140] sm:$0xff]
      %v736 = vld [vmem:[%s694 + $0x148] sm:$0xf]
      %v737 = vld [vmem:[%s694 + $0x150] sm:$0xff]
      %v738 = vld [vmem:[%s694 + $0x158] sm:$0xff]
      %v739 = vld [vmem:[%s694 + $0x160] sm:$0xf]
      %v740 = vld [vmem:[%s694 + $0x168] sm:$0xff]
      %v741 = vld [vmem:[%s694 + $0x170] sm:$0xff]
      %v742 = vld [vmem:[%s694 + $0x178] sm:$0xf]
      %v743 = vmax.f32 %v646, %v695
      %v744 = vmax.f32 %v647, %v696
      %v745 = vmax.f32 %v648, %v697
      %v746 = vmax.f32 %v649, %v698
      %v747 = vmax.f32 %v650, %v699
      %v748 = vmax.f32 %v651, %v700
      %v749 = vmax.f32 %v652, %v701
      %v750 = vmax.f32 %v653, %v702
      %v751 = vmax.f32 %v654, %v703
      %v752 = vmax.f32 %v655, %v704
      %v753 = vmax.f32 %v656, %v705
      %v754 = vmax.f32 %v657, %v706
      %v755 = vmax.f32 %v658, %v707
      %v756 = vmax.f32 %v659, %v708
      %v757 = vmax.f32 %v660, %v709
      %v758 = vmax.f32 %v661, %v710
      %v759 = vmax.f32 %v662, %v711
      %v760 = vmax.f32 %v663, %v712
      %v761 = vmax.f32 %v664, %v713
      %v762 = vmax.f32 %v665, %v714
      %v763 = vmax.f32 %v666, %v715
      %v764 = vmax.f32 %v667, %v716
      %v765 = vmax.f32 %v668, %v717
      %v766 = vmax.f32 %v669, %v718
      %v767 = vmax.f32 %v670, %v719
      %v768 = vmax.f32 %v671, %v720
      %v769 = vmax.f32 %v672, %v721
      %v770 = vmax.f32 %v673, %v722
      %v771 = vmax.f32 %v674, %v723
      %v772 = vmax.f32 %v675, %v724
      %v773 = vmax.f32 %v676, %v725
      %v774 = vmax.f32 %v677, %v726
      %v775 = vmax.f32 %v678, %v727
      %v776 = vmax.f32 %v679, %v728
      %v777 = vmax.f32 %v680, %v729
      %v778 = vmax.f32 %v681, %v730
      %v779 = vmax.f32 %v682, %v731
      %v780 = vmax.f32 %v683, %v732
      %v781 = vmax.f32 %v684, %v733
      %v782 = vmax.f32 %v685, %v734
      %v783 = vmax.f32 %v686, %v735
      %v784 = vmax.f32 %v687, %v736
      %v785 = vmax.f32 %v688, %v737
      %v786 = vmax.f32 %v689, %v738
      %v787 = vmax.f32 %v690, %v739
      %v788 = vmax.f32 %v691, %v740
      %v789 = vmax.f32 %v692, %v741
      %v790 = vmax.f32 %v693, %v742
      %791 = vst.msk [vmem:[%s258] sm:$0xff] %vm243, %v743
      %792 = vst.msk [vmem:[%s258 + $0x8] sm:$0xff] %vm243, %v744
      %793 = vst.msk [vmem:[%s258 + $0x10] sm:$0xf] %vm246, %v745
      %794 = vst.msk [vmem:[%s258 + $0x18] sm:$0xff] %vm243, %v746
      %795 = vst.msk [vmem:[%s258 + $0x20] sm:$0xff] %vm243, %v747
      %796 = vst.msk [vmem:[%s258 + $0x28] sm:$0xf] %vm246, %v748
      %797 = vst.msk [vmem:[%s258 + $0x30] sm:$0xff] %vm243, %v749
      %798 = vst.msk [vmem:[%s258 + $0x38] sm:$0xff] %vm243, %v750
      %799 = vst.msk [vmem:[%s258 + $0x40] sm:$0xf] %vm246, %v751
      %800 = vst.msk [vmem:[%s258 + $0x48] sm:$0xff] %vm243, %v752
      %801 = vst.msk [vmem:[%s258 + $0x50] sm:$0xff] %vm243, %v753
      %802 = vst.msk [vmem:[%s258 + $0x58] sm:$0xf] %vm246, %v754
      %803 = vst.msk [vmem:[%s258 + $0x60] sm:$0xff] %vm243, %v755
      %804 = vst.msk [vmem:[%s258 + $0x68] sm:$0xff] %vm243, %v756
      %805 = vst.msk [vmem:[%s258 + $0x70] sm:$0xf] %vm246, %v757
      %806 = vst.msk [vmem:[%s258 + $0x78] sm:$0xff] %vm243, %v758
      %807 = vst.msk [vmem:[%s258 + $0x80] sm:$0xff] %vm243, %v759
      %808 = vst.msk [vmem:[%s258 + $0x88] sm:$0xf] %vm246, %v760
      %809 = vst.msk [vmem:[%s258 + $0x90] sm:$0xff] %vm243, %v761
      %810 = vst.msk [vmem:[%s258 + $0x98] sm:$0xff] %vm243, %v762
      %811 = vst.msk [vmem:[%s258 + $0xa0] sm:$0xf] %vm246, %v763
      %812 = vst.msk [vmem:[%s258 + $0xa8] sm:$0xff] %vm243, %v764
      %813 = vst.msk [vmem:[%s258 + $0xb0] sm:$0xff] %vm243, %v765
      %814 = vst.msk [vmem:[%s258 + $0xb8] sm:$0xf] %vm246, %v766
      %815 = vst.msk [vmem:[%s258 + $0xc0] sm:$0xff] %vm243, %v767
      %816 = vst.msk [vmem:[%s258 + $0xc8] sm:$0xff] %vm243, %v768
      %817 = vst.msk [vmem:[%s258 + $0xd0] sm:$0xf] %vm246, %v769
      %818 = vst.msk [vmem:[%s258 + $0xd8] sm:$0xff] %vm243, %v770
      %819 = vst.msk [vmem:[%s258 + $0xe0] sm:$0xff] %vm243, %v771
      %820 = vst.msk [vmem:[%s258 + $0xe8] sm:$0xf] %vm246, %v772
      %821 = vst.msk [vmem:[%s258 + $0xf0] sm:$0xff] %vm243, %v773
      %822 = vst.msk [vmem:[%s258 + $0xf8] sm:$0xff] %vm243, %v774
      %823 = vst.msk [vmem:[%s258 + $0x100] sm:$0xf] %vm246, %v775
      %824 = vst.msk [vmem:[%s258 + $0x108] sm:$0xff] %vm243, %v776
      %825 = vst.msk [vmem:[%s258 + $0x110] sm:$0xff] %vm243, %v777
      %826 = vst.msk [vmem:[%s258 + $0x118] sm:$0xf] %vm246, %v778
      %827 = vst.msk [vmem:[%s258 + $0x120] sm:$0xff] %vm243, %v779
      %828 = vst.msk [vmem:[%s258 + $0x128] sm:$0xff] %vm243, %v780
      %829 = vst.msk [vmem:[%s258 + $0x130] sm:$0xf] %vm246, %v781
      %830 = vst.msk [vmem:[%s258 + $0x138] sm:$0xff] %vm243, %v782
      %831 = vst.msk [vmem:[%s258 + $0x140] sm:$0xff] %vm243, %v783
      %832 = vst.msk [vmem:[%s258 + $0x148] sm:$0xf] %vm246, %v784
      %833 = vst.msk [vmem:[%s258 + $0x150] sm:$0xff] %vm243, %v785
      %834 = vst.msk [vmem:[%s258 + $0x158] sm:$0xff] %vm243, %v786
      %835 = vst.msk [vmem:[%s258 + $0x160] sm:$0xf] %vm246, %v787
      %836 = vst.msk [vmem:[%s258 + $0x168] sm:$0xff] %vm243, %v788
      %837 = vst.msk [vmem:[%s258 + $0x170] sm:$0xff] %vm243, %v789
      %838 = vst.msk [vmem:[%s258 + $0x178] sm:$0xf] %vm246, %v790
      %v839 = vld [vmem:[%s258] sm:$0xff]
      %v840 = vld [vmem:[%s258 + $0x8] sm:$0xff]
      %v841 = vld [vmem:[%s258 + $0x18] sm:$0xff]
      %v842 = vld [vmem:[%s258 + $0x20] sm:$0xff]
      %v843 = vld [vmem:[%s258 + $0x30] sm:$0xff]
      %v844 = vld [vmem:[%s258 + $0x38] sm:$0xff]
      %v845 = vld [vmem:[%s258 + $0x48] sm:$0xff]
      %v846 = vld [vmem:[%s258 + $0x50] sm:$0xff]
      %v847 = vld [vmem:[%s258 + $0x60] sm:$0xff]
      %v848 = vld [vmem:[%s258 + $0x68] sm:$0xff]
      %v849 = vld [vmem:[%s258 + $0x78] sm:$0xff]
      %v850 = vld [vmem:[%s258 + $0x80] sm:$0xff]
      %v851 = vld [vmem:[%s258 + $0x90] sm:$0xff]
      %v852 = vld [vmem:[%s258 + $0x98] sm:$0xff]
      %v853 = vld [vmem:[%s258 + $0xa8] sm:$0xff]
      %v854 = vld [vmem:[%s258 + $0xb0] sm:$0xff]
      %v855 = vld [vmem:[%s258 + $0xc0] sm:$0xff]
      %v856 = vld [vmem:[%s258 + $0xc8] sm:$0xff]
      %v857 = vld [vmem:[%s258 + $0xd8] sm:$0xff]
      %v858 = vld [vmem:[%s258 + $0xe0] sm:$0xff]
      %v859 = vld [vmem:[%s258 + $0xf0] sm:$0xff]
      %v860 = vld [vmem:[%s258 + $0xf8] sm:$0xff]
      %v861 = vld [vmem:[%s258 + $0x108] sm:$0xff]
      %v862 = vld [vmem:[%s258 + $0x110] sm:$0xff]
      %v863 = vld [vmem:[%s258 + $0x120] sm:$0xff]
      %v864 = vld [vmem:[%s258 + $0x128] sm:$0xff]
      %v865 = vld [vmem:[%s258 + $0x138] sm:$0xff]
      %v866 = vld [vmem:[%s258 + $0x140] sm:$0xff]
      %v867 = vld [vmem:[%s258 + $0x150] sm:$0xff]
      %v868 = vld [vmem:[%s258 + $0x158] sm:$0xff]
      %v869 = vld [vmem:[%s258 + $0x168] sm:$0xff]
      %v870 = vld [vmem:[%s258 + $0x170] sm:$0xff]
      %v871 = vld [vmem:[%s258 + $0x1] sm:$0xff]
      %v872 = vld [vmem:[%s258 + $0x9] sm:$0xff]
      %v873 = vld [vmem:[%s258 + $0x19] sm:$0xff]
      %v874 = vld [vmem:[%s258 + $0x21] sm:$0xff]
      %v875 = vld [vmem:[%s258 + $0x31] sm:$0xff]
      %v876 = vld [vmem:[%s258 + $0x39] sm:$0xff]
      %v877 = vld [vmem:[%s258 + $0x49] sm:$0xff]
      %v878 = vld [vmem:[%s258 + $0x51] sm:$0xff]
      %v879 = vld [vmem:[%s258 + $0x61] sm:$0xff]
      %v880 = vld [vmem:[%s258 + $0x69] sm:$0xff]
      %v881 = vld [vmem:[%s258 + $0x79] sm:$0xff]
      %v882 = vld [vmem:[%s258 + $0x81] sm:$0xff]
      %v883 = vld [vmem:[%s258 + $0x91] sm:$0xff]
      %v884 = vld [vmem:[%s258 + $0x99] sm:$0xff]
      %v885 = vld [vmem:[%s258 + $0xa9] sm:$0xff]
      %v886 = vld [vmem:[%s258 + $0xb1] sm:$0xff]
      %v887 = vld [vmem:[%s258 + $0xc1] sm:$0xff]
      %v888 = vld [vmem:[%s258 + $0xc9] sm:$0xff]
      %v889 = vld [vmem:[%s258 + $0xd9] sm:$0xff]
      %v890 = vld [vmem:[%s258 + $0xe1] sm:$0xff]
      %v891 = vld [vmem:[%s258 + $0xf1] sm:$0xff]
      %v892 = vld [vmem:[%s258 + $0xf9] sm:$0xff]
      %v893 = vld [vmem:[%s258 + $0x109] sm:$0xff]
      %v894 = vld [vmem:[%s258 + $0x111] sm:$0xff]
      %v895 = vld [vmem:[%s258 + $0x121] sm:$0xff]
      %v896 = vld [vmem:[%s258 + $0x129] sm:$0xff]
      %v897 = vld [vmem:[%s258 + $0x139] sm:$0xff]
      %v898 = vld [vmem:[%s258 + $0x141] sm:$0xff]
      %v899 = vld [vmem:[%s258 + $0x151] sm:$0xff]
      %v900 = vld [vmem:[%s258 + $0x159] sm:$0xff]
      %v901 = vld [vmem:[%s258 + $0x169] sm:$0xff]
      %v902 = vld [vmem:[%s258 + $0x171] sm:$0xff]
      %v903 = vmax.f32 %v839, %v871
      %v904 = vmax.f32 %v840, %v872
      %v905 = vmax.f32 %v841, %v873
      %v906 = vmax.f32 %v842, %v874
      %v907 = vmax.f32 %v843, %v875
      %v908 = vmax.f32 %v844, %v876
      %v909 = vmax.f32 %v845, %v877
      %v910 = vmax.f32 %v846, %v878
      %v911 = vmax.f32 %v847, %v879
      %v912 = vmax.f32 %v848, %v880
      %v913 = vmax.f32 %v849, %v881
      %v914 = vmax.f32 %v850, %v882
      %v915 = vmax.f32 %v851, %v883
      %v916 = vmax.f32 %v852, %v884
      %v917 = vmax.f32 %v853, %v885
      %v918 = vmax.f32 %v854, %v886
      %v919 = vmax.f32 %v855, %v887
      %v920 = vmax.f32 %v856, %v888
      %v921 = vmax.f32 %v857, %v889
      %v922 = vmax.f32 %v858, %v890
      %v923 = vmax.f32 %v859, %v891
      %v924 = vmax.f32 %v860, %v892
      %v925 = vmax.f32 %v861, %v893
      %v926 = vmax.f32 %v862, %v894
      %v927 = vmax.f32 %v863, %v895
      %v928 = vmax.f32 %v864, %v896
      %v929 = vmax.f32 %v865, %v897
      %v930 = vmax.f32 %v866, %v898
      %v931 = vmax.f32 %v867, %v899
      %v932 = vmax.f32 %v868, %v900
      %v933 = vmax.f32 %v869, %v901
      %v934 = vmax.f32 %v870, %v902
      %v935 = vld [vmem:[%s258 + $0x2] sm:$0xff]
      %v936 = vld [vmem:[%s258 + $0xa] sm:$0xff]
      %v937 = vld [vmem:[%s258 + $0x1a] sm:$0xff]
      %v938 = vld [vmem:[%s258 + $0x22] sm:$0xff]
      %v939 = vld [vmem:[%s258 + $0x32] sm:$0xff]
      %v940 = vld [vmem:[%s258 + $0x3a] sm:$0xff]
      %v941 = vld [vmem:[%s258 + $0x4a] sm:$0xff]
      %v942 = vld [vmem:[%s258 + $0x52] sm:$0xff]
      %v943 = vld [vmem:[%s258 + $0x62] sm:$0xff]
      %v944 = vld [vmem:[%s258 + $0x6a] sm:$0xff]
      %v945 = vld [vmem:[%s258 + $0x7a] sm:$0xff]
      %v946 = vld [vmem:[%s258 + $0x82] sm:$0xff]
      %v947 = vld [vmem:[%s258 + $0x92] sm:$0xff]
      %v948 = vld [vmem:[%s258 + $0x9a] sm:$0xff]
      %v949 = vld [vmem:[%s258 + $0xaa] sm:$0xff]
      %v950 = vld [vmem:[%s258 + $0xb2] sm:$0xff]
      %v951 = vld [vmem:[%s258 + $0xc2] sm:$0xff]
      %v952 = vld [vmem:[%s258 + $0xca] sm:$0xff]
      %v953 = vld [vmem:[%s258 + $0xda] sm:$0xff]
      %v954 = vld [vmem:[%s258 + $0xe2] sm:$0xff]
      %v955 = vld [vmem:[%s258 + $0xf2] sm:$0xff]
      %v956 = vld [vmem:[%s258 + $0xfa] sm:$0xff]
      %v957 = vld [vmem:[%s258 + $0x10a] sm:$0xff]
      %v958 = vld [vmem:[%s258 + $0x112] sm:$0xff]
      %v959 = vld [vmem:[%s258 + $0x122] sm:$0xff]
      %v960 = vld [vmem:[%s258 + $0x12a] sm:$0xff]
      %v961 = vld [vmem:[%s258 + $0x13a] sm:$0xff]
      %v962 = vld [vmem:[%s258 + $0x142] sm:$0xff]
      %v963 = vld [vmem:[%s258 + $0x152] sm:$0xff]
      %v964 = vld [vmem:[%s258 + $0x15a] sm:$0xff]
      %v965 = vld [vmem:[%s258 + $0x16a] sm:$0xff]
      %v966 = vld [vmem:[%s258 + $0x172] sm:$0xff]
      %v967 = vmax.f32 %v903, %v935
      %v968 = vmax.f32 %v904, %v936
      %v969 = vmax.f32 %v905, %v937
      %v970 = vmax.f32 %v906, %v938
      %v971 = vmax.f32 %v907, %v939
      %v972 = vmax.f32 %v908, %v940
      %v973 = vmax.f32 %v909, %v941
      %v974 = vmax.f32 %v910, %v942
      %v975 = vmax.f32 %v911, %v943
      %v976 = vmax.f32 %v912, %v944
      %v977 = vmax.f32 %v913, %v945
      %v978 = vmax.f32 %v914, %v946
      %v979 = vmax.f32 %v915, %v947
      %v980 = vmax.f32 %v916, %v948
      %v981 = vmax.f32 %v917, %v949
      %v982 = vmax.f32 %v918, %v950
      %v983 = vmax.f32 %v919, %v951
      %v984 = vmax.f32 %v920, %v952
      %v985 = vmax.f32 %v921, %v953
      %v986 = vmax.f32 %v922, %v954
      %v987 = vmax.f32 %v923, %v955
      %v988 = vmax.f32 %v924, %v956
      %v989 = vmax.f32 %v925, %v957
      %v990 = vmax.f32 %v926, %v958
      %v991 = vmax.f32 %v927, %v959
      %v992 = vmax.f32 %v928, %v960
      %v993 = vmax.f32 %v929, %v961
      %v994 = vmax.f32 %v930, %v962
      %v995 = vmax.f32 %v931, %v963
      %v996 = vmax.f32 %v932, %v964
      %v997 = vmax.f32 %v933, %v965
      %v998 = vmax.f32 %v934, %v966
      %v999 = vld [vmem:[%s258 + $0x3] sm:$0xff]
      %v1000 = vld [vmem:[%s258 + $0xb] sm:$0xff]
      %v1001 = vld [vmem:[%s258 + $0x1b] sm:$0xff]
      %v1002 = vld [vmem:[%s258 + $0x23] sm:$0xff]
      %v1003 = vld [vmem:[%s258 + $0x33] sm:$0xff]
      %v1004 = vld [vmem:[%s258 + $0x3b] sm:$0xff]
      %v1005 = vld [vmem:[%s258 + $0x4b] sm:$0xff]
      %v1006 = vld [vmem:[%s258 + $0x53] sm:$0xff]
      %v1007 = vld [vmem:[%s258 + $0x63] sm:$0xff]
      %v1008 = vld [vmem:[%s258 + $0x6b] sm:$0xff]
      %v1009 = vld [vmem:[%s258 + $0x7b] sm:$0xff]
      %v1010 = vld [vmem:[%s258 + $0x83] sm:$0xff]
      %v1011 = vld [vmem:[%s258 + $0x93] sm:$0xff]
      %v1012 = vld [vmem:[%s258 + $0x9b] sm:$0xff]
      %v1013 = vld [vmem:[%s258 + $0xab] sm:$0xff]
      %v1014 = vld [vmem:[%s258 + $0xb3] sm:$0xff]
      %v1015 = vld [vmem:[%s258 + $0xc3] sm:$0xff]
      %v1016 = vld [vmem:[%s258 + $0xcb] sm:$0xff]
      %v1017 = vld [vmem:[%s258 + $0xdb] sm:$0xff]
      %v1018 = vld [vmem:[%s258 + $0xe3] sm:$0xff]
      %v1019 = vld [vmem:[%s258 + $0xf3] sm:$0xff]
      %v1020 = vld [vmem:[%s258 + $0xfb] sm:$0xff]
      %v1021 = vld [vmem:[%s258 + $0x10b] sm:$0xff]
      %v1022 = vld [vmem:[%s258 + $0x113] sm:$0xff]
      %v1023 = vld [vmem:[%s258 + $0x123] sm:$0xff]
      %v1024 = vld [vmem:[%s258 + $0x12b] sm:$0xff]
      %v1025 = vld [vmem:[%s258 + $0x13b] sm:$0xff]
      %v1026 = vld [vmem:[%s258 + $0x143] sm:$0xff]
      %v1027 = vld [vmem:[%s258 + $0x153] sm:$0xff]
      %v1028 = vld [vmem:[%s258 + $0x15b] sm:$0xff]
      %v1029 = vld [vmem:[%s258 + $0x16b] sm:$0xff]
      %v1030 = vld [vmem:[%s258 + $0x173] sm:$0xff]
      %v1031 = vmax.f32 %v967, %v999
      %v1032 = vmax.f32 %v968, %v1000
      %v1033 = vmax.f32 %v969, %v1001
      %v1034 = vmax.f32 %v970, %v1002
      %v1035 = vmax.f32 %v971, %v1003
      %v1036 = vmax.f32 %v972, %v1004
      %v1037 = vmax.f32 %v973, %v1005
      %v1038 = vmax.f32 %v974, %v1006
      %v1039 = vmax.f32 %v975, %v1007
      %v1040 = vmax.f32 %v976, %v1008
      %v1041 = vmax.f32 %v977, %v1009
      %v1042 = vmax.f32 %v978, %v1010
      %v1043 = vmax.f32 %v979, %v1011
      %v1044 = vmax.f32 %v980, %v1012
      %v1045 = vmax.f32 %v981, %v1013
      %v1046 = vmax.f32 %v982, %v1014
      %v1047 = vmax.f32 %v983, %v1015
      %v1048 = vmax.f32 %v984, %v1016
      %v1049 = vmax.f32 %v985, %v1017
      %v1050 = vmax.f32 %v986, %v1018
      %v1051 = vmax.f32 %v987, %v1019
      %v1052 = vmax.f32 %v988, %v1020
      %v1053 = vmax.f32 %v989, %v1021
      %v1054 = vmax.f32 %v990, %v1022
      %v1055 = vmax.f32 %v991, %v1023
      %v1056 = vmax.f32 %v992, %v1024
      %v1057 = vmax.f32 %v993, %v1025
      %v1058 = vmax.f32 %v994, %v1026
      %v1059 = vmax.f32 %v995, %v1027
      %v1060 = vmax.f32 %v996, %v1028
      %v1061 = vmax.f32 %v997, %v1029
      %v1062 = vmax.f32 %v998, %v1030
      %v1063 = vld [vmem:[%s258 + $0x4] sm:$0xff]
      %v1064 = vld [vmem:[%s258 + $0xc] sm:$0xff]
      %v1065 = vld [vmem:[%s258 + $0x1c] sm:$0xff]
      %v1066 = vld [vmem:[%s258 + $0x24] sm:$0xff]
      %v1067 = vld [vmem:[%s258 + $0x34] sm:$0xff]
      %v1068 = vld [vmem:[%s258 + $0x3c] sm:$0xff]
      %v1069 = vld [vmem:[%s258 + $0x4c] sm:$0xff]
      %v1070 = vld [vmem:[%s258 + $0x54] sm:$0xff]
      %v1071 = vld [vmem:[%s258 + $0x64] sm:$0xff]
      %v1072 = vld [vmem:[%s258 + $0x6c] sm:$0xff]
      %v1073 = vld [vmem:[%s258 + $0x7c] sm:$0xff]
      %v1074 = vld [vmem:[%s258 + $0x84] sm:$0xff]
      %v1075 = vld [vmem:[%s258 + $0x94] sm:$0xff]
      %v1076 = vld [vmem:[%s258 + $0x9c] sm:$0xff]
      %v1077 = vld [vmem:[%s258 + $0xac] sm:$0xff]
      %v1078 = vld [vmem:[%s258 + $0xb4] sm:$0xff]
      %v1079 = vld [vmem:[%s258 + $0xc4] sm:$0xff]
      %v1080 = vld [vmem:[%s258 + $0xcc] sm:$0xff]
      %v1081 = vld [vmem:[%s258 + $0xdc] sm:$0xff]
      %v1082 = vld [vmem:[%s258 + $0xe4] sm:$0xff]
      %v1083 = vld [vmem:[%s258 + $0xf4] sm:$0xff]
      %v1084 = vld [vmem:[%s258 + $0xfc] sm:$0xff]
      %v1085 = vld [vmem:[%s258 + $0x10c] sm:$0xff]
      %v1086 = vld [vmem:[%s258 + $0x114] sm:$0xff]
      %v1087 = vld [vmem:[%s258 + $0x124] sm:$0xff]
      %v1088 = vld [vmem:[%s258 + $0x12c] sm:$0xff]
      %v1089 = vld [vmem:[%s258 + $0x13c] sm:$0xff]
      %v1090 = vld [vmem:[%s258 + $0x144] sm:$0xff]
      %v1091 = vld [vmem:[%s258 + $0x154] sm:$0xff]
      %v1092 = vld [vmem:[%s258 + $0x15c] sm:$0xff]
      %v1093 = vld [vmem:[%s258 + $0x16c] sm:$0xff]
      %v1094 = vld [vmem:[%s258 + $0x174] sm:$0xff]
      %v1095 = vmax.f32 %v1031, %v1063
      %v1096 = vmax.f32 %v1032, %v1064
      %v1097 = vmax.f32 %v1033, %v1065
      %v1098 = vmax.f32 %v1034, %v1066
      %v1099 = vmax.f32 %v1035, %v1067
      %v1100 = vmax.f32 %v1036, %v1068
      %v1101 = vmax.f32 %v1037, %v1069
      %v1102 = vmax.f32 %v1038, %v1070
      %v1103 = vmax.f32 %v1039, %v1071
      %v1104 = vmax.f32 %v1040, %v1072
      %v1105 = vmax.f32 %v1041, %v1073
      %v1106 = vmax.f32 %v1042, %v1074
      %v1107 = vmax.f32 %v1043, %v1075
      %v1108 = vmax.f32 %v1044, %v1076
      %v1109 = vmax.f32 %v1045, %v1077
      %v1110 = vmax.f32 %v1046, %v1078
      %v1111 = vmax.f32 %v1047, %v1079
      %v1112 = vmax.f32 %v1048, %v1080
      %v1113 = vmax.f32 %v1049, %v1081
      %v1114 = vmax.f32 %v1050, %v1082
      %v1115 = vmax.f32 %v1051, %v1083
      %v1116 = vmax.f32 %v1052, %v1084
      %v1117 = vmax.f32 %v1053, %v1085
      %v1118 = vmax.f32 %v1054, %v1086
      %v1119 = vmax.f32 %v1055, %v1087
      %v1120 = vmax.f32 %v1056, %v1088
      %v1121 = vmax.f32 %v1057, %v1089
      %v1122 = vmax.f32 %v1058, %v1090
      %v1123 = vmax.f32 %v1059, %v1091
      %v1124 = vmax.f32 %v1060, %v1092
      %v1125 = vmax.f32 %v1061, %v1093
      %v1126 = vmax.f32 %v1062, %v1094
      %1127 = vst.msk [vmem:[%s242] sm:$0xff] %vm243, %v1095
      %1128 = vst.msk [vmem:[%s242 + $0x8] sm:$0xff] %vm243, %v1096
      %1129 = vst.msk [vmem:[%s242 + $0x10] sm:$0xff] %vm243, %v1097
      %1130 = vst.msk [vmem:[%s242 + $0x18] sm:$0xff] %vm243, %v1098
      %1131 = vst.msk [vmem:[%s242 + $0x20] sm:$0xff] %vm243, %v1099
      %1132 = vst.msk [vmem:[%s242 + $0x28] sm:$0xff] %vm243, %v1100
      %1133 = vst.msk [vmem:[%s242 + $0x30] sm:$0xff] %vm243, %v1101
      %1134 = vst.msk [vmem:[%s242 + $0x38] sm:$0xff] %vm243, %v1102
      %1135 = vst.msk [vmem:[%s242 + $0x40] sm:$0xff] %vm243, %v1103
      %1136 = vst.msk [vmem:[%s242 + $0x48] sm:$0xff] %vm243, %v1104
      %1137 = vst.msk [vmem:[%s242 + $0x50] sm:$0xff] %vm243, %v1105
      %1138 = vst.msk [vmem:[%s242 + $0x58] sm:$0xff] %vm243, %v1106
      %1139 = vst.msk [vmem:[%s242 + $0x60] sm:$0xff] %vm243, %v1107
      %1140 = vst.msk [vmem:[%s242 + $0x68] sm:$0xff] %vm243, %v1108
      %1141 = vst.msk [vmem:[%s242 + $0x70] sm:$0xff] %vm243, %v1109
      %1142 = vst.msk [vmem:[%s242 + $0x78] sm:$0xff] %vm243, %v1110
      %1143 = vst.msk [vmem:[%s242 + $0x80] sm:$0xff] %vm243, %v1111
      %1144 = vst.msk [vmem:[%s242 + $0x88] sm:$0xff] %vm243, %v1112
      %1145 = vst.msk [vmem:[%s242 + $0x90] sm:$0xff] %vm243, %v1113
      %1146 = vst.msk [vmem:[%s242 + $0x98] sm:$0xff] %vm243, %v1114
      %1147 = vst.msk [vmem:[%s242 + $0xa0] sm:$0xff] %vm243, %v1115
      %1148 = vst.msk [vmem:[%s242 + $0xa8] sm:$0xff] %vm243, %v1116
      %1149 = vst.msk [vmem:[%s242 + $0xb0] sm:$0xff] %vm243, %v1117
      %1150 = vst.msk [vmem:[%s242 + $0xb8] sm:$0xff] %vm243, %v1118
      %1151 = vst.msk [vmem:[%s242 + $0xc0] sm:$0xff] %vm243, %v1119
      %1152 = vst.msk [vmem:[%s242 + $0xc8] sm:$0xff] %vm243, %v1120
      %1153 = vst.msk [vmem:[%s242 + $0xd0] sm:$0xff] %vm243, %v1121
      %1154 = vst.msk [vmem:[%s242 + $0xd8] sm:$0xff] %vm243, %v1122
      %1155 = vst.msk [vmem:[%s242 + $0xe0] sm:$0xff] %vm243, %v1123
      %1156 = vst.msk [vmem:[%s242 + $0xe8] sm:$0xff] %vm243, %v1124
      %1157 = vst.msk [vmem:[%s242 + $0xf0] sm:$0xff] %vm243, %v1125
      %1158 = vst.msk [vmem:[%s242 + $0xf8] sm:$0xff] %vm243, %v1126
      %v1159 = vld [vmem:[%s242] sm:$0xff]
      %v1160 = vld [vmem:[%s242 + $0x8] sm:$0xff]
      %v1161 = vld [vmem:[%s242 + $0x10] sm:$0xff]
      %v1162 = vld [vmem:[%s242 + $0x18] sm:$0xff]
      %v1163 = vld [vmem:[%s242 + $0x20] sm:$0xff]
      %v1164 = vld [vmem:[%s242 + $0x28] sm:$0xff]
      %v1165 = vld [vmem:[%s242 + $0x30] sm:$0xff]
      %v1166 = vld [vmem:[%s242 + $0x38] sm:$0xff]
      %v1167 = vld [vmem:[%s242 + $0x40] sm:$0xff]
      %v1168 = vld [vmem:[%s242 + $0x48] sm:$0xff]
      %v1169 = vld [vmem:[%s242 + $0x50] sm:$0xff]
      %v1170 = vld [vmem:[%s242 + $0x58] sm:$0xff]
      %v1171 = vld [vmem:[%s242 + $0x60] sm:$0xff]
      %v1172 = vld [vmem:[%s242 + $0x68] sm:$0xff]
      %v1173 = vld [vmem:[%s242 + $0x70] sm:$0xff]
      %v1174 = vld [vmem:[%s242 + $0x78] sm:$0xff]
      %v1175 = vld [vmem:[%s242 + $0x80] sm:$0xff]
      %v1176 = vld [vmem:[%s242 + $0x88] sm:$0xff]
      %v1177 = vld [vmem:[%s242 + $0x90] sm:$0xff]
      %v1178 = vld [vmem:[%s242 + $0x98] sm:$0xff]
      %v1179 = vld [vmem:[%s242 + $0xa0] sm:$0xff]
      %v1180 = vld [vmem:[%s242 + $0xa8] sm:$0xff]
      %v1181 = vld [vmem:[%s242 + $0xb0] sm:$0xff]
      %v1182 = vld [vmem:[%s242 + $0xb8] sm:$0xff]
      %v1183 = vld [vmem:[%s242 + $0xc0] sm:$0xff]
      %v1184 = vld [vmem:[%s242 + $0xc8] sm:$0xff]
      %v1185 = vld [vmem:[%s242 + $0xd0] sm:$0xff]
      %v1186 = vld [vmem:[%s242 + $0xd8] sm:$0xff]
      %v1187 = vld [vmem:[%s242 + $0xe0] sm:$0xff]
      %v1188 = vld [vmem:[%s242 + $0xe8] sm:$0xff]
      %v1189 = vld [vmem:[%s242 + $0xf0] sm:$0xff]
      %v1190 = vld [vmem:[%s242 + $0xf8] sm:$0xff]
      %1191 = vst.msk [vmem:[%s258 + $0x2] sm:$0xff] %vm243, %v1159
      %1192 = vst.msk [vmem:[%s258 + $0xa] sm:$0xff] %vm243, %v1160
      %1193 = vst.msk [vmem:[%s258 + $0x1a] sm:$0xff] %vm243, %v1161
      %1194 = vst.msk [vmem:[%s258 + $0x22] sm:$0xff] %vm243, %v1162
      %1195 = vst.msk [vmem:[%s258 + $0x32] sm:$0xff] %vm243, %v1163
      %1196 = vst.msk [vmem:[%s258 + $0x3a] sm:$0xff] %vm243, %v1164
      %1197 = vst.msk [vmem:[%s258 + $0x4a] sm:$0xff] %vm243, %v1165
      %1198 = vst.msk [vmem:[%s258 + $0x52] sm:$0xff] %vm243, %v1166
      %1199 = vst.msk [vmem:[%s258 + $0x62] sm:$0xff] %vm243, %v1167
      %1200 = vst.msk [vmem:[%s258 + $0x6a] sm:$0xff] %vm243, %v1168
      %1201 = vst.msk [vmem:[%s258 + $0x7a] sm:$0xff] %vm243, %v1169
      %1202 = vst.msk [vmem:[%s258 + $0x82] sm:$0xff] %vm243, %v1170
      %1203 = vst.msk [vmem:[%s258 + $0x92] sm:$0xff] %vm243, %v1171
      %1204 = vst.msk [vmem:[%s258 + $0x9a] sm:$0xff] %vm243, %v1172
      %1205 = vst.msk [vmem:[%s258 + $0xaa] sm:$0xff] %vm243, %v1173
      %1206 = vst.msk [vmem:[%s258 + $0xb2] sm:$0xff] %vm243, %v1174
      %1207 = vst.msk [vmem:[%s258 + $0xc2] sm:$0xff] %vm243, %v1175
      %1208 = vst.msk [vmem:[%s258 + $0xca] sm:$0xff] %vm243, %v1176
      %1209 = vst.msk [vmem:[%s258 + $0xda] sm:$0xff] %vm243, %v1177
      %1210 = vst.msk [vmem:[%s258 + $0xe2] sm:$0xff] %vm243, %v1178
      %1211 = vst.msk [vmem:[%s258 + $0xf2] sm:$0xff] %vm243, %v1179
      %1212 = vst.msk [vmem:[%s258 + $0xfa] sm:$0xff] %vm243, %v1180
      %1213 = vst.msk [vmem:[%s258 + $0x10a] sm:$0xff] %vm243, %v1181
      %1214 = vst.msk [vmem:[%s258 + $0x112] sm:$0xff] %vm243, %v1182
      %1215 = vst.msk [vmem:[%s258 + $0x122] sm:$0xff] %vm243, %v1183
      %1216 = vst.msk [vmem:[%s258 + $0x12a] sm:$0xff] %vm243, %v1184
      %1217 = vst.msk [vmem:[%s258 + $0x13a] sm:$0xff] %vm243, %v1185
      %1218 = vst.msk [vmem:[%s258 + $0x142] sm:$0xff] %vm243, %v1186
      %1219 = vst.msk [vmem:[%s258 + $0x152] sm:$0xff] %vm243, %v1187
      %1220 = vst.msk [vmem:[%s258 + $0x15a] sm:$0xff] %vm243, %v1188
      %1221 = vst.msk [vmem:[%s258 + $0x16a] sm:$0xff] %vm243, %v1189
      %1222 = vst.msk [vmem:[%s258 + $0x172] sm:$0xff] %vm243, %v1190
      %v1223 = vld [vmem:[#allocation2] sm:$0xff]
      %v1224 = vld [vmem:[#allocation2 + $0x8] sm:$0xff]
      %v1225 = vld [vmem:[#allocation2 + $0x10] sm:$0xf]
      %v1226 = vld [vmem:[#allocation2 + $0x18] sm:$0xff]
      %v1227 = vld [vmem:[#allocation2 + $0x20] sm:$0xff]
      %v1228 = vld [vmem:[#allocation2 + $0x28] sm:$0xf]
      %v1229 = vld [vmem:[#allocation2 + $0x30] sm:$0xff]
      %v1230 = vld [vmem:[#allocation2 + $0x38] sm:$0xff]
      %v1231 = vld [vmem:[#allocation2 + $0x40] sm:$0xf]
      %v1232 = vld [vmem:[#allocation2 + $0x48] sm:$0xff]
      %v1233 = vld [vmem:[#allocation2 + $0x50] sm:$0xff]
      %v1234 = vld [vmem:[#allocation2 + $0x58] sm:$0xf]
      %v1235 = vld [vmem:[#allocation2 + $0x60] sm:$0xff]
      %v1236 = vld [vmem:[#allocation2 + $0x68] sm:$0xff]
      %v1237 = vld [vmem:[#allocation2 + $0x70] sm:$0xf]
      %v1238 = vld [vmem:[#allocation2 + $0x78] sm:$0xff]
      %v1239 = vld [vmem:[#allocation2 + $0x80] sm:$0xff]
      %v1240 = vld [vmem:[#allocation2 + $0x88] sm:$0xf]
      %v1241 = vld [vmem:[#allocation2 + $0x90] sm:$0xff]
      %v1242 = vld [vmem:[#allocation2 + $0x98] sm:$0xff]
      %v1243 = vld [vmem:[#allocation2 + $0xa0] sm:$0xf]
      %v1244 = vld [vmem:[#allocation2 + $0xa8] sm:$0xff]
      %v1245 = vld [vmem:[#allocation2 + $0xb0] sm:$0xff]
      %v1246 = vld [vmem:[#allocation2 + $0xb8] sm:$0xf]
      %v1247 = vld [vmem:[#allocation2 + $0xc0] sm:$0xff]
      %v1248 = vld [vmem:[#allocation2 + $0xc8] sm:$0xff]
      %v1249 = vld [vmem:[#allocation2 + $0xd0] sm:$0xf]
      %v1250 = vld [vmem:[#allocation2 + $0xd8] sm:$0xff]
      %v1251 = vld [vmem:[#allocation2 + $0xe0] sm:$0xff]
      %v1252 = vld [vmem:[#allocation2 + $0xe8] sm:$0xf]
      %v1253 = vld [vmem:[#allocation2 + $0xf0] sm:$0xff]
      %v1254 = vld [vmem:[#allocation2 + $0xf8] sm:$0xff]
      %v1255 = vld [vmem:[#allocation2 + $0x100] sm:$0xf]
      %v1256 = vld [vmem:[#allocation2 + $0x108] sm:$0xff]
      %v1257 = vld [vmem:[#allocation2 + $0x110] sm:$0xff]
      %v1258 = vld [vmem:[#allocation2 + $0x118] sm:$0xf]
      %v1259 = vld [vmem:[#allocation2 + $0x120] sm:$0xff]
      %v1260 = vld [vmem:[#allocation2 + $0x128] sm:$0xff]
      %v1261 = vld [vmem:[#allocation2 + $0x130] sm:$0xf]
      %v1262 = vld [vmem:[#allocation2 + $0x138] sm:$0xff]
      %v1263 = vld [vmem:[#allocation2 + $0x140] sm:$0xff]
      %v1264 = vld [vmem:[#allocation2 + $0x148] sm:$0xf]
      %v1265 = vld [vmem:[#allocation2 + $0x150] sm:$0xff]
      %v1266 = vld [vmem:[#allocation2 + $0x158] sm:$0xff]
      %v1267 = vld [vmem:[#allocation2 + $0x160] sm:$0xf]
      %v1268 = vld [vmem:[#allocation2 + $0x168] sm:$0xff]
      %v1269 = vld [vmem:[#allocation2 + $0x170] sm:$0xff]
      %v1270 = vld [vmem:[#allocation2 + $0x178] sm:$0xf]
      %v1271 = vld [vmem:[%s404] sm:$0xff]
      %v1272 = vld [vmem:[%s404 + $0x8] sm:$0xff]
      %v1273 = vld [vmem:[%s404 + $0x10] sm:$0xf]
      %v1274 = vld [vmem:[%s404 + $0x18] sm:$0xff]
      %v1275 = vld [vmem:[%s404 + $0x20] sm:$0xff]
      %v1276 = vld [vmem:[%s404 + $0x28] sm:$0xf]
      %v1277 = vld [vmem:[%s404 + $0x30] sm:$0xff]
      %v1278 = vld [vmem:[%s404 + $0x38] sm:$0xff]
      %v1279 = vld [vmem:[%s404 + $0x40] sm:$0xf]
      %v1280 = vld [vmem:[%s404 + $0x48] sm:$0xff]
      %v1281 = vld [vmem:[%s404 + $0x50] sm:$0xff]
      %v1282 = vld [vmem:[%s404 + $0x58] sm:$0xf]
      %v1283 = vld [vmem:[%s404 + $0x60] sm:$0xff]
      %v1284 = vld [vmem:[%s404 + $0x68] sm:$0xff]
      %v1285 = vld [vmem:[%s404 + $0x70] sm:$0xf]
      %v1286 = vld [vmem:[%s404 + $0x78] sm:$0xff]
      %v1287 = vld [vmem:[%s404 + $0x80] sm:$0xff]
      %v1288 = vld [vmem:[%s404 + $0x88] sm:$0xf]
      %v1289 = vld [vmem:[%s404 + $0x90] sm:$0xff]
      %v1290 = vld [vmem:[%s404 + $0x98] sm:$0xff]
      %v1291 = vld [vmem:[%s404 + $0xa0] sm:$0xf]
      %v1292 = vld [vmem:[%s404 + $0xa8] sm:$0xff]
      %v1293 = vld [vmem:[%s404 + $0xb0] sm:$0xff]
      %v1294 = vld [vmem:[%s404 + $0xb8] sm:$0xf]
      %v1295 = vld [vmem:[%s404 + $0xc0] sm:$0xff]
      %v1296 = vld [vmem:[%s404 + $0xc8] sm:$0xff]
      %v1297 = vld [vmem:[%s404 + $0xd0] sm:$0xf]
      %v1298 = vld [vmem:[%s404 + $0xd8] sm:$0xff]
      %v1299 = vld [vmem:[%s404 + $0xe0] sm:$0xff]
      %v1300 = vld [vmem:[%s404 + $0xe8] sm:$0xf]
      %v1301 = vld [vmem:[%s404 + $0xf0] sm:$0xff]
      %v1302 = vld [vmem:[%s404 + $0xf8] sm:$0xff]
      %v1303 = vld [vmem:[%s404 + $0x100] sm:$0xf]
      %v1304 = vld [vmem:[%s404 + $0x108] sm:$0xff]
      %v1305 = vld [vmem:[%s404 + $0x110] sm:$0xff]
      %v1306 = vld [vmem:[%s404 + $0x118] sm:$0xf]
      %v1307 = vld [vmem:[%s404 + $0x120] sm:$0xff]
      %v1308 = vld [vmem:[%s404 + $0x128] sm:$0xff]
      %v1309 = vld [vmem:[%s404 + $0x130] sm:$0xf]
      %v1310 = vld [vmem:[%s404 + $0x138] sm:$0xff]
      %v1311 = vld [vmem:[%s404 + $0x140] sm:$0xff]
      %v1312 = vld [vmem:[%s404 + $0x148] sm:$0xf]
      %v1313 = vld [vmem:[%s404 + $0x150] sm:$0xff]
      %v1314 = vld [vmem:[%s404 + $0x158] sm:$0xff]
      %v1315 = vld [vmem:[%s404 + $0x160] sm:$0xf]
      %v1316 = vld [vmem:[%s404 + $0x168] sm:$0xff]
      %v1317 = vld [vmem:[%s404 + $0x170] sm:$0xff]
      %v1318 = vld [vmem:[%s404 + $0x178] sm:$0xf]
      %v1319 = vmax.f32 %v1223, %v1271
      %v1320 = vmax.f32 %v1224, %v1272
      %v1321 = vmax.f32 %v1225, %v1273
      %v1322 = vmax.f32 %v1226, %v1274
      %v1323 = vmax.f32 %v1227, %v1275
      %v1324 = vmax.f32 %v1228, %v1276
      %v1325 = vmax.f32 %v1229, %v1277
      %v1326 = vmax.f32 %v1230, %v1278
      %v1327 = vmax.f32 %v1231, %v1279
      %v1328 = vmax.f32 %v1232, %v1280
      %v1329 = vmax.f32 %v1233, %v1281
      %v1330 = vmax.f32 %v1234, %v1282
      %v1331 = vmax.f32 %v1235, %v1283
      %v1332 = vmax.f32 %v1236, %v1284
      %v1333 = vmax.f32 %v1237, %v1285
      %v1334 = vmax.f32 %v1238, %v1286
      %v1335 = vmax.f32 %v1239, %v1287
      %v1336 = vmax.f32 %v1240, %v1288
      %v1337 = vmax.f32 %v1241, %v1289
      %v1338 = vmax.f32 %v1242, %v1290
      %v1339 = vmax.f32 %v1243, %v1291
      %v1340 = vmax.f32 %v1244, %v1292
      %v1341 = vmax.f32 %v1245, %v1293
      %v1342 = vmax.f32 %v1246, %v1294
      %v1343 = vmax.f32 %v1247, %v1295
      %v1344 = vmax.f32 %v1248, %v1296
      %v1345 = vmax.f32 %v1249, %v1297
      %v1346 = vmax.f32 %v1250, %v1298
      %v1347 = vmax.f32 %v1251, %v1299
      %v1348 = vmax.f32 %v1252, %v1300
      %v1349 = vmax.f32 %v1253, %v1301
      %v1350 = vmax.f32 %v1254, %v1302
      %v1351 = vmax.f32 %v1255, %v1303
      %v1352 = vmax.f32 %v1256, %v1304
      %v1353 = vmax.f32 %v1257, %v1305
      %v1354 = vmax.f32 %v1258, %v1306
      %v1355 = vmax.f32 %v1259, %v1307
      %v1356 = vmax.f32 %v1260, %v1308
      %v1357 = vmax.f32 %v1261, %v1309
      %v1358 = vmax.f32 %v1262, %v1310
      %v1359 = vmax.f32 %v1263, %v1311
      %v1360 = vmax.f32 %v1264, %v1312
      %v1361 = vmax.f32 %v1265, %v1313
      %v1362 = vmax.f32 %v1266, %v1314
      %v1363 = vmax.f32 %v1267, %v1315
      %v1364 = vmax.f32 %v1268, %v1316
      %v1365 = vmax.f32 %v1269, %v1317
      %v1366 = vmax.f32 %v1270, %v1318
      %v1367 = vld [vmem:[%s258] sm:$0xff]
      %v1368 = vld [vmem:[%s258 + $0x8] sm:$0xff]
      %v1369 = vld [vmem:[%s258 + $0x10] sm:$0xf]
      %v1370 = vld [vmem:[%s258 + $0x18] sm:$0xff]
      %v1371 = vld [vmem:[%s258 + $0x20] sm:$0xff]
      %v1372 = vld [vmem:[%s258 + $0x28] sm:$0xf]
      %v1373 = vld [vmem:[%s258 + $0x30] sm:$0xff]
      %v1374 = vld [vmem:[%s258 + $0x38] sm:$0xff]
      %v1375 = vld [vmem:[%s258 + $0x40] sm:$0xf]
      %v1376 = vld [vmem:[%s258 + $0x48] sm:$0xff]
      %v1377 = vld [vmem:[%s258 + $0x50] sm:$0xff]
      %v1378 = vld [vmem:[%s258 + $0x58] sm:$0xf]
      %v1379 = vld [vmem:[%s258 + $0x60] sm:$0xff]
      %v1380 = vld [vmem:[%s258 + $0x68] sm:$0xff]
      %v1381 = vld [vmem:[%s258 + $0x70] sm:$0xf]
      %v1382 = vld [vmem:[%s258 + $0x78] sm:$0xff]
      %v1383 = vld [vmem:[%s258 + $0x80] sm:$0xff]
      %v1384 = vld [vmem:[%s258 + $0x88] sm:$0xf]
      %v1385 = vld [vmem:[%s258 + $0x90] sm:$0xff]
      %v1386 = vld [vmem:[%s258 + $0x98] sm:$0xff]
      %v1387 = vld [vmem:[%s258 + $0xa0] sm:$0xf]
      %v1388 = vld [vmem:[%s258 + $0xa8] sm:$0xff]
      %v1389 = vld [vmem:[%s258 + $0xb0] sm:$0xff]
      %v1390 = vld [vmem:[%s258 + $0xb8] sm:$0xf]
      %v1391 = vld [vmem:[%s258 + $0xc0] sm:$0xff]
      %v1392 = vld [vmem:[%s258 + $0xc8] sm:$0xff]
      %v1393 = vld [vmem:[%s258 + $0xd0] sm:$0xf]
      %v1394 = vld [vmem:[%s258 + $0xd8] sm:$0xff]
      %v1395 = vld [vmem:[%s258 + $0xe0] sm:$0xff]
      %v1396 = vld [vmem:[%s258 + $0xe8] sm:$0xf]
      %v1397 = vld [vmem:[%s258 + $0xf0] sm:$0xff]
      %v1398 = vld [vmem:[%s258 + $0xf8] sm:$0xff]
      %v1399 = vld [vmem:[%s258 + $0x100] sm:$0xf]
      %v1400 = vld [vmem:[%s258 + $0x108] sm:$0xff]
      %v1401 = vld [vmem:[%s258 + $0x110] sm:$0xff]
      %v1402 = vld [vmem:[%s258 + $0x118] sm:$0xf]
      %v1403 = vld [vmem:[%s258 + $0x120] sm:$0xff]
      %v1404 = vld [vmem:[%s258 + $0x128] sm:$0xff]
      %v1405 = vld [vmem:[%s258 + $0x130] sm:$0xf]
      %v1406 = vld [vmem:[%s258 + $0x138] sm:$0xff]
      %v1407 = vld [vmem:[%s258 + $0x140] sm:$0xff]
      %v1408 = vld [vmem:[%s258 + $0x148] sm:$0xf]
      %v1409 = vld [vmem:[%s258 + $0x150] sm:$0xff]
      %v1410 = vld [vmem:[%s258 + $0x158] sm:$0xff]
      %v1411 = vld [vmem:[%s258 + $0x160] sm:$0xf]
      %v1412 = vld [vmem:[%s258 + $0x168] sm:$0xff]
      %v1413 = vld [vmem:[%s258 + $0x170] sm:$0xff]
      %v1414 = vld [vmem:[%s258 + $0x178] sm:$0xf]
      %v1415 = vmax.f32 %v1319, %v1367
      %v1416 = vmax.f32 %v1320, %v1368
      %v1417 = vmax.f32 %v1321, %v1369
      %v1418 = vmax.f32 %v1322, %v1370
      %v1419 = vmax.f32 %v1323, %v1371
      %v1420 = vmax.f32 %v1324, %v1372
      %v1421 = vmax.f32 %v1325, %v1373
      %v1422 = vmax.f32 %v1326, %v1374
      %v1423 = vmax.f32 %v1327, %v1375
      %v1424 = vmax.f32 %v1328, %v1376
      %v1425 = vmax.f32 %v1329, %v1377
      %v1426 = vmax.f32 %v1330, %v1378
      %v1427 = vmax.f32 %v1331, %v1379
      %v1428 = vmax.f32 %v1332, %v1380
      %v1429 = vmax.f32 %v1333, %v1381
      %v1430 = vmax.f32 %v1334, %v1382
      %v1431 = vmax.f32 %v1335, %v1383
      %v1432 = vmax.f32 %v1336, %v1384
      %v1433 = vmax.f32 %v1337, %v1385
      %v1434 = vmax.f32 %v1338, %v1386
      %v1435 = vmax.f32 %v1339, %v1387
      %v1436 = vmax.f32 %v1340, %v1388
      %v1437 = vmax.f32 %v1341, %v1389
      %v1438 = vmax.f32 %v1342, %v1390
      %v1439 = vmax.f32 %v1343, %v1391
      %v1440 = vmax.f32 %v1344, %v1392
      %v1441 = vmax.f32 %v1345, %v1393
      %v1442 = vmax.f32 %v1346, %v1394
      %v1443 = vmax.f32 %v1347, %v1395
      %v1444 = vmax.f32 %v1348, %v1396
      %v1445 = vmax.f32 %v1349, %v1397
      %v1446 = vmax.f32 %v1350, %v1398
      %v1447 = vmax.f32 %v1351, %v1399
      %v1448 = vmax.f32 %v1352, %v1400
      %v1449 = vmax.f32 %v1353, %v1401
      %v1450 = vmax.f32 %v1354, %v1402
      %v1451 = vmax.f32 %v1355, %v1403
      %v1452 = vmax.f32 %v1356, %v1404
      %v1453 = vmax.f32 %v1357, %v1405
      %v1454 = vmax.f32 %v1358, %v1406
      %v1455 = vmax.f32 %v1359, %v1407
      %v1456 = vmax.f32 %v1360, %v1408
      %v1457 = vmax.f32 %v1361, %v1409
      %v1458 = vmax.f32 %v1362, %v1410
      %v1459 = vmax.f32 %v1363, %v1411
      %v1460 = vmax.f32 %v1364, %v1412
      %v1461 = vmax.f32 %v1365, %v1413
      %v1462 = vmax.f32 %v1366, %v1414
      %v1463 = vld [vmem:[%s597] sm:$0xff]
      %v1464 = vld [vmem:[%s597 + $0x8] sm:$0xff]
      %v1465 = vld [vmem:[%s597 + $0x10] sm:$0xf]
      %v1466 = vld [vmem:[%s597 + $0x18] sm:$0xff]
      %v1467 = vld [vmem:[%s597 + $0x20] sm:$0xff]
      %v1468 = vld [vmem:[%s597 + $0x28] sm:$0xf]
      %v1469 = vld [vmem:[%s597 + $0x30] sm:$0xff]
      %v1470 = vld [vmem:[%s597 + $0x38] sm:$0xff]
      %v1471 = vld [vmem:[%s597 + $0x40] sm:$0xf]
      %v1472 = vld [vmem:[%s597 + $0x48] sm:$0xff]
      %v1473 = vld [vmem:[%s597 + $0x50] sm:$0xff]
      %v1474 = vld [vmem:[%s597 + $0x58] sm:$0xf]
      %v1475 = vld [vmem:[%s597 + $0x60] sm:$0xff]
      %v1476 = vld [vmem:[%s597 + $0x68] sm:$0xff]
      %v1477 = vld [vmem:[%s597 + $0x70] sm:$0xf]
      %v1478 = vld [vmem:[%s597 + $0x78] sm:$0xff]
      %v1479 = vld [vmem:[%s597 + $0x80] sm:$0xff]
      %v1480 = vld [vmem:[%s597 + $0x88] sm:$0xf]
      %v1481 = vld [vmem:[%s597 + $0x90] sm:$0xff]
      %v1482 = vld [vmem:[%s597 + $0x98] sm:$0xff]
      %v1483 = vld [vmem:[%s597 + $0xa0] sm:$0xf]
      %v1484 = vld [vmem:[%s597 + $0xa8] sm:$0xff]
      %v1485 = vld [vmem:[%s597 + $0xb0] sm:$0xff]
      %v1486 = vld [vmem:[%s597 + $0xb8] sm:$0xf]
      %v1487 = vld [vmem:[%s597 + $0xc0] sm:$0xff]
      %v1488 = vld [vmem:[%s597 + $0xc8] sm:$0xff]
      %v1489 = vld [vmem:[%s597 + $0xd0] sm:$0xf]
      %v1490 = vld [vmem:[%s597 + $0xd8] sm:$0xff]
      %v1491 = vld [vmem:[%s597 + $0xe0] sm:$0xff]
      %v1492 = vld [vmem:[%s597 + $0xe8] sm:$0xf]
      %v1493 = vld [vmem:[%s597 + $0xf0] sm:$0xff]
      %v1494 = vld [vmem:[%s597 + $0xf8] sm:$0xff]
      %v1495 = vld [vmem:[%s597 + $0x100] sm:$0xf]
      %v1496 = vld [vmem:[%s597 + $0x108] sm:$0xff]
      %v1497 = vld [vmem:[%s597 + $0x110] sm:$0xff]
      %v1498 = vld [vmem:[%s597 + $0x118] sm:$0xf]
      %v1499 = vld [vmem:[%s597 + $0x120] sm:$0xff]
      %v1500 = vld [vmem:[%s597 + $0x128] sm:$0xff]
      %v1501 = vld [vmem:[%s597 + $0x130] sm:$0xf]
      %v1502 = vld [vmem:[%s597 + $0x138] sm:$0xff]
      %v1503 = vld [vmem:[%s597 + $0x140] sm:$0xff]
      %v1504 = vld [vmem:[%s597 + $0x148] sm:$0xf]
      %v1505 = vld [vmem:[%s597 + $0x150] sm:$0xff]
      %v1506 = vld [vmem:[%s597 + $0x158] sm:$0xff]
      %v1507 = vld [vmem:[%s597 + $0x160] sm:$0xf]
      %v1508 = vld [vmem:[%s597 + $0x168] sm:$0xff]
      %v1509 = vld [vmem:[%s597 + $0x170] sm:$0xff]
      %v1510 = vld [vmem:[%s597 + $0x178] sm:$0xf]
      %v1511 = vmax.f32 %v1415, %v1463
      %v1512 = vmax.f32 %v1416, %v1464
      %v1513 = vmax.f32 %v1417, %v1465
      %v1514 = vmax.f32 %v1418, %v1466
      %v1515 = vmax.f32 %v1419, %v1467
      %v1516 = vmax.f32 %v1420, %v1468
      %v1517 = vmax.f32 %v1421, %v1469
      %v1518 = vmax.f32 %v1422, %v1470
      %v1519 = vmax.f32 %v1423, %v1471
      %v1520 = vmax.f32 %v1424, %v1472
      %v1521 = vmax.f32 %v1425, %v1473
      %v1522 = vmax.f32 %v1426, %v1474
      %v1523 = vmax.f32 %v1427, %v1475
      %v1524 = vmax.f32 %v1428, %v1476
      %v1525 = vmax.f32 %v1429, %v1477
      %v1526 = vmax.f32 %v1430, %v1478
      %v1527 = vmax.f32 %v1431, %v1479
      %v1528 = vmax.f32 %v1432, %v1480
      %v1529 = vmax.f32 %v1433, %v1481
      %v1530 = vmax.f32 %v1434, %v1482
      %v1531 = vmax.f32 %v1435, %v1483
      %v1532 = vmax.f32 %v1436, %v1484
      %v1533 = vmax.f32 %v1437, %v1485
      %v1534 = vmax.f32 %v1438, %v1486
      %v1535 = vmax.f32 %v1439, %v1487
      %v1536 = vmax.f32 %v1440, %v1488
      %v1537 = vmax.f32 %v1441, %v1489
      %v1538 = vmax.f32 %v1442, %v1490
      %v1539 = vmax.f32 %v1443, %v1491
      %v1540 = vmax.f32 %v1444, %v1492
      %v1541 = vmax.f32 %v1445, %v1493
      %v1542 = vmax.f32 %v1446, %v1494
      %v1543 = vmax.f32 %v1447, %v1495
      %v1544 = vmax.f32 %v1448, %v1496
      %v1545 = vmax.f32 %v1449, %v1497
      %v1546 = vmax.f32 %v1450, %v1498
      %v1547 = vmax.f32 %v1451, %v1499
      %v1548 = vmax.f32 %v1452, %v1500
      %v1549 = vmax.f32 %v1453, %v1501
      %v1550 = vmax.f32 %v1454, %v1502
      %v1551 = vmax.f32 %v1455, %v1503
      %v1552 = vmax.f32 %v1456, %v1504
      %v1553 = vmax.f32 %v1457, %v1505
      %v1554 = vmax.f32 %v1458, %v1506
      %v1555 = vmax.f32 %v1459, %v1507
      %v1556 = vmax.f32 %v1460, %v1508
      %v1557 = vmax.f32 %v1461, %v1509
      %v1558 = vmax.f32 %v1462, %v1510
      %v1559 = vld [vmem:[%s694] sm:$0xff]
      %v1560 = vld [vmem:[%s694 + $0x8] sm:$0xff]
      %v1561 = vld [vmem:[%s694 + $0x10] sm:$0xf]
      %v1562 = vld [vmem:[%s694 + $0x18] sm:$0xff]
      %v1563 = vld [vmem:[%s694 + $0x20] sm:$0xff]
      %v1564 = vld [vmem:[%s694 + $0x28] sm:$0xf]
      %v1565 = vld [vmem:[%s694 + $0x30] sm:$0xff]
      %v1566 = vld [vmem:[%s694 + $0x38] sm:$0xff]
      %v1567 = vld [vmem:[%s694 + $0x40] sm:$0xf]
      %v1568 = vld [vmem:[%s694 + $0x48] sm:$0xff]
      %v1569 = vld [vmem:[%s694 + $0x50] sm:$0xff]
      %v1570 = vld [vmem:[%s694 + $0x58] sm:$0xf]
      %v1571 = vld [vmem:[%s694 + $0x60] sm:$0xff]
      %v1572 = vld [vmem:[%s694 + $0x68] sm:$0xff]
      %v1573 = vld [vmem:[%s694 + $0x70] sm:$0xf]
      %v1574 = vld [vmem:[%s694 + $0x78] sm:$0xff]
      %v1575 = vld [vmem:[%s694 + $0x80] sm:$0xff]
      %v1576 = vld [vmem:[%s694 + $0x88] sm:$0xf]
      %v1577 = vld [vmem:[%s694 + $0x90] sm:$0xff]
      %v1578 = vld [vmem:[%s694 + $0x98] sm:$0xff]
      %v1579 = vld [vmem:[%s694 + $0xa0] sm:$0xf]
      %v1580 = vld [vmem:[%s694 + $0xa8] sm:$0xff]
      %v1581 = vld [vmem:[%s694 + $0xb0] sm:$0xff]
      %v1582 = vld [vmem:[%s694 + $0xb8] sm:$0xf]
      %v1583 = vld [vmem:[%s694 + $0xc0] sm:$0xff]
      %v1584 = vld [vmem:[%s694 + $0xc8] sm:$0xff]
      %v1585 = vld [vmem:[%s694 + $0xd0] sm:$0xf]
      %v1586 = vld [vmem:[%s694 + $0xd8] sm:$0xff]
      %v1587 = vld [vmem:[%s694 + $0xe0] sm:$0xff]
      %v1588 = vld [vmem:[%s694 + $0xe8] sm:$0xf]
      %v1589 = vld [vmem:[%s694 + $0xf0] sm:$0xff]
      %v1590 = vld [vmem:[%s694 + $0xf8] sm:$0xff]
      %v1591 = vld [vmem:[%s694 + $0x100] sm:$0xf]
      %v1592 = vld [vmem:[%s694 + $0x108] sm:$0xff]
      %v1593 = vld [vmem:[%s694 + $0x110] sm:$0xff]
      %v1594 = vld [vmem:[%s694 + $0x118] sm:$0xf]
      %v1595 = vld [vmem:[%s694 + $0x120] sm:$0xff]
      %v1596 = vld [vmem:[%s694 + $0x128] sm:$0xff]
      %v1597 = vld [vmem:[%s694 + $0x130] sm:$0xf]
      %v1598 = vld [vmem:[%s694 + $0x138] sm:$0xff]
      %v1599 = vld [vmem:[%s694 + $0x140] sm:$0xff]
      %v1600 = vld [vmem:[%s694 + $0x148] sm:$0xf]
      %v1601 = vld [vmem:[%s694 + $0x150] sm:$0xff]
      %v1602 = vld [vmem:[%s694 + $0x158] sm:$0xff]
      %v1603 = vld [vmem:[%s694 + $0x160] sm:$0xf]
      %v1604 = vld [vmem:[%s694 + $0x168] sm:$0xff]
      %v1605 = vld [vmem:[%s694 + $0x170] sm:$0xff]
      %v1606 = vld [vmem:[%s694 + $0x178] sm:$0xf]
      %v1607 = vmax.f32 %v1511, %v1559
      %v1608 = vmax.f32 %v1512, %v1560
      %v1609 = vmax.f32 %v1513, %v1561
      %v1610 = vmax.f32 %v1514, %v1562
      %v1611 = vmax.f32 %v1515, %v1563
      %v1612 = vmax.f32 %v1516, %v1564
      %v1613 = vmax.f32 %v1517, %v1565
      %v1614 = vmax.f32 %v1518, %v1566
      %v1615 = vmax.f32 %v1519, %v1567
      %v1616 = vmax.f32 %v1520, %v1568
      %v1617 = vmax.f32 %v1521, %v1569
      %v1618 = vmax.f32 %v1522, %v1570
      %v1619 = vmax.f32 %v1523, %v1571
      %v1620 = vmax.f32 %v1524, %v1572
      %v1621 = vmax.f32 %v1525, %v1573
      %v1622 = vmax.f32 %v1526, %v1574
      %v1623 = vmax.f32 %v1527, %v1575
      %v1624 = vmax.f32 %v1528, %v1576
      %v1625 = vmax.f32 %v1529, %v1577
      %v1626 = vmax.f32 %v1530, %v1578
      %v1627 = vmax.f32 %v1531, %v1579
      %v1628 = vmax.f32 %v1532, %v1580
      %v1629 = vmax.f32 %v1533, %v1581
      %v1630 = vmax.f32 %v1534, %v1582
      %v1631 = vmax.f32 %v1535, %v1583
      %v1632 = vmax.f32 %v1536, %v1584
      %v1633 = vmax.f32 %v1537, %v1585
      %v1634 = vmax.f32 %v1538, %v1586
      %v1635 = vmax.f32 %v1539, %v1587
      %v1636 = vmax.f32 %v1540, %v1588
      %v1637 = vmax.f32 %v1541, %v1589
      %v1638 = vmax.f32 %v1542, %v1590
      %v1639 = vmax.f32 %v1543, %v1591
      %v1640 = vmax.f32 %v1544, %v1592
      %v1641 = vmax.f32 %v1545, %v1593
      %v1642 = vmax.f32 %v1546, %v1594
      %v1643 = vmax.f32 %v1547, %v1595
      %v1644 = vmax.f32 %v1548, %v1596
      %v1645 = vmax.f32 %v1549, %v1597
      %v1646 = vmax.f32 %v1550, %v1598
      %v1647 = vmax.f32 %v1551, %v1599
      %v1648 = vmax.f32 %v1552, %v1600
      %v1649 = vmax.f32 %v1553, %v1601
      %v1650 = vmax.f32 %v1554, %v1602
      %v1651 = vmax.f32 %v1555, %v1603
      %v1652 = vmax.f32 %v1556, %v1604
      %v1653 = vmax.f32 %v1557, %v1605
      %v1654 = vmax.f32 %v1558, %v1606
      %1655 = vst.msk [vmem:[%s258] sm:$0xff] %vm243, %v1607
      %1656 = vst.msk [vmem:[%s258 + $0x8] sm:$0xff] %vm243, %v1608
      %1657 = vst.msk [vmem:[%s258 + $0x10] sm:$0xf] %vm246, %v1609
      %1658 = vst.msk [vmem:[%s258 + $0x18] sm:$0xff] %vm243, %v1610
      %1659 = vst.msk [vmem:[%s258 + $0x20] sm:$0xff] %vm243, %v1611
      %1660 = vst.msk [vmem:[%s258 + $0x28] sm:$0xf] %vm246, %v1612
      %1661 = vst.msk [vmem:[%s258 + $0x30] sm:$0xff] %vm243, %v1613
      %1662 = vst.msk [vmem:[%s258 + $0x38] sm:$0xff] %vm243, %v1614
      %1663 = vst.msk [vmem:[%s258 + $0x40] sm:$0xf] %vm246, %v1615
      %1664 = vst.msk [vmem:[%s258 + $0x48] sm:$0xff] %vm243, %v1616
      %1665 = vst.msk [vmem:[%s258 + $0x50] sm:$0xff] %vm243, %v1617
      %1666 = vst.msk [vmem:[%s258 + $0x58] sm:$0xf] %vm246, %v1618
      %1667 = vst.msk [vmem:[%s258 + $0x60] sm:$0xff] %vm243, %v1619
      %1668 = vst.msk [vmem:[%s258 + $0x68] sm:$0xff] %vm243, %v1620
      %1669 = vst.msk [vmem:[%s258 + $0x70] sm:$0xf] %vm246, %v1621
      %1670 = vst.msk [vmem:[%s258 + $0x78] sm:$0xff] %vm243, %v1622
      %1671 = vst.msk [vmem:[%s258 + $0x80] sm:$0xff] %vm243, %v1623
      %1672 = vst.msk [vmem:[%s258 + $0x88] sm:$0xf] %vm246, %v1624
      %1673 = vst.msk [vmem:[%s258 + $0x90] sm:$0xff] %vm243, %v1625
      %1674 = vst.msk [vmem:[%s258 + $0x98] sm:$0xff] %vm243, %v1626
      %1675 = vst.msk [vmem:[%s258 + $0xa0] sm:$0xf] %vm246, %v1627
      %1676 = vst.msk [vmem:[%s258 + $0xa8] sm:$0xff] %vm243, %v1628
      %1677 = vst.msk [vmem:[%s258 + $0xb0] sm:$0xff] %vm243, %v1629
      %1678 = vst.msk [vmem:[%s258 + $0xb8] sm:$0xf] %vm246, %v1630
      %1679 = vst.msk [vmem:[%s258 + $0xc0] sm:$0xff] %vm243, %v1631
      %1680 = vst.msk [vmem:[%s258 + $0xc8] sm:$0xff] %vm243, %v1632
      %1681 = vst.msk [vmem:[%s258 + $0xd0] sm:$0xf] %vm246, %v1633
      %1682 = vst.msk [vmem:[%s258 + $0xd8] sm:$0xff] %vm243, %v1634
      %1683 = vst.msk [vmem:[%s258 + $0xe0] sm:$0xff] %vm243, %v1635
      %1684 = vst.msk [vmem:[%s258 + $0xe8] sm:$0xf] %vm246, %v1636
      %1685 = vst.msk [vmem:[%s258 + $0xf0] sm:$0xff] %vm243, %v1637
      %1686 = vst.msk [vmem:[%s258 + $0xf8] sm:$0xff] %vm243, %v1638
      %1687 = vst.msk [vmem:[%s258 + $0x100] sm:$0xf] %vm246, %v1639
      %1688 = vst.msk [vmem:[%s258 + $0x108] sm:$0xff] %vm243, %v1640
      %1689 = vst.msk [vmem:[%s258 + $0x110] sm:$0xff] %vm243, %v1641
      %1690 = vst.msk [vmem:[%s258 + $0x118] sm:$0xf] %vm246, %v1642
      %1691 = vst.msk [vmem:[%s258 + $0x120] sm:$0xff] %vm243, %v1643
      %1692 = vst.msk [vmem:[%s258 + $0x128] sm:$0xff] %vm243, %v1644
      %1693 = vst.msk [vmem:[%s258 + $0x130] sm:$0xf] %vm246, %v1645
      %1694 = vst.msk [vmem:[%s258 + $0x138] sm:$0xff] %vm243, %v1646
      %1695 = vst.msk [vmem:[%s258 + $0x140] sm:$0xff] %vm243, %v1647
      %1696 = vst.msk [vmem:[%s258 + $0x148] sm:$0xf] %vm246, %v1648
      %1697 = vst.msk [vmem:[%s258 + $0x150] sm:$0xff] %vm243, %v1649
      %1698 = vst.msk [vmem:[%s258 + $0x158] sm:$0xff] %vm243, %v1650
      %1699 = vst.msk [vmem:[%s258 + $0x160] sm:$0xf] %vm246, %v1651
      %1700 = vst.msk [vmem:[%s258 + $0x168] sm:$0xff] %vm243, %v1652
      %1701 = vst.msk [vmem:[%s258 + $0x170] sm:$0xff] %vm243, %v1653
      %1702 = vst.msk [vmem:[%s258 + $0x178] sm:$0xf] %vm246, %v1654
      %v1703 = vld [vmem:[%s258] sm:$0xff]
      %v1704 = vld [vmem:[%s258 + $0x8] sm:$0xff]
      %v1705 = vld [vmem:[%s258 + $0x18] sm:$0xff]
      %v1706 = vld [vmem:[%s258 + $0x20] sm:$0xff]
      %v1707 = vld [vmem:[%s258 + $0x30] sm:$0xff]
      %v1708 = vld [vmem:[%s258 + $0x38] sm:$0xff]
      %v1709 = vld [vmem:[%s258 + $0x48] sm:$0xff]
      %v1710 = vld [vmem:[%s258 + $0x50] sm:$0xff]
      %v1711 = vld [vmem:[%s258 + $0x60] sm:$0xff]
      %v1712 = vld [vmem:[%s258 + $0x68] sm:$0xff]
      %v1713 = vld [vmem:[%s258 + $0x78] sm:$0xff]
      %v1714 = vld [vmem:[%s258 + $0x80] sm:$0xff]
      %v1715 = vld [vmem:[%s258 + $0x90] sm:$0xff]
      %v1716 = vld [vmem:[%s258 + $0x98] sm:$0xff]
      %v1717 = vld [vmem:[%s258 + $0xa8] sm:$0xff]
      %v1718 = vld [vmem:[%s258 + $0xb0] sm:$0xff]
      %v1719 = vld [vmem:[%s258 + $0xc0] sm:$0xff]
      %v1720 = vld [vmem:[%s258 + $0xc8] sm:$0xff]
      %v1721 = vld [vmem:[%s258 + $0xd8] sm:$0xff]
      %v1722 = vld [vmem:[%s258 + $0xe0] sm:$0xff]
      %v1723 = vld [vmem:[%s258 + $0xf0] sm:$0xff]
      %v1724 = vld [vmem:[%s258 + $0xf8] sm:$0xff]
      %v1725 = vld [vmem:[%s258 + $0x108] sm:$0xff]
      %v1726 = vld [vmem:[%s258 + $0x110] sm:$0xff]
      %v1727 = vld [vmem:[%s258 + $0x120] sm:$0xff]
      %v1728 = vld [vmem:[%s258 + $0x128] sm:$0xff]
      %v1729 = vld [vmem:[%s258 + $0x138] sm:$0xff]
      %v1730 = vld [vmem:[%s258 + $0x140] sm:$0xff]
      %v1731 = vld [vmem:[%s258 + $0x150] sm:$0xff]
      %v1732 = vld [vmem:[%s258 + $0x158] sm:$0xff]
      %v1733 = vld [vmem:[%s258 + $0x168] sm:$0xff]
      %v1734 = vld [vmem:[%s258 + $0x170] sm:$0xff]
      %v1735 = vld [vmem:[%s258 + $0x1] sm:$0xff]
      %v1736 = vld [vmem:[%s258 + $0x9] sm:$0xff]
      %v1737 = vld [vmem:[%s258 + $0x19] sm:$0xff]
      %v1738 = vld [vmem:[%s258 + $0x21] sm:$0xff]
      %v1739 = vld [vmem:[%s258 + $0x31] sm:$0xff]
      %v1740 = vld [vmem:[%s258 + $0x39] sm:$0xff]
      %v1741 = vld [vmem:[%s258 + $0x49] sm:$0xff]
      %v1742 = vld [vmem:[%s258 + $0x51] sm:$0xff]
      %v1743 = vld [vmem:[%s258 + $0x61] sm:$0xff]
      %v1744 = vld [vmem:[%s258 + $0x69] sm:$0xff]
      %v1745 = vld [vmem:[%s258 + $0x79] sm:$0xff]
      %v1746 = vld [vmem:[%s258 + $0x81] sm:$0xff]
      %v1747 = vld [vmem:[%s258 + $0x91] sm:$0xff]
      %v1748 = vld [vmem:[%s258 + $0x99] sm:$0xff]
      %v1749 = vld [vmem:[%s258 + $0xa9] sm:$0xff]
      %v1750 = vld [vmem:[%s258 + $0xb1] sm:$0xff]
      %v1751 = vld [vmem:[%s258 + $0xc1] sm:$0xff]
      %v1752 = vld [vmem:[%s258 + $0xc9] sm:$0xff]
      %v1753 = vld [vmem:[%s258 + $0xd9] sm:$0xff]
      %v1754 = vld [vmem:[%s258 + $0xe1] sm:$0xff]
      %v1755 = vld [vmem:[%s258 + $0xf1] sm:$0xff]
      %v1756 = vld [vmem:[%s258 + $0xf9] sm:$0xff]
      %v1757 = vld [vmem:[%s258 + $0x109] sm:$0xff]
      %v1758 = vld [vmem:[%s258 + $0x111] sm:$0xff]
      %v1759 = vld [vmem:[%s258 + $0x121] sm:$0xff]
      %v1760 = vld [vmem:[%s258 + $0x129] sm:$0xff]
      %v1761 = vld [vmem:[%s258 + $0x139] sm:$0xff]
      %v1762 = vld [vmem:[%s258 + $0x141] sm:$0xff]
      %v1763 = vld [vmem:[%s258 + $0x151] sm:$0xff]
      %v1764 = vld [vmem:[%s258 + $0x159] sm:$0xff]
      %v1765 = vld [vmem:[%s258 + $0x169] sm:$0xff]
      %v1766 = vld [vmem:[%s258 + $0x171] sm:$0xff]
      %v1767 = vmax.f32 %v1703, %v1735
      %v1768 = vmax.f32 %v1704, %v1736
      %v1769 = vmax.f32 %v1705, %v1737
      %v1770 = vmax.f32 %v1706, %v1738
      %v1771 = vmax.f32 %v1707, %v1739
      %v1772 = vmax.f32 %v1708, %v1740
      %v1773 = vmax.f32 %v1709, %v1741
      %v1774 = vmax.f32 %v1710, %v1742
      %v1775 = vmax.f32 %v1711, %v1743
      %v1776 = vmax.f32 %v1712, %v1744
      %v1777 = vmax.f32 %v1713, %v1745
      %v1778 = vmax.f32 %v1714, %v1746
      %v1779 = vmax.f32 %v1715, %v1747
      %v1780 = vmax.f32 %v1716, %v1748
      %v1781 = vmax.f32 %v1717, %v1749
      %v1782 = vmax.f32 %v1718, %v1750
      %v1783 = vmax.f32 %v1719, %v1751
      %v1784 = vmax.f32 %v1720, %v1752
      %v1785 = vmax.f32 %v1721, %v1753
      %v1786 = vmax.f32 %v1722, %v1754
      %v1787 = vmax.f32 %v1723, %v1755
      %v1788 = vmax.f32 %v1724, %v1756
      %v1789 = vmax.f32 %v1725, %v1757
      %v1790 = vmax.f32 %v1726, %v1758
      %v1791 = vmax.f32 %v1727, %v1759
      %v1792 = vmax.f32 %v1728, %v1760
      %v1793 = vmax.f32 %v1729, %v1761
      %v1794 = vmax.f32 %v1730, %v1762
      %v1795 = vmax.f32 %v1731, %v1763
      %v1796 = vmax.f32 %v1732, %v1764
      %v1797 = vmax.f32 %v1733, %v1765
      %v1798 = vmax.f32 %v1734, %v1766
      %v1799 = vld [vmem:[%s258 + $0x2] sm:$0xff]
      %v1800 = vld [vmem:[%s258 + $0xa] sm:$0xff]
      %v1801 = vld [vmem:[%s258 + $0x1a] sm:$0xff]
      %v1802 = vld [vmem:[%s258 + $0x22] sm:$0xff]
      %v1803 = vld [vmem:[%s258 + $0x32] sm:$0xff]
      %v1804 = vld [vmem:[%s258 + $0x3a] sm:$0xff]
      %v1805 = vld [vmem:[%s258 + $0x4a] sm:$0xff]
      %v1806 = vld [vmem:[%s258 + $0x52] sm:$0xff]
      %v1807 = vld [vmem:[%s258 + $0x62] sm:$0xff]
      %v1808 = vld [vmem:[%s258 + $0x6a] sm:$0xff]
      %v1809 = vld [vmem:[%s258 + $0x7a] sm:$0xff]
      %v1810 = vld [vmem:[%s258 + $0x82] sm:$0xff]
      %v1811 = vld [vmem:[%s258 + $0x92] sm:$0xff]
      %v1812 = vld [vmem:[%s258 + $0x9a] sm:$0xff]
      %v1813 = vld [vmem:[%s258 + $0xaa] sm:$0xff]
      %v1814 = vld [vmem:[%s258 + $0xb2] sm:$0xff]
      %v1815 = vld [vmem:[%s258 + $0xc2] sm:$0xff]
      %v1816 = vld [vmem:[%s258 + $0xca] sm:$0xff]
      %v1817 = vld [vmem:[%s258 + $0xda] sm:$0xff]
      %v1818 = vld [vmem:[%s258 + $0xe2] sm:$0xff]
      %v1819 = vld [vmem:[%s258 + $0xf2] sm:$0xff]
      %v1820 = vld [vmem:[%s258 + $0xfa] sm:$0xff]
      %v1821 = vld [vmem:[%s258 + $0x10a] sm:$0xff]
      %v1822 = vld [vmem:[%s258 + $0x112] sm:$0xff]
      %v1823 = vld [vmem:[%s258 + $0x122] sm:$0xff]
      %v1824 = vld [vmem:[%s258 + $0x12a] sm:$0xff]
      %v1825 = vld [vmem:[%s258 + $0x13a] sm:$0xff]
      %v1826 = vld [vmem:[%s258 + $0x142] sm:$0xff]
      %v1827 = vld [vmem:[%s258 + $0x152] sm:$0xff]
      %v1828 = vld [vmem:[%s258 + $0x15a] sm:$0xff]
      %v1829 = vld [vmem:[%s258 + $0x16a] sm:$0xff]
      %v1830 = vld [vmem:[%s258 + $0x172] sm:$0xff]
      %v1831 = vmax.f32 %v1767, %v1799
      %v1832 = vmax.f32 %v1768, %v1800
      %v1833 = vmax.f32 %v1769, %v1801
      %v1834 = vmax.f32 %v1770, %v1802
      %v1835 = vmax.f32 %v1771, %v1803
      %v1836 = vmax.f32 %v1772, %v1804
      %v1837 = vmax.f32 %v1773, %v1805
      %v1838 = vmax.f32 %v1774, %v1806
      %v1839 = vmax.f32 %v1775, %v1807
      %v1840 = vmax.f32 %v1776, %v1808
      %v1841 = vmax.f32 %v1777, %v1809
      %v1842 = vmax.f32 %v1778, %v1810
      %v1843 = vmax.f32 %v1779, %v1811
      %v1844 = vmax.f32 %v1780, %v1812
      %v1845 = vmax.f32 %v1781, %v1813
      %v1846 = vmax.f32 %v1782, %v1814
      %v1847 = vmax.f32 %v1783, %v1815
      %v1848 = vmax.f32 %v1784, %v1816
      %v1849 = vmax.f32 %v1785, %v1817
      %v1850 = vmax.f32 %v1786, %v1818
      %v1851 = vmax.f32 %v1787, %v1819
      %v1852 = vmax.f32 %v1788, %v1820
      %v1853 = vmax.f32 %v1789, %v1821
      %v1854 = vmax.f32 %v1790, %v1822
      %v1855 = vmax.f32 %v1791, %v1823
      %v1856 = vmax.f32 %v1792, %v1824
      %v1857 = vmax.f32 %v1793, %v1825
      %v1858 = vmax.f32 %v1794, %v1826
      %v1859 = vmax.f32 %v1795, %v1827
      %v1860 = vmax.f32 %v1796, %v1828
      %v1861 = vmax.f32 %v1797, %v1829
      %v1862 = vmax.f32 %v1798, %v1830
      %v1863 = vld [vmem:[%s258 + $0x3] sm:$0xff]
      %v1864 = vld [vmem:[%s258 + $0xb] sm:$0xff]
      %v1865 = vld [vmem:[%s258 + $0x1b] sm:$0xff]
      %v1866 = vld [vmem:[%s258 + $0x23] sm:$0xff]
      %v1867 = vld [vmem:[%s258 + $0x33] sm:$0xff]
      %v1868 = vld [vmem:[%s258 + $0x3b] sm:$0xff]
      %v1869 = vld [vmem:[%s258 + $0x4b] sm:$0xff]
      %v1870 = vld [vmem:[%s258 + $0x53] sm:$0xff]
      %v1871 = vld [vmem:[%s258 + $0x63] sm:$0xff]
      %v1872 = vld [vmem:[%s258 + $0x6b] sm:$0xff]
      %v1873 = vld [vmem:[%s258 + $0x7b] sm:$0xff]
      %v1874 = vld [vmem:[%s258 + $0x83] sm:$0xff]
      %v1875 = vld [vmem:[%s258 + $0x93] sm:$0xff]
      %v1876 = vld [vmem:[%s258 + $0x9b] sm:$0xff]
      %v1877 = vld [vmem:[%s258 + $0xab] sm:$0xff]
      %v1878 = vld [vmem:[%s258 + $0xb3] sm:$0xff]
      %v1879 = vld [vmem:[%s258 + $0xc3] sm:$0xff]
      %v1880 = vld [vmem:[%s258 + $0xcb] sm:$0xff]
      %v1881 = vld [vmem:[%s258 + $0xdb] sm:$0xff]
      %v1882 = vld [vmem:[%s258 + $0xe3] sm:$0xff]
      %v1883 = vld [vmem:[%s258 + $0xf3] sm:$0xff]
      %v1884 = vld [vmem:[%s258 + $0xfb] sm:$0xff]
      %v1885 = vld [vmem:[%s258 + $0x10b] sm:$0xff]
      %v1886 = vld [vmem:[%s258 + $0x113] sm:$0xff]
      %v1887 = vld [vmem:[%s258 + $0x123] sm:$0xff]
      %v1888 = vld [vmem:[%s258 + $0x12b] sm:$0xff]
      %v1889 = vld [vmem:[%s258 + $0x13b] sm:$0xff]
      %v1890 = vld [vmem:[%s258 + $0x143] sm:$0xff]
      %v1891 = vld [vmem:[%s258 + $0x153] sm:$0xff]
      %v1892 = vld [vmem:[%s258 + $0x15b] sm:$0xff]
      %v1893 = vld [vmem:[%s258 + $0x16b] sm:$0xff]
      %v1894 = vld [vmem:[%s258 + $0x173] sm:$0xff]
      %v1895 = vmax.f32 %v1831, %v1863
      %v1896 = vmax.f32 %v1832, %v1864
      %v1897 = vmax.f32 %v1833, %v1865
      %v1898 = vmax.f32 %v1834, %v1866
      %v1899 = vmax.f32 %v1835, %v1867
      %v1900 = vmax.f32 %v1836, %v1868
      %v1901 = vmax.f32 %v1837, %v1869
      %v1902 = vmax.f32 %v1838, %v1870
      %v1903 = vmax.f32 %v1839, %v1871
      %v1904 = vmax.f32 %v1840, %v1872
      %v1905 = vmax.f32 %v1841, %v1873
      %v1906 = vmax.f32 %v1842, %v1874
      %v1907 = vmax.f32 %v1843, %v1875
      %v1908 = vmax.f32 %v1844, %v1876
      %v1909 = vmax.f32 %v1845, %v1877
      %v1910 = vmax.f32 %v1846, %v1878
      %v1911 = vmax.f32 %v1847, %v1879
      %v1912 = vmax.f32 %v1848, %v1880
      %v1913 = vmax.f32 %v1849, %v1881
      %v1914 = vmax.f32 %v1850, %v1882
      %v1915 = vmax.f32 %v1851, %v1883
      %v1916 = vmax.f32 %v1852, %v1884
      %v1917 = vmax.f32 %v1853, %v1885
      %v1918 = vmax.f32 %v1854, %v1886
      %v1919 = vmax.f32 %v1855, %v1887
      %v1920 = vmax.f32 %v1856, %v1888
      %v1921 = vmax.f32 %v1857, %v1889
      %v1922 = vmax.f32 %v1858, %v1890
      %v1923 = vmax.f32 %v1859, %v1891
      %v1924 = vmax.f32 %v1860, %v1892
      %v1925 = vmax.f32 %v1861, %v1893
      %v1926 = vmax.f32 %v1862, %v1894
      %v1927 = vld [vmem:[%s258 + $0x4] sm:$0xff]
      %v1928 = vld [vmem:[%s258 + $0xc] sm:$0xff]
      %v1929 = vld [vmem:[%s258 + $0x1c] sm:$0xff]
      %v1930 = vld [vmem:[%s258 + $0x24] sm:$0xff]
      %v1931 = vld [vmem:[%s258 + $0x34] sm:$0xff]
      %v1932 = vld [vmem:[%s258 + $0x3c] sm:$0xff]
      %v1933 = vld [vmem:[%s258 + $0x4c] sm:$0xff]
      %v1934 = vld [vmem:[%s258 + $0x54] sm:$0xff]
      %v1935 = vld [vmem:[%s258 + $0x64] sm:$0xff]
      %v1936 = vld [vmem:[%s258 + $0x6c] sm:$0xff]
      %v1937 = vld [vmem:[%s258 + $0x7c] sm:$0xff]
      %v1938 = vld [vmem:[%s258 + $0x84] sm:$0xff]
      %v1939 = vld [vmem:[%s258 + $0x94] sm:$0xff]
      %v1940 = vld [vmem:[%s258 + $0x9c] sm:$0xff]
      %v1941 = vld [vmem:[%s258 + $0xac] sm:$0xff]
      %v1942 = vld [vmem:[%s258 + $0xb4] sm:$0xff]
      %v1943 = vld [vmem:[%s258 + $0xc4] sm:$0xff]
      %v1944 = vld [vmem:[%s258 + $0xcc] sm:$0xff]
      %v1945 = vld [vmem:[%s258 + $0xdc] sm:$0xff]
      %v1946 = vld [vmem:[%s258 + $0xe4] sm:$0xff]
      %v1947 = vld [vmem:[%s258 + $0xf4] sm:$0xff]
      %v1948 = vld [vmem:[%s258 + $0xfc] sm:$0xff]
      %v1949 = vld [vmem:[%s258 + $0x10c] sm:$0xff]
      %v1950 = vld [vmem:[%s258 + $0x114] sm:$0xff]
      %v1951 = vld [vmem:[%s258 + $0x124] sm:$0xff]
      %v1952 = vld [vmem:[%s258 + $0x12c] sm:$0xff]
      %v1953 = vld [vmem:[%s258 + $0x13c] sm:$0xff]
      %v1954 = vld [vmem:[%s258 + $0x144] sm:$0xff]
      %v1955 = vld [vmem:[%s258 + $0x154] sm:$0xff]
      %v1956 = vld [vmem:[%s258 + $0x15c] sm:$0xff]
      %v1957 = vld [vmem:[%s258 + $0x16c] sm:$0xff]
      %v1958 = vld [vmem:[%s258 + $0x174] sm:$0xff]
      %v1959 = vmax.f32 %v1895, %v1927
      %v1960 = vmax.f32 %v1896, %v1928
      %v1961 = vmax.f32 %v1897, %v1929
      %v1962 = vmax.f32 %v1898, %v1930
      %v1963 = vmax.f32 %v1899, %v1931
      %v1964 = vmax.f32 %v1900, %v1932
      %v1965 = vmax.f32 %v1901, %v1933
      %v1966 = vmax.f32 %v1902, %v1934
      %v1967 = vmax.f32 %v1903, %v1935
      %v1968 = vmax.f32 %v1904, %v1936
      %v1969 = vmax.f32 %v1905, %v1937
      %v1970 = vmax.f32 %v1906, %v1938
      %v1971 = vmax.f32 %v1907, %v1939
      %v1972 = vmax.f32 %v1908, %v1940
      %v1973 = vmax.f32 %v1909, %v1941
      %v1974 = vmax.f32 %v1910, %v1942
      %v1975 = vmax.f32 %v1911, %v1943
      %v1976 = vmax.f32 %v1912, %v1944
      %v1977 = vmax.f32 %v1913, %v1945
      %v1978 = vmax.f32 %v1914, %v1946
      %v1979 = vmax.f32 %v1915, %v1947
      %v1980 = vmax.f32 %v1916, %v1948
      %v1981 = vmax.f32 %v1917, %v1949
      %v1982 = vmax.f32 %v1918, %v1950
      %v1983 = vmax.f32 %v1919, %v1951
      %v1984 = vmax.f32 %v1920, %v1952
      %v1985 = vmax.f32 %v1921, %v1953
      %v1986 = vmax.f32 %v1922, %v1954
      %v1987 = vmax.f32 %v1923, %v1955
      %v1988 = vmax.f32 %v1924, %v1956
      %v1989 = vmax.f32 %v1925, %v1957
      %v1990 = vmax.f32 %v1926, %v1958
      %1991 = vst.msk [vmem:[%s234] sm:$0xff] %vm243, %v1959
      %1992 = vst.msk [vmem:[%s234 + $0x8] sm:$0xff] %vm243, %v1960
      %1993 = vst.msk [vmem:[%s234 + $0x10] sm:$0xff] %vm243, %v1961
      %1994 = vst.msk [vmem:[%s234 + $0x18] sm:$0xff] %vm243, %v1962
      %1995 = vst.msk [vmem:[%s234 + $0x20] sm:$0xff] %vm243, %v1963
      %1996 = vst.msk [vmem:[%s234 + $0x28] sm:$0xff] %vm243, %v1964
      %1997 = vst.msk [vmem:[%s234 + $0x30] sm:$0xff] %vm243, %v1965
      %1998 = vst.msk [vmem:[%s234 + $0x38] sm:$0xff] %vm243, %v1966
      %1999 = vst.msk [vmem:[%s234 + $0x40] sm:$0xff] %vm243, %v1967
      %2000 = vst.msk [vmem:[%s234 + $0x48] sm:$0xff] %vm243, %v1968
      %2001 = vst.msk [vmem:[%s234 + $0x50] sm:$0xff] %vm243, %v1969
      %2002 = vst.msk [vmem:[%s234 + $0x58] sm:$0xff] %vm243, %v1970
      %2003 = vst.msk [vmem:[%s234 + $0x60] sm:$0xff] %vm243, %v1971
      %2004 = vst.msk [vmem:[%s234 + $0x68] sm:$0xff] %vm243, %v1972
      %2005 = vst.msk [vmem:[%s234 + $0x70] sm:$0xff] %vm243, %v1973
      %2006 = vst.msk [vmem:[%s234 + $0x78] sm:$0xff] %vm243, %v1974
      %2007 = vst.msk [vmem:[%s234 + $0x80] sm:$0xff] %vm243, %v1975
      %2008 = vst.msk [vmem:[%s234 + $0x88] sm:$0xff] %vm243, %v1976
      %2009 = vst.msk [vmem:[%s234 + $0x90] sm:$0xff] %vm243, %v1977
      %2010 = vst.msk [vmem:[%s234 + $0x98] sm:$0xff] %vm243, %v1978
      %2011 = vst.msk [vmem:[%s234 + $0xa0] sm:$0xff] %vm243, %v1979
      %2012 = vst.msk [vmem:[%s234 + $0xa8] sm:$0xff] %vm243, %v1980
      %2013 = vst.msk [vmem:[%s234 + $0xb0] sm:$0xff] %vm243, %v1981
      %2014 = vst.msk [vmem:[%s234 + $0xb8] sm:$0xff] %vm243, %v1982
      %2015 = vst.msk [vmem:[%s234 + $0xc0] sm:$0xff] %vm243, %v1983
      %2016 = vst.msk [vmem:[%s234 + $0xc8] sm:$0xff] %vm243, %v1984
      %2017 = vst.msk [vmem:[%s234 + $0xd0] sm:$0xff] %vm243, %v1985
      %2018 = vst.msk [vmem:[%s234 + $0xd8] sm:$0xff] %vm243, %v1986
      %2019 = vst.msk [vmem:[%s234 + $0xe0] sm:$0xff] %vm243, %v1987
      %2020 = vst.msk [vmem:[%s234 + $0xe8] sm:$0xff] %vm243, %v1988
      %2021 = vst.msk [vmem:[%s234 + $0xf0] sm:$0xff] %vm243, %v1989
      %2022 = vst.msk [vmem:[%s234 + $0xf8] sm:$0xff] %vm243, %v1990
      %v2023 = vld [vmem:[%s234] sm:$0xff]
      %v2024 = vld [vmem:[%s234 + $0x8] sm:$0xff]
      %v2025 = vld [vmem:[%s234 + $0x10] sm:$0xff]
      %v2026 = vld [vmem:[%s234 + $0x18] sm:$0xff]
      %v2027 = vld [vmem:[%s234 + $0x20] sm:$0xff]
      %v2028 = vld [vmem:[%s234 + $0x28] sm:$0xff]
      %v2029 = vld [vmem:[%s234 + $0x30] sm:$0xff]
      %v2030 = vld [vmem:[%s234 + $0x38] sm:$0xff]
      %v2031 = vld [vmem:[%s234 + $0x40] sm:$0xff]
      %v2032 = vld [vmem:[%s234 + $0x48] sm:$0xff]
      %v2033 = vld [vmem:[%s234 + $0x50] sm:$0xff]
      %v2034 = vld [vmem:[%s234 + $0x58] sm:$0xff]
      %v2035 = vld [vmem:[%s234 + $0x60] sm:$0xff]
      %v2036 = vld [vmem:[%s234 + $0x68] sm:$0xff]
      %v2037 = vld [vmem:[%s234 + $0x70] sm:$0xff]
      %v2038 = vld [vmem:[%s234 + $0x78] sm:$0xff]
      %v2039 = vld [vmem:[%s234 + $0x80] sm:$0xff]
      %v2040 = vld [vmem:[%s234 + $0x88] sm:$0xff]
      %v2041 = vld [vmem:[%s234 + $0x90] sm:$0xff]
      %v2042 = vld [vmem:[%s234 + $0x98] sm:$0xff]
      %v2043 = vld [vmem:[%s234 + $0xa0] sm:$0xff]
      %v2044 = vld [vmem:[%s234 + $0xa8] sm:$0xff]
      %v2045 = vld [vmem:[%s234 + $0xb0] sm:$0xff]
      %v2046 = vld [vmem:[%s234 + $0xb8] sm:$0xff]
      %v2047 = vld [vmem:[%s234 + $0xc0] sm:$0xff]
      %v2048 = vld [vmem:[%s234 + $0xc8] sm:$0xff]
      %v2049 = vld [vmem:[%s234 + $0xd0] sm:$0xff]
      %v2050 = vld [vmem:[%s234 + $0xd8] sm:$0xff]
      %v2051 = vld [vmem:[%s234 + $0xe0] sm:$0xff]
      %v2052 = vld [vmem:[%s234 + $0xe8] sm:$0xff]
      %v2053 = vld [vmem:[%s234 + $0xf0] sm:$0xff]
      %v2054 = vld [vmem:[%s234 + $0xf8] sm:$0xff]
      %2055 = vst.msk [vmem:[%s258 + $0x2] sm:$0xff] %vm243, %v2023
      %2056 = vst.msk [vmem:[%s258 + $0xa] sm:$0xff] %vm243, %v2024
      %2057 = vst.msk [vmem:[%s258 + $0x1a] sm:$0xff] %vm243, %v2025
      %2058 = vst.msk [vmem:[%s258 + $0x22] sm:$0xff] %vm243, %v2026
      %2059 = vst.msk [vmem:[%s258 + $0x32] sm:$0xff] %vm243, %v2027
      %2060 = vst.msk [vmem:[%s258 + $0x3a] sm:$0xff] %vm243, %v2028
      %2061 = vst.msk [vmem:[%s258 + $0x4a] sm:$0xff] %vm243, %v2029
      %2062 = vst.msk [vmem:[%s258 + $0x52] sm:$0xff] %vm243, %v2030
      %2063 = vst.msk [vmem:[%s258 + $0x62] sm:$0xff] %vm243, %v2031
      %2064 = vst.msk [vmem:[%s258 + $0x6a] sm:$0xff] %vm243, %v2032
      %2065 = vst.msk [vmem:[%s258 + $0x7a] sm:$0xff] %vm243, %v2033
      %2066 = vst.msk [vmem:[%s258 + $0x82] sm:$0xff] %vm243, %v2034
      %2067 = vst.msk [vmem:[%s258 + $0x92] sm:$0xff] %vm243, %v2035
      %2068 = vst.msk [vmem:[%s258 + $0x9a] sm:$0xff] %vm243, %v2036
      %2069 = vst.msk [vmem:[%s258 + $0xaa] sm:$0xff] %vm243, %v2037
      %2070 = vst.msk [vmem:[%s258 + $0xb2] sm:$0xff] %vm243, %v2038
      %2071 = vst.msk [vmem:[%s258 + $0xc2] sm:$0xff] %vm243, %v2039
      %2072 = vst.msk [vmem:[%s258 + $0xca] sm:$0xff] %vm243, %v2040
      %2073 = vst.msk [vmem:[%s258 + $0xda] sm:$0xff] %vm243, %v2041
      %2074 = vst.msk [vmem:[%s258 + $0xe2] sm:$0xff] %vm243, %v2042
      %2075 = vst.msk [vmem:[%s258 + $0xf2] sm:$0xff] %vm243, %v2043
      %2076 = vst.msk [vmem:[%s258 + $0xfa] sm:$0xff] %vm243, %v2044
      %2077 = vst.msk [vmem:[%s258 + $0x10a] sm:$0xff] %vm243, %v2045
      %2078 = vst.msk [vmem:[%s258 + $0x112] sm:$0xff] %vm243, %v2046
      %2079 = vst.msk [vmem:[%s258 + $0x122] sm:$0xff] %vm243, %v2047
      %2080 = vst.msk [vmem:[%s258 + $0x12a] sm:$0xff] %vm243, %v2048
      %2081 = vst.msk [vmem:[%s258 + $0x13a] sm:$0xff] %vm243, %v2049
      %2082 = vst.msk [vmem:[%s258 + $0x142] sm:$0xff] %vm243, %v2050
      %2083 = vst.msk [vmem:[%s258 + $0x152] sm:$0xff] %vm243, %v2051
      %2084 = vst.msk [vmem:[%s258 + $0x15a] sm:$0xff] %vm243, %v2052
      %2085 = vst.msk [vmem:[%s258 + $0x16a] sm:$0xff] %vm243, %v2053
      %2086 = vst.msk [vmem:[%s258 + $0x172] sm:$0xff] %vm243, %v2054
      %v2087 = vld [vmem:[#allocation2] sm:$0xff]
      %v2088 = vld [vmem:[#allocation2 + $0x8] sm:$0xff]
      %v2089 = vld [vmem:[#allocation2 + $0x10] sm:$0xf]
      %v2090 = vld [vmem:[#allocation2 + $0x18] sm:$0xff]
      %v2091 = vld [vmem:[#allocation2 + $0x20] sm:$0xff]
      %v2092 = vld [vmem:[#allocation2 + $0x28] sm:$0xf]
      %v2093 = vld [vmem:[#allocation2 + $0x30] sm:$0xff]
      %v2094 = vld [vmem:[#allocation2 + $0x38] sm:$0xff]
      %v2095 = vld [vmem:[#allocation2 + $0x40] sm:$0xf]
      %v2096 = vld [vmem:[#allocation2 + $0x48] sm:$0xff]
      %v2097 = vld [vmem:[#allocation2 + $0x50] sm:$0xff]
      %v2098 = vld [vmem:[#allocation2 + $0x58] sm:$0xf]
      %v2099 = vld [vmem:[#allocation2 + $0x60] sm:$0xff]
      %v2100 = vld [vmem:[#allocation2 + $0x68] sm:$0xff]
      %v2101 = vld [vmem:[#allocation2 + $0x70] sm:$0xf]
      %v2102 = vld [vmem:[#allocation2 + $0x78] sm:$0xff]
      %v2103 = vld [vmem:[#allocation2 + $0x80] sm:$0xff]
      %v2104 = vld [vmem:[#allocation2 + $0x88] sm:$0xf]
      %v2105 = vld [vmem:[#allocation2 + $0x90] sm:$0xff]
      %v2106 = vld [vmem:[#allocation2 + $0x98] sm:$0xff]
      %v2107 = vld [vmem:[#allocation2 + $0xa0] sm:$0xf]
      %v2108 = vld [vmem:[#allocation2 + $0xa8] sm:$0xff]
      %v2109 = vld [vmem:[#allocation2 + $0xb0] sm:$0xff]
      %v2110 = vld [vmem:[#allocation2 + $0xb8] sm:$0xf]
      %v2111 = vld [vmem:[#allocation2 + $0xc0] sm:$0xff]
      %v2112 = vld [vmem:[#allocation2 + $0xc8] sm:$0xff]
      %v2113 = vld [vmem:[#allocation2 + $0xd0] sm:$0xf]
      %v2114 = vld [vmem:[#allocation2 + $0xd8] sm:$0xff]
      %v2115 = vld [vmem:[#allocation2 + $0xe0] sm:$0xff]
      %v2116 = vld [vmem:[#allocation2 + $0xe8] sm:$0xf]
      %v2117 = vld [vmem:[#allocation2 + $0xf0] sm:$0xff]
      %v2118 = vld [vmem:[#allocation2 + $0xf8] sm:$0xff]
      %v2119 = vld [vmem:[#allocation2 + $0x100] sm:$0xf]
      %v2120 = vld [vmem:[#allocation2 + $0x108] sm:$0xff]
      %v2121 = vld [vmem:[#allocation2 + $0x110] sm:$0xff]
      %v2122 = vld [vmem:[#allocation2 + $0x118] sm:$0xf]
      %v2123 = vld [vmem:[#allocation2 + $0x120] sm:$0xff]
      %v2124 = vld [vmem:[#allocation2 + $0x128] sm:$0xff]
      %v2125 = vld [vmem:[#allocation2 + $0x130] sm:$0xf]
      %v2126 = vld [vmem:[#allocation2 + $0x138] sm:$0xff]
      %v2127 = vld [vmem:[#allocation2 + $0x140] sm:$0xff]
      %v2128 = vld [vmem:[#allocation2 + $0x148] sm:$0xf]
      %v2129 = vld [vmem:[#allocation2 + $0x150] sm:$0xff]
      %v2130 = vld [vmem:[#allocation2 + $0x158] sm:$0xff]
      %v2131 = vld [vmem:[#allocation2 + $0x160] sm:$0xf]
      %v2132 = vld [vmem:[#allocation2 + $0x168] sm:$0xff]
      %v2133 = vld [vmem:[#allocation2 + $0x170] sm:$0xff]
      %v2134 = vld [vmem:[#allocation2 + $0x178] sm:$0xf]
      %v2135 = vld [vmem:[%s404] sm:$0xff]
      %v2136 = vld [vmem:[%s404 + $0x8] sm:$0xff]
      %v2137 = vld [vmem:[%s404 + $0x10] sm:$0xf]
      %v2138 = vld [vmem:[%s404 + $0x18] sm:$0xff]
      %v2139 = vld [vmem:[%s404 + $0x20] sm:$0xff]
      %v2140 = vld [vmem:[%s404 + $0x28] sm:$0xf]
      %v2141 = vld [vmem:[%s404 + $0x30] sm:$0xff]
      %v2142 = vld [vmem:[%s404 + $0x38] sm:$0xff]
      %v2143 = vld [vmem:[%s404 + $0x40] sm:$0xf]
      %v2144 = vld [vmem:[%s404 + $0x48] sm:$0xff]
      %v2145 = vld [vmem:[%s404 + $0x50] sm:$0xff]
      %v2146 = vld [vmem:[%s404 + $0x58] sm:$0xf]
      %v2147 = vld [vmem:[%s404 + $0x60] sm:$0xff]
      %v2148 = vld [vmem:[%s404 + $0x68] sm:$0xff]
      %v2149 = vld [vmem:[%s404 + $0x70] sm:$0xf]
      %v2150 = vld [vmem:[%s404 + $0x78] sm:$0xff]
      %v2151 = vld [vmem:[%s404 + $0x80] sm:$0xff]
      %v2152 = vld [vmem:[%s404 + $0x88] sm:$0xf]
      %v2153 = vld [vmem:[%s404 + $0x90] sm:$0xff]
      %v2154 = vld [vmem:[%s404 + $0x98] sm:$0xff]
      %v2155 = vld [vmem:[%s404 + $0xa0] sm:$0xf]
      %v2156 = vld [vmem:[%s404 + $0xa8] sm:$0xff]
      %v2157 = vld [vmem:[%s404 + $0xb0] sm:$0xff]
      %v2158 = vld [vmem:[%s404 + $0xb8] sm:$0xf]
      %v2159 = vld [vmem:[%s404 + $0xc0] sm:$0xff]
      %v2160 = vld [vmem:[%s404 + $0xc8] sm:$0xff]
      %v2161 = vld [vmem:[%s404 + $0xd0] sm:$0xf]
      %v2162 = vld [vmem:[%s404 + $0xd8] sm:$0xff]
      %v2163 = vld [vmem:[%s404 + $0xe0] sm:$0xff]
      %v2164 = vld [vmem:[%s404 + $0xe8] sm:$0xf]
      %v2165 = vld [vmem:[%s404 + $0xf0] sm:$0xff]
      %v2166 = vld [vmem:[%s404 + $0xf8] sm:$0xff]
      %v2167 = vld [vmem:[%s404 + $0x100] sm:$0xf]
      %v2168 = vld [vmem:[%s404 + $0x108] sm:$0xff]
      %v2169 = vld [vmem:[%s404 + $0x110] sm:$0xff]
      %v2170 = vld [vmem:[%s404 + $0x118] sm:$0xf]
      %v2171 = vld [vmem:[%s404 + $0x120] sm:$0xff]
      %v2172 = vld [vmem:[%s404 + $0x128] sm:$0xff]
      %v2173 = vld [vmem:[%s404 + $0x130] sm:$0xf]
      %v2174 = vld [vmem:[%s404 + $0x138] sm:$0xff]
      %v2175 = vld [vmem:[%s404 + $0x140] sm:$0xff]
      %v2176 = vld [vmem:[%s404 + $0x148] sm:$0xf]
      %v2177 = vld [vmem:[%s404 + $0x150] sm:$0xff]
      %v2178 = vld [vmem:[%s404 + $0x158] sm:$0xff]
      %v2179 = vld [vmem:[%s404 + $0x160] sm:$0xf]
      %v2180 = vld [vmem:[%s404 + $0x168] sm:$0xff]
      %v2181 = vld [vmem:[%s404 + $0x170] sm:$0xff]
      %v2182 = vld [vmem:[%s404 + $0x178] sm:$0xf]
      %v2183 = vmax.f32 %v2087, %v2135
      %v2184 = vmax.f32 %v2088, %v2136
      %v2185 = vmax.f32 %v2089, %v2137
      %v2186 = vmax.f32 %v2090, %v2138
      %v2187 = vmax.f32 %v2091, %v2139
      %v2188 = vmax.f32 %v2092, %v2140
      %v2189 = vmax.f32 %v2093, %v2141
      %v2190 = vmax.f32 %v2094, %v2142
      %v2191 = vmax.f32 %v2095, %v2143
      %v2192 = vmax.f32 %v2096, %v2144
      %v2193 = vmax.f32 %v2097, %v2145
      %v2194 = vmax.f32 %v2098, %v2146
      %v2195 = vmax.f32 %v2099, %v2147
      %v2196 = vmax.f32 %v2100, %v2148
      %v2197 = vmax.f32 %v2101, %v2149
      %v2198 = vmax.f32 %v2102, %v2150
      %v2199 = vmax.f32 %v2103, %v2151
      %v2200 = vmax.f32 %v2104, %v2152
      %v2201 = vmax.f32 %v2105, %v2153
      %v2202 = vmax.f32 %v2106, %v2154
      %v2203 = vmax.f32 %v2107, %v2155
      %v2204 = vmax.f32 %v2108, %v2156
      %v2205 = vmax.f32 %v2109, %v2157
      %v2206 = vmax.f32 %v2110, %v2158
      %v2207 = vmax.f32 %v2111, %v2159
      %v2208 = vmax.f32 %v2112, %v2160
      %v2209 = vmax.f32 %v2113, %v2161
      %v2210 = vmax.f32 %v2114, %v2162
      %v2211 = vmax.f32 %v2115, %v2163
      %v2212 = vmax.f32 %v2116, %v2164
      %v2213 = vmax.f32 %v2117, %v2165
      %v2214 = vmax.f32 %v2118, %v2166
      %v2215 = vmax.f32 %v2119, %v2167
      %v2216 = vmax.f32 %v2120, %v2168
      %v2217 = vmax.f32 %v2121, %v2169
      %v2218 = vmax.f32 %v2122, %v2170
      %v2219 = vmax.f32 %v2123, %v2171
      %v2220 = vmax.f32 %v2124, %v2172
      %v2221 = vmax.f32 %v2125, %v2173
      %v2222 = vmax.f32 %v2126, %v2174
      %v2223 = vmax.f32 %v2127, %v2175
      %v2224 = vmax.f32 %v2128, %v2176
      %v2225 = vmax.f32 %v2129, %v2177
      %v2226 = vmax.f32 %v2130, %v2178
      %v2227 = vmax.f32 %v2131, %v2179
      %v2228 = vmax.f32 %v2132, %v2180
      %v2229 = vmax.f32 %v2133, %v2181
      %v2230 = vmax.f32 %v2134, %v2182
      %v2231 = vld [vmem:[%s258] sm:$0xff]
      %v2232 = vld [vmem:[%s258 + $0x8] sm:$0xff]
      %v2233 = vld [vmem:[%s258 + $0x10] sm:$0xf]
      %v2234 = vld [vmem:[%s258 + $0x18] sm:$0xff]
      %v2235 = vld [vmem:[%s258 + $0x20] sm:$0xff]
      %v2236 = vld [vmem:[%s258 + $0x28] sm:$0xf]
      %v2237 = vld [vmem:[%s258 + $0x30] sm:$0xff]
      %v2238 = vld [vmem:[%s258 + $0x38] sm:$0xff]
      %v2239 = vld [vmem:[%s258 + $0x40] sm:$0xf]
      %v2240 = vld [vmem:[%s258 + $0x48] sm:$0xff]
      %v2241 = vld [vmem:[%s258 + $0x50] sm:$0xff]
      %v2242 = vld [vmem:[%s258 + $0x58] sm:$0xf]
      %v2243 = vld [vmem:[%s258 + $0x60] sm:$0xff]
      %v2244 = vld [vmem:[%s258 + $0x68] sm:$0xff]
      %v2245 = vld [vmem:[%s258 + $0x70] sm:$0xf]
      %v2246 = vld [vmem:[%s258 + $0x78] sm:$0xff]
      %v2247 = vld [vmem:[%s258 + $0x80] sm:$0xff]
      %v2248 = vld [vmem:[%s258 + $0x88] sm:$0xf]
      %v2249 = vld [vmem:[%s258 + $0x90] sm:$0xff]
      %v2250 = vld [vmem:[%s258 + $0x98] sm:$0xff]
      %v2251 = vld [vmem:[%s258 + $0xa0] sm:$0xf]
      %v2252 = vld [vmem:[%s258 + $0xa8] sm:$0xff]
      %v2253 = vld [vmem:[%s258 + $0xb0] sm:$0xff]
      %v2254 = vld [vmem:[%s258 + $0xb8] sm:$0xf]
      %v2255 = vld [vmem:[%s258 + $0xc0] sm:$0xff]
      %v2256 = vld [vmem:[%s258 + $0xc8] sm:$0xff]
      %v2257 = vld [vmem:[%s258 + $0xd0] sm:$0xf]
      %v2258 = vld [vmem:[%s258 + $0xd8] sm:$0xff]
      %v2259 = vld [vmem:[%s258 + $0xe0] sm:$0xff]
      %v2260 = vld [vmem:[%s258 + $0xe8] sm:$0xf]
      %v2261 = vld [vmem:[%s258 + $0xf0] sm:$0xff]
      %v2262 = vld [vmem:[%s258 + $0xf8] sm:$0xff]
      %v2263 = vld [vmem:[%s258 + $0x100] sm:$0xf]
      %v2264 = vld [vmem:[%s258 + $0x108] sm:$0xff]
      %v2265 = vld [vmem:[%s258 + $0x110] sm:$0xff]
      %v2266 = vld [vmem:[%s258 + $0x118] sm:$0xf]
      %v2267 = vld [vmem:[%s258 + $0x120] sm:$0xff]
      %v2268 = vld [vmem:[%s258 + $0x128] sm:$0xff]
      %v2269 = vld [vmem:[%s258 + $0x130] sm:$0xf]
      %v2270 = vld [vmem:[%s258 + $0x138] sm:$0xff]
      %v2271 = vld [vmem:[%s258 + $0x140] sm:$0xff]
      %v2272 = vld [vmem:[%s258 + $0x148] sm:$0xf]
      %v2273 = vld [vmem:[%s258 + $0x150] sm:$0xff]
      %v2274 = vld [vmem:[%s258 + $0x158] sm:$0xff]
      %v2275 = vld [vmem:[%s258 + $0x160] sm:$0xf]
      %v2276 = vld [vmem:[%s258 + $0x168] sm:$0xff]
      %v2277 = vld [vmem:[%s258 + $0x170] sm:$0xff]
      %v2278 = vld [vmem:[%s258 + $0x178] sm:$0xf]
      %v2279 = vmax.f32 %v2183, %v2231
      %v2280 = vmax.f32 %v2184, %v2232
      %v2281 = vmax.f32 %v2185, %v2233
      %v2282 = vmax.f32 %v2186, %v2234
      %v2283 = vmax.f32 %v2187, %v2235
      %v2284 = vmax.f32 %v2188, %v2236
      %v2285 = vmax.f32 %v2189, %v2237
      %v2286 = vmax.f32 %v2190, %v2238
      %v2287 = vmax.f32 %v2191, %v2239
      %v2288 = vmax.f32 %v2192, %v2240
      %v2289 = vmax.f32 %v2193, %v2241
      %v2290 = vmax.f32 %v2194, %v2242
      %v2291 = vmax.f32 %v2195, %v2243
      %v2292 = vmax.f32 %v2196, %v2244
      %v2293 = vmax.f32 %v2197, %v2245
      %v2294 = vmax.f32 %v2198, %v2246
      %v2295 = vmax.f32 %v2199, %v2247
      %v2296 = vmax.f32 %v2200, %v2248
      %v2297 = vmax.f32 %v2201, %v2249
      %v2298 = vmax.f32 %v2202, %v2250
      %v2299 = vmax.f32 %v2203, %v2251
      %v2300 = vmax.f32 %v2204, %v2252
      %v2301 = vmax.f32 %v2205, %v2253
      %v2302 = vmax.f32 %v2206, %v2254
      %v2303 = vmax.f32 %v2207, %v2255
      %v2304 = vmax.f32 %v2208, %v2256
      %v2305 = vmax.f32 %v2209, %v2257
      %v2306 = vmax.f32 %v2210, %v2258
      %v2307 = vmax.f32 %v2211, %v2259
      %v2308 = vmax.f32 %v2212, %v2260
      %v2309 = vmax.f32 %v2213, %v2261
      %v2310 = vmax.f32 %v2214, %v2262
      %v2311 = vmax.f32 %v2215, %v2263
      %v2312 = vmax.f32 %v2216, %v2264
      %v2313 = vmax.f32 %v2217, %v2265
      %v2314 = vmax.f32 %v2218, %v2266
      %v2315 = vmax.f32 %v2219, %v2267
      %v2316 = vmax.f32 %v2220, %v2268
      %v2317 = vmax.f32 %v2221, %v2269
      %v2318 = vmax.f32 %v2222, %v2270
      %v2319 = vmax.f32 %v2223, %v2271
      %v2320 = vmax.f32 %v2224, %v2272
      %v2321 = vmax.f32 %v2225, %v2273
      %v2322 = vmax.f32 %v2226, %v2274
      %v2323 = vmax.f32 %v2227, %v2275
      %v2324 = vmax.f32 %v2228, %v2276
      %v2325 = vmax.f32 %v2229, %v2277
      %v2326 = vmax.f32 %v2230, %v2278
      %v2327 = vld [vmem:[%s597] sm:$0xff]
      %v2328 = vld [vmem:[%s597 + $0x8] sm:$0xff]
      %v2329 = vld [vmem:[%s597 + $0x10] sm:$0xf]
      %v2330 = vld [vmem:[%s597 + $0x18] sm:$0xff]
      %v2331 = vld [vmem:[%s597 + $0x20] sm:$0xff]
      %v2332 = vld [vmem:[%s597 + $0x28] sm:$0xf]
      %v2333 = vld [vmem:[%s597 + $0x30] sm:$0xff]
      %v2334 = vld [vmem:[%s597 + $0x38] sm:$0xff]
      %v2335 = vld [vmem:[%s597 + $0x40] sm:$0xf]
      %v2336 = vld [vmem:[%s597 + $0x48] sm:$0xff]
      %v2337 = vld [vmem:[%s597 + $0x50] sm:$0xff]
      %v2338 = vld [vmem:[%s597 + $0x58] sm:$0xf]
      %v2339 = vld [vmem:[%s597 + $0x60] sm:$0xff]
      %v2340 = vld [vmem:[%s597 + $0x68] sm:$0xff]
      %v2341 = vld [vmem:[%s597 + $0x70] sm:$0xf]
      %v2342 = vld [vmem:[%s597 + $0x78] sm:$0xff]
      %v2343 = vld [vmem:[%s597 + $0x80] sm:$0xff]
      %v2344 = vld [vmem:[%s597 + $0x88] sm:$0xf]
      %v2345 = vld [vmem:[%s597 + $0x90] sm:$0xff]
      %v2346 = vld [vmem:[%s597 + $0x98] sm:$0xff]
      %v2347 = vld [vmem:[%s597 + $0xa0] sm:$0xf]
      %v2348 = vld [vmem:[%s597 + $0xa8] sm:$0xff]
      %v2349 = vld [vmem:[%s597 + $0xb0] sm:$0xff]
      %v2350 = vld [vmem:[%s597 + $0xb8] sm:$0xf]
      %v2351 = vld [vmem:[%s597 + $0xc0] sm:$0xff]
      %v2352 = vld [vmem:[%s597 + $0xc8] sm:$0xff]
      %v2353 = vld [vmem:[%s597 + $0xd0] sm:$0xf]
      %v2354 = vld [vmem:[%s597 + $0xd8] sm:$0xff]
      %v2355 = vld [vmem:[%s597 + $0xe0] sm:$0xff]
      %v2356 = vld [vmem:[%s597 + $0xe8] sm:$0xf]
      %v2357 = vld [vmem:[%s597 + $0xf0] sm:$0xff]
      %v2358 = vld [vmem:[%s597 + $0xf8] sm:$0xff]
      %v2359 = vld [vmem:[%s597 + $0x100] sm:$0xf]
      %v2360 = vld [vmem:[%s597 + $0x108] sm:$0xff]
      %v2361 = vld [vmem:[%s597 + $0x110] sm:$0xff]
      %v2362 = vld [vmem:[%s597 + $0x118] sm:$0xf]
      %v2363 = vld [vmem:[%s597 + $0x120] sm:$0xff]
      %v2364 = vld [vmem:[%s597 + $0x128] sm:$0xff]
      %v2365 = vld [vmem:[%s597 + $0x130] sm:$0xf]
      %v2366 = vld [vmem:[%s597 + $0x138] sm:$0xff]
      %v2367 = vld [vmem:[%s597 + $0x140] sm:$0xff]
      %v2368 = vld [vmem:[%s597 + $0x148] sm:$0xf]
      %v2369 = vld [vmem:[%s597 + $0x150] sm:$0xff]
      %v2370 = vld [vmem:[%s597 + $0x158] sm:$0xff]
      %v2371 = vld [vmem:[%s597 + $0x160] sm:$0xf]
      %v2372 = vld [vmem:[%s597 + $0x168] sm:$0xff]
      %v2373 = vld [vmem:[%s597 + $0x170] sm:$0xff]
      %v2374 = vld [vmem:[%s597 + $0x178] sm:$0xf]
      %v2375 = vmax.f32 %v2279, %v2327
      %v2376 = vmax.f32 %v2280, %v2328
      %v2377 = vmax.f32 %v2281, %v2329
      %v2378 = vmax.f32 %v2282, %v2330
      %v2379 = vmax.f32 %v2283, %v2331
      %v2380 = vmax.f32 %v2284, %v2332
      %v2381 = vmax.f32 %v2285, %v2333
      %v2382 = vmax.f32 %v2286, %v2334
      %v2383 = vmax.f32 %v2287, %v2335
      %v2384 = vmax.f32 %v2288, %v2336
      %v2385 = vmax.f32 %v2289, %v2337
      %v2386 = vmax.f32 %v2290, %v2338
      %v2387 = vmax.f32 %v2291, %v2339
      %v2388 = vmax.f32 %v2292, %v2340
      %v2389 = vmax.f32 %v2293, %v2341
      %v2390 = vmax.f32 %v2294, %v2342
      %v2391 = vmax.f32 %v2295, %v2343
      %v2392 = vmax.f32 %v2296, %v2344
      %v2393 = vmax.f32 %v2297, %v2345
      %v2394 = vmax.f32 %v2298, %v2346
      %v2395 = vmax.f32 %v2299, %v2347
      %v2396 = vmax.f32 %v2300, %v2348
      %v2397 = vmax.f32 %v2301, %v2349
      %v2398 = vmax.f32 %v2302, %v2350
      %v2399 = vmax.f32 %v2303, %v2351
      %v2400 = vmax.f32 %v2304, %v2352
      %v2401 = vmax.f32 %v2305, %v2353
      %v2402 = vmax.f32 %v2306, %v2354
      %v2403 = vmax.f32 %v2307, %v2355
      %v2404 = vmax.f32 %v2308, %v2356
      %v2405 = vmax.f32 %v2309, %v2357
      %v2406 = vmax.f32 %v2310, %v2358
      %v2407 = vmax.f32 %v2311, %v2359
      %v2408 = vmax.f32 %v2312, %v2360
      %v2409 = vmax.f32 %v2313, %v2361
      %v2410 = vmax.f32 %v2314, %v2362
      %v2411 = vmax.f32 %v2315, %v2363
      %v2412 = vmax.f32 %v2316, %v2364
      %v2413 = vmax.f32 %v2317, %v2365
      %v2414 = vmax.f32 %v2318, %v2366
      %v2415 = vmax.f32 %v2319, %v2367
      %v2416 = vmax.f32 %v2320, %v2368
      %v2417 = vmax.f32 %v2321, %v2369
      %v2418 = vmax.f32 %v2322, %v2370
      %v2419 = vmax.f32 %v2323, %v2371
      %v2420 = vmax.f32 %v2324, %v2372
      %v2421 = vmax.f32 %v2325, %v2373
      %v2422 = vmax.f32 %v2326, %v2374
      %v2423 = vld [vmem:[%s694] sm:$0xff]
      %v2424 = vld [vmem:[%s694 + $0x8] sm:$0xff]
      %v2425 = vld [vmem:[%s694 + $0x10] sm:$0xf]
      %v2426 = vld [vmem:[%s694 + $0x18] sm:$0xff]
      %v2427 = vld [vmem:[%s694 + $0x20] sm:$0xff]
      %v2428 = vld [vmem:[%s694 + $0x28] sm:$0xf]
      %v2429 = vld [vmem:[%s694 + $0x30] sm:$0xff]
      %v2430 = vld [vmem:[%s694 + $0x38] sm:$0xff]
      %v2431 = vld [vmem:[%s694 + $0x40] sm:$0xf]
      %v2432 = vld [vmem:[%s694 + $0x48] sm:$0xff]
      %v2433 = vld [vmem:[%s694 + $0x50] sm:$0xff]
      %v2434 = vld [vmem:[%s694 + $0x58] sm:$0xf]
      %v2435 = vld [vmem:[%s694 + $0x60] sm:$0xff]
      %v2436 = vld [vmem:[%s694 + $0x68] sm:$0xff]
      %v2437 = vld [vmem:[%s694 + $0x70] sm:$0xf]
      %v2438 = vld [vmem:[%s694 + $0x78] sm:$0xff]
      %v2439 = vld [vmem:[%s694 + $0x80] sm:$0xff]
      %v2440 = vld [vmem:[%s694 + $0x88] sm:$0xf]
      %v2441 = vld [vmem:[%s694 + $0x90] sm:$0xff]
      %v2442 = vld [vmem:[%s694 + $0x98] sm:$0xff]
      %v2443 = vld [vmem:[%s694 + $0xa0] sm:$0xf]
      %v2444 = vld [vmem:[%s694 + $0xa8] sm:$0xff]
      %v2445 = vld [vmem:[%s694 + $0xb0] sm:$0xff]
      %v2446 = vld [vmem:[%s694 + $0xb8] sm:$0xf]
      %v2447 = vld [vmem:[%s694 + $0xc0] sm:$0xff]
      %v2448 = vld [vmem:[%s694 + $0xc8] sm:$0xff]
      %v2449 = vld [vmem:[%s694 + $0xd0] sm:$0xf]
      %v2450 = vld [vmem:[%s694 + $0xd8] sm:$0xff]
      %v2451 = vld [vmem:[%s694 + $0xe0] sm:$0xff]
      %v2452 = vld [vmem:[%s694 + $0xe8] sm:$0xf]
      %v2453 = vld [vmem:[%s694 + $0xf0] sm:$0xff]
      %v2454 = vld [vmem:[%s694 + $0xf8] sm:$0xff]
      %v2455 = vld [vmem:[%s694 + $0x100] sm:$0xf]
      %v2456 = vld [vmem:[%s694 + $0x108] sm:$0xff]
      %v2457 = vld [vmem:[%s694 + $0x110] sm:$0xff]
      %v2458 = vld [vmem:[%s694 + $0x118] sm:$0xf]
      %v2459 = vld [vmem:[%s694 + $0x120] sm:$0xff]
      %v2460 = vld [vmem:[%s694 + $0x128] sm:$0xff]
      %v2461 = vld [vmem:[%s694 + $0x130] sm:$0xf]
      %v2462 = vld [vmem:[%s694 + $0x138] sm:$0xff]
      %v2463 = vld [vmem:[%s694 + $0x140] sm:$0xff]
      %v2464 = vld [vmem:[%s694 + $0x148] sm:$0xf]
      %v2465 = vld [vmem:[%s694 + $0x150] sm:$0xff]
      %v2466 = vld [vmem:[%s694 + $0x158] sm:$0xff]
      %v2467 = vld [vmem:[%s694 + $0x160] sm:$0xf]
      %v2468 = vld [vmem:[%s694 + $0x168] sm:$0xff]
      %v2469 = vld [vmem:[%s694 + $0x170] sm:$0xff]
      %v2470 = vld [vmem:[%s694 + $0x178] sm:$0xf]
      %v2471 = vmax.f32 %v2375, %v2423
      %v2472 = vmax.f32 %v2376, %v2424
      %v2473 = vmax.f32 %v2377, %v2425
      %v2474 = vmax.f32 %v2378, %v2426
      %v2475 = vmax.f32 %v2379, %v2427
      %v2476 = vmax.f32 %v2380, %v2428
      %v2477 = vmax.f32 %v2381, %v2429
      %v2478 = vmax.f32 %v2382, %v2430
      %v2479 = vmax.f32 %v2383, %v2431
      %v2480 = vmax.f32 %v2384, %v2432
      %v2481 = vmax.f32 %v2385, %v2433
      %v2482 = vmax.f32 %v2386, %v2434
      %v2483 = vmax.f32 %v2387, %v2435
      %v2484 = vmax.f32 %v2388, %v2436
      %v2485 = vmax.f32 %v2389, %v2437
      %v2486 = vmax.f32 %v2390, %v2438
      %v2487 = vmax.f32 %v2391, %v2439
      %v2488 = vmax.f32 %v2392, %v2440
      %v2489 = vmax.f32 %v2393, %v2441
      %v2490 = vmax.f32 %v2394, %v2442
      %v2491 = vmax.f32 %v2395, %v2443
      %v2492 = vmax.f32 %v2396, %v2444
      %v2493 = vmax.f32 %v2397, %v2445
      %v2494 = vmax.f32 %v2398, %v2446
      %v2495 = vmax.f32 %v2399, %v2447
      %v2496 = vmax.f32 %v2400, %v2448
      %v2497 = vmax.f32 %v2401, %v2449
      %v2498 = vmax.f32 %v2402, %v2450
      %v2499 = vmax.f32 %v2403, %v2451
      %v2500 = vmax.f32 %v2404, %v2452
      %v2501 = vmax.f32 %v2405, %v2453
      %v2502 = vmax.f32 %v2406, %v2454
      %v2503 = vmax.f32 %v2407, %v2455
      %v2504 = vmax.f32 %v2408, %v2456
      %v2505 = vmax.f32 %v2409, %v2457
      %v2506 = vmax.f32 %v2410, %v2458
      %v2507 = vmax.f32 %v2411, %v2459
      %v2508 = vmax.f32 %v2412, %v2460
      %v2509 = vmax.f32 %v2413, %v2461
      %v2510 = vmax.f32 %v2414, %v2462
      %v2511 = vmax.f32 %v2415, %v2463
      %v2512 = vmax.f32 %v2416, %v2464
      %v2513 = vmax.f32 %v2417, %v2465
      %v2514 = vmax.f32 %v2418, %v2466
      %v2515 = vmax.f32 %v2419, %v2467
      %v2516 = vmax.f32 %v2420, %v2468
      %v2517 = vmax.f32 %v2421, %v2469
      %v2518 = vmax.f32 %v2422, %v2470
      %2519 = vst.msk [vmem:[%s258] sm:$0xff] %vm243, %v2471
      %2520 = vst.msk [vmem:[%s258 + $0x8] sm:$0xff] %vm243, %v2472
      %2521 = vst.msk [vmem:[%s258 + $0x10] sm:$0xf] %vm246, %v2473
      %2522 = vst.msk [vmem:[%s258 + $0x18] sm:$0xff] %vm243, %v2474
      %2523 = vst.msk [vmem:[%s258 + $0x20] sm:$0xff] %vm243, %v2475
      %2524 = vst.msk [vmem:[%s258 + $0x28] sm:$0xf] %vm246, %v2476
      %2525 = vst.msk [vmem:[%s258 + $0x30] sm:$0xff] %vm243, %v2477
      %2526 = vst.msk [vmem:[%s258 + $0x38] sm:$0xff] %vm243, %v2478
      %2527 = vst.msk [vmem:[%s258 + $0x40] sm:$0xf] %vm246, %v2479
      %2528 = vst.msk [vmem:[%s258 + $0x48] sm:$0xff] %vm243, %v2480
      %2529 = vst.msk [vmem:[%s258 + $0x50] sm:$0xff] %vm243, %v2481
      %2530 = vst.msk [vmem:[%s258 + $0x58] sm:$0xf] %vm246, %v2482
      %2531 = vst.msk [vmem:[%s258 + $0x60] sm:$0xff] %vm243, %v2483
      %2532 = vst.msk [vmem:[%s258 + $0x68] sm:$0xff] %vm243, %v2484
      %2533 = vst.msk [vmem:[%s258 + $0x70] sm:$0xf] %vm246, %v2485
      %2534 = vst.msk [vmem:[%s258 + $0x78] sm:$0xff] %vm243, %v2486
      %2535 = vst.msk [vmem:[%s258 + $0x80] sm:$0xff] %vm243, %v2487
      %2536 = vst.msk [vmem:[%s258 + $0x88] sm:$0xf] %vm246, %v2488
      %2537 = vst.msk [vmem:[%s258 + $0x90] sm:$0xff] %vm243, %v2489
      %2538 = vst.msk [vmem:[%s258 + $0x98] sm:$0xff] %vm243, %v2490
      %2539 = vst.msk [vmem:[%s258 + $0xa0] sm:$0xf] %vm246, %v2491
      %2540 = vst.msk [vmem:[%s258 + $0xa8] sm:$0xff] %vm243, %v2492
      %2541 = vst.msk [vmem:[%s258 + $0xb0] sm:$0xff] %vm243, %v2493
      %2542 = vst.msk [vmem:[%s258 + $0xb8] sm:$0xf] %vm246, %v2494
      %2543 = vst.msk [vmem:[%s258 + $0xc0] sm:$0xff] %vm243, %v2495
      %2544 = vst.msk [vmem:[%s258 + $0xc8] sm:$0xff] %vm243, %v2496
      %2545 = vst.msk [vmem:[%s258 + $0xd0] sm:$0xf] %vm246, %v2497
      %2546 = vst.msk [vmem:[%s258 + $0xd8] sm:$0xff] %vm243, %v2498
      %2547 = vst.msk [vmem:[%s258 + $0xe0] sm:$0xff] %vm243, %v2499
      %2548 = vst.msk [vmem:[%s258 + $0xe8] sm:$0xf] %vm246, %v2500
      %2549 = vst.msk [vmem:[%s258 + $0xf0] sm:$0xff] %vm243, %v2501
      %2550 = vst.msk [vmem:[%s258 + $0xf8] sm:$0xff] %vm243, %v2502
      %2551 = vst.msk [vmem:[%s258 + $0x100] sm:$0xf] %vm246, %v2503
      %2552 = vst.msk [vmem:[%s258 + $0x108] sm:$0xff] %vm243, %v2504
      %2553 = vst.msk [vmem:[%s258 + $0x110] sm:$0xff] %vm243, %v2505
      %2554 = vst.msk [vmem:[%s258 + $0x118] sm:$0xf] %vm246, %v2506
      %2555 = vst.msk [vmem:[%s258 + $0x120] sm:$0xff] %vm243, %v2507
      %2556 = vst.msk [vmem:[%s258 + $0x128] sm:$0xff] %vm243, %v2508
      %2557 = vst.msk [vmem:[%s258 + $0x130] sm:$0xf] %vm246, %v2509
      %2558 = vst.msk [vmem:[%s258 + $0x138] sm:$0xff] %vm243, %v2510
      %2559 = vst.msk [vmem:[%s258 + $0x140] sm:$0xff] %vm243, %v2511
      %2560 = vst.msk [vmem:[%s258 + $0x148] sm:$0xf] %vm246, %v2512
      %2561 = vst.msk [vmem:[%s258 + $0x150] sm:$0xff] %vm243, %v2513
      %2562 = vst.msk [vmem:[%s258 + $0x158] sm:$0xff] %vm243, %v2514
      %2563 = vst.msk [vmem:[%s258 + $0x160] sm:$0xf] %vm246, %v2515
      %2564 = vst.msk [vmem:[%s258 + $0x168] sm:$0xff] %vm243, %v2516
      %2565 = vst.msk [vmem:[%s258 + $0x170] sm:$0xff] %vm243, %v2517
      %2566 = vst.msk [vmem:[%s258 + $0x178] sm:$0xf] %vm246, %v2518
      %v2567 = vld [vmem:[%s258] sm:$0xff]
      %v2568 = vld [vmem:[%s258 + $0x8] sm:$0xff]
      %v2569 = vld [vmem:[%s258 + $0x18] sm:$0xff]
      %v2570 = vld [vmem:[%s258 + $0x20] sm:$0xff]
      %v2571 = vld [vmem:[%s258 + $0x30] sm:$0xff]
      %v2572 = vld [vmem:[%s258 + $0x38] sm:$0xff]
      %v2573 = vld [vmem:[%s258 + $0x48] sm:$0xff]
      %v2574 = vld [vmem:[%s258 + $0x50] sm:$0xff]
      %v2575 = vld [vmem:[%s258 + $0x60] sm:$0xff]
      %v2576 = vld [vmem:[%s258 + $0x68] sm:$0xff]
      %v2577 = vld [vmem:[%s258 + $0x78] sm:$0xff]
      %v2578 = vld [vmem:[%s258 + $0x80] sm:$0xff]
      %v2579 = vld [vmem:[%s258 + $0x90] sm:$0xff]
      %v2580 = vld [vmem:[%s258 + $0x98] sm:$0xff]
      %v2581 = vld [vmem:[%s258 + $0xa8] sm:$0xff]
      %v2582 = vld [vmem:[%s258 + $0xb0] sm:$0xff]
      %v2583 = vld [vmem:[%s258 + $0xc0] sm:$0xff]
      %v2584 = vld [vmem:[%s258 + $0xc8] sm:$0xff]
      %v2585 = vld [vmem:[%s258 + $0xd8] sm:$0xff]
      %v2586 = vld [vmem:[%s258 + $0xe0] sm:$0xff]
      %v2587 = vld [vmem:[%s258 + $0xf0] sm:$0xff]
      %v2588 = vld [vmem:[%s258 + $0xf8] sm:$0xff]
      %v2589 = vld [vmem:[%s258 + $0x108] sm:$0xff]
      %v2590 = vld [vmem:[%s258 + $0x110] sm:$0xff]
      %v2591 = vld [vmem:[%s258 + $0x120] sm:$0xff]
      %v2592 = vld [vmem:[%s258 + $0x128] sm:$0xff]
      %v2593 = vld [vmem:[%s258 + $0x138] sm:$0xff]
      %v2594 = vld [vmem:[%s258 + $0x140] sm:$0xff]
      %v2595 = vld [vmem:[%s258 + $0x150] sm:$0xff]
      %v2596 = vld [vmem:[%s258 + $0x158] sm:$0xff]
      %v2597 = vld [vmem:[%s258 + $0x168] sm:$0xff]
      %v2598 = vld [vmem:[%s258 + $0x170] sm:$0xff]
      %v2599 = vld [vmem:[%s258 + $0x1] sm:$0xff]
      %v2600 = vld [vmem:[%s258 + $0x9] sm:$0xff]
      %v2601 = vld [vmem:[%s258 + $0x19] sm:$0xff]
      %v2602 = vld [vmem:[%s258 + $0x21] sm:$0xff]
      %v2603 = vld [vmem:[%s258 + $0x31] sm:$0xff]
      %v2604 = vld [vmem:[%s258 + $0x39] sm:$0xff]
      %v2605 = vld [vmem:[%s258 + $0x49] sm:$0xff]
      %v2606 = vld [vmem:[%s258 + $0x51] sm:$0xff]
      %v2607 = vld [vmem:[%s258 + $0x61] sm:$0xff]
      %v2608 = vld [vmem:[%s258 + $0x69] sm:$0xff]
      %v2609 = vld [vmem:[%s258 + $0x79] sm:$0xff]
      %v2610 = vld [vmem:[%s258 + $0x81] sm:$0xff]
      %v2611 = vld [vmem:[%s258 + $0x91] sm:$0xff]
      %v2612 = vld [vmem:[%s258 + $0x99] sm:$0xff]
      %v2613 = vld [vmem:[%s258 + $0xa9] sm:$0xff]
      %v2614 = vld [vmem:[%s258 + $0xb1] sm:$0xff]
      %v2615 = vld [vmem:[%s258 + $0xc1] sm:$0xff]
      %v2616 = vld [vmem:[%s258 + $0xc9] sm:$0xff]
      %v2617 = vld [vmem:[%s258 + $0xd9] sm:$0xff]
      %v2618 = vld [vmem:[%s258 + $0xe1] sm:$0xff]
      %v2619 = vld [vmem:[%s258 + $0xf1] sm:$0xff]
      %v2620 = vld [vmem:[%s258 + $0xf9] sm:$0xff]
      %v2621 = vld [vmem:[%s258 + $0x109] sm:$0xff]
      %v2622 = vld [vmem:[%s258 + $0x111] sm:$0xff]
      %v2623 = vld [vmem:[%s258 + $0x121] sm:$0xff]
      %v2624 = vld [vmem:[%s258 + $0x129] sm:$0xff]
      %v2625 = vld [vmem:[%s258 + $0x139] sm:$0xff]
      %v2626 = vld [vmem:[%s258 + $0x141] sm:$0xff]
      %v2627 = vld [vmem:[%s258 + $0x151] sm:$0xff]
      %v2628 = vld [vmem:[%s258 + $0x159] sm:$0xff]
      %v2629 = vld [vmem:[%s258 + $0x169] sm:$0xff]
      %v2630 = vld [vmem:[%s258 + $0x171] sm:$0xff]
      %v2631 = vmax.f32 %v2567, %v2599
      %v2632 = vmax.f32 %v2568, %v2600
      %v2633 = vmax.f32 %v2569, %v2601
      %v2634 = vmax.f32 %v2570, %v2602
      %v2635 = vmax.f32 %v2571, %v2603
      %v2636 = vmax.f32 %v2572, %v2604
      %v2637 = vmax.f32 %v2573, %v2605
      %v2638 = vmax.f32 %v2574, %v2606
      %v2639 = vmax.f32 %v2575, %v2607
      %v2640 = vmax.f32 %v2576, %v2608
      %v2641 = vmax.f32 %v2577, %v2609
      %v2642 = vmax.f32 %v2578, %v2610
      %v2643 = vmax.f32 %v2579, %v2611
      %v2644 = vmax.f32 %v2580, %v2612
      %v2645 = vmax.f32 %v2581, %v2613
      %v2646 = vmax.f32 %v2582, %v2614
      %v2647 = vmax.f32 %v2583, %v2615
      %v2648 = vmax.f32 %v2584, %v2616
      %v2649 = vmax.f32 %v2585, %v2617
      %v2650 = vmax.f32 %v2586, %v2618
      %v2651 = vmax.f32 %v2587, %v2619
      %v2652 = vmax.f32 %v2588, %v2620
      %v2653 = vmax.f32 %v2589, %v2621
      %v2654 = vmax.f32 %v2590, %v2622
      %v2655 = vmax.f32 %v2591, %v2623
      %v2656 = vmax.f32 %v2592, %v2624
      %v2657 = vmax.f32 %v2593, %v2625
      %v2658 = vmax.f32 %v2594, %v2626
      %v2659 = vmax.f32 %v2595, %v2627
      %v2660 = vmax.f32 %v2596, %v2628
      %v2661 = vmax.f32 %v2597, %v2629
      %v2662 = vmax.f32 %v2598, %v2630
      %v2663 = vld [vmem:[%s258 + $0x2] sm:$0xff]
      %v2664 = vld [vmem:[%s258 + $0xa] sm:$0xff]
      %v2665 = vld [vmem:[%s258 + $0x1a] sm:$0xff]
      %v2666 = vld [vmem:[%s258 + $0x22] sm:$0xff]
      %v2667 = vld [vmem:[%s258 + $0x32] sm:$0xff]
      %v2668 = vld [vmem:[%s258 + $0x3a] sm:$0xff]
      %v2669 = vld [vmem:[%s258 + $0x4a] sm:$0xff]
      %v2670 = vld [vmem:[%s258 + $0x52] sm:$0xff]
      %v2671 = vld [vmem:[%s258 + $0x62] sm:$0xff]
      %v2672 = vld [vmem:[%s258 + $0x6a] sm:$0xff]
      %v2673 = vld [vmem:[%s258 + $0x7a] sm:$0xff]
      %v2674 = vld [vmem:[%s258 + $0x82] sm:$0xff]
      %v2675 = vld [vmem:[%s258 + $0x92] sm:$0xff]
      %v2676 = vld [vmem:[%s258 + $0x9a] sm:$0xff]
      %v2677 = vld [vmem:[%s258 + $0xaa] sm:$0xff]
      %v2678 = vld [vmem:[%s258 + $0xb2] sm:$0xff]
      %v2679 = vld [vmem:[%s258 + $0xc2] sm:$0xff]
      %v2680 = vld [vmem:[%s258 + $0xca] sm:$0xff]
      %v2681 = vld [vmem:[%s258 + $0xda] sm:$0xff]
      %v2682 = vld [vmem:[%s258 + $0xe2] sm:$0xff]
      %v2683 = vld [vmem:[%s258 + $0xf2] sm:$0xff]
      %v2684 = vld [vmem:[%s258 + $0xfa] sm:$0xff]
      %v2685 = vld [vmem:[%s258 + $0x10a] sm:$0xff]
      %v2686 = vld [vmem:[%s258 + $0x112] sm:$0xff]
      %v2687 = vld [vmem:[%s258 + $0x122] sm:$0xff]
      %v2688 = vld [vmem:[%s258 + $0x12a] sm:$0xff]
      %v2689 = vld [vmem:[%s258 + $0x13a] sm:$0xff]
      %v2690 = vld [vmem:[%s258 + $0x142] sm:$0xff]
      %v2691 = vld [vmem:[%s258 + $0x152] sm:$0xff]
      %v2692 = vld [vmem:[%s258 + $0x15a] sm:$0xff]
      %v2693 = vld [vmem:[%s258 + $0x16a] sm:$0xff]
      %v2694 = vld [vmem:[%s258 + $0x172] sm:$0xff]
      %v2695 = vmax.f32 %v2631, %v2663
      %v2696 = vmax.f32 %v2632, %v2664
      %v2697 = vmax.f32 %v2633, %v2665
      %v2698 = vmax.f32 %v2634, %v2666
      %v2699 = vmax.f32 %v2635, %v2667
      %v2700 = vmax.f32 %v2636, %v2668
      %v2701 = vmax.f32 %v2637, %v2669
      %v2702 = vmax.f32 %v2638, %v2670
      %v2703 = vmax.f32 %v2639, %v2671
      %v2704 = vmax.f32 %v2640, %v2672
      %v2705 = vmax.f32 %v2641, %v2673
      %v2706 = vmax.f32 %v2642, %v2674
      %v2707 = vmax.f32 %v2643, %v2675
      %v2708 = vmax.f32 %v2644, %v2676
      %v2709 = vmax.f32 %v2645, %v2677
      %v2710 = vmax.f32 %v2646, %v2678
      %v2711 = vmax.f32 %v2647, %v2679
      %v2712 = vmax.f32 %v2648, %v2680
      %v2713 = vmax.f32 %v2649, %v2681
      %v2714 = vmax.f32 %v2650, %v2682
      %v2715 = vmax.f32 %v2651, %v2683
      %v2716 = vmax.f32 %v2652, %v2684
      %v2717 = vmax.f32 %v2653, %v2685
      %v2718 = vmax.f32 %v2654, %v2686
      %v2719 = vmax.f32 %v2655, %v2687
      %v2720 = vmax.f32 %v2656, %v2688
      %v2721 = vmax.f32 %v2657, %v2689
      %v2722 = vmax.f32 %v2658, %v2690
      %v2723 = vmax.f32 %v2659, %v2691
      %v2724 = vmax.f32 %v2660, %v2692
      %v2725 = vmax.f32 %v2661, %v2693
      %v2726 = vmax.f32 %v2662, %v2694
      %v2727 = vld [vmem:[%s258 + $0x3] sm:$0xff]
      %v2728 = vld [vmem:[%s258 + $0xb] sm:$0xff]
      %v2729 = vld [vmem:[%s258 + $0x1b] sm:$0xff]
      %v2730 = vld [vmem:[%s258 + $0x23] sm:$0xff]
      %v2731 = vld [vmem:[%s258 + $0x33] sm:$0xff]
      %v2732 = vld [vmem:[%s258 + $0x3b] sm:$0xff]
      %v2733 = vld [vmem:[%s258 + $0x4b] sm:$0xff]
      %v2734 = vld [vmem:[%s258 + $0x53] sm:$0xff]
      %v2735 = vld [vmem:[%s258 + $0x63] sm:$0xff]
      %v2736 = vld [vmem:[%s258 + $0x6b] sm:$0xff]
      %v2737 = vld [vmem:[%s258 + $0x7b] sm:$0xff]
      %v2738 = vld [vmem:[%s258 + $0x83] sm:$0xff]
      %v2739 = vld [vmem:[%s258 + $0x93] sm:$0xff]
      %v2740 = vld [vmem:[%s258 + $0x9b] sm:$0xff]
      %v2741 = vld [vmem:[%s258 + $0xab] sm:$0xff]
      %v2742 = vld [vmem:[%s258 + $0xb3] sm:$0xff]
      %v2743 = vld [vmem:[%s258 + $0xc3] sm:$0xff]
      %v2744 = vld [vmem:[%s258 + $0xcb] sm:$0xff]
      %v2745 = vld [vmem:[%s258 + $0xdb] sm:$0xff]
      %v2746 = vld [vmem:[%s258 + $0xe3] sm:$0xff]
      %v2747 = vld [vmem:[%s258 + $0xf3] sm:$0xff]
      %v2748 = vld [vmem:[%s258 + $0xfb] sm:$0xff]
      %v2749 = vld [vmem:[%s258 + $0x10b] sm:$0xff]
      %v2750 = vld [vmem:[%s258 + $0x113] sm:$0xff]
      %v2751 = vld [vmem:[%s258 + $0x123] sm:$0xff]
      %v2752 = vld [vmem:[%s258 + $0x12b] sm:$0xff]
      %v2753 = vld [vmem:[%s258 + $0x13b] sm:$0xff]
      %v2754 = vld [vmem:[%s258 + $0x143] sm:$0xff]
      %v2755 = vld [vmem:[%s258 + $0x153] sm:$0xff]
      %v2756 = vld [vmem:[%s258 + $0x15b] sm:$0xff]
      %v2757 = vld [vmem:[%s258 + $0x16b] sm:$0xff]
      %v2758 = vld [vmem:[%s258 + $0x173] sm:$0xff]
      %v2759 = vmax.f32 %v2695, %v2727
      %v2760 = vmax.f32 %v2696, %v2728
      %v2761 = vmax.f32 %v2697, %v2729
      %v2762 = vmax.f32 %v2698, %v2730
      %v2763 = vmax.f32 %v2699, %v2731
      %v2764 = vmax.f32 %v2700, %v2732
      %v2765 = vmax.f32 %v2701, %v2733
      %v2766 = vmax.f32 %v2702, %v2734
      %v2767 = vmax.f32 %v2703, %v2735
      %v2768 = vmax.f32 %v2704, %v2736
      %v2769 = vmax.f32 %v2705, %v2737
      %v2770 = vmax.f32 %v2706, %v2738
      %v2771 = vmax.f32 %v2707, %v2739
      %v2772 = vmax.f32 %v2708, %v2740
      %v2773 = vmax.f32 %v2709, %v2741
      %v2774 = vmax.f32 %v2710, %v2742
      %v2775 = vmax.f32 %v2711, %v2743
      %v2776 = vmax.f32 %v2712, %v2744
      %v2777 = vmax.f32 %v2713, %v2745
      %v2778 = vmax.f32 %v2714, %v2746
      %v2779 = vmax.f32 %v2715, %v2747
      %v2780 = vmax.f32 %v2716, %v2748
      %v2781 = vmax.f32 %v2717, %v2749
      %v2782 = vmax.f32 %v2718, %v2750
      %v2783 = vmax.f32 %v2719, %v2751
      %v2784 = vmax.f32 %v2720, %v2752
      %v2785 = vmax.f32 %v2721, %v2753
      %v2786 = vmax.f32 %v2722, %v2754
      %v2787 = vmax.f32 %v2723, %v2755
      %v2788 = vmax.f32 %v2724, %v2756
      %v2789 = vmax.f32 %v2725, %v2757
      %v2790 = vmax.f32 %v2726, %v2758
      %v2791 = vld [vmem:[%s258 + $0x4] sm:$0xff]
      %v2792 = vld [vmem:[%s258 + $0xc] sm:$0xff]
      %v2793 = vld [vmem:[%s258 + $0x1c] sm:$0xff]
      %v2794 = vld [vmem:[%s258 + $0x24] sm:$0xff]
      %v2795 = vld [vmem:[%s258 + $0x34] sm:$0xff]
      %v2796 = vld [vmem:[%s258 + $0x3c] sm:$0xff]
      %v2797 = vld [vmem:[%s258 + $0x4c] sm:$0xff]
      %v2798 = vld [vmem:[%s258 + $0x54] sm:$0xff]
      %v2799 = vld [vmem:[%s258 + $0x64] sm:$0xff]
      %v2800 = vld [vmem:[%s258 + $0x6c] sm:$0xff]
      %v2801 = vld [vmem:[%s258 + $0x7c] sm:$0xff]
      %v2802 = vld [vmem:[%s258 + $0x84] sm:$0xff]
      %v2803 = vld [vmem:[%s258 + $0x94] sm:$0xff]
      %v2804 = vld [vmem:[%s258 + $0x9c] sm:$0xff]
      %v2805 = vld [vmem:[%s258 + $0xac] sm:$0xff]
      %v2806 = vld [vmem:[%s258 + $0xb4] sm:$0xff]
      %v2807 = vld [vmem:[%s258 + $0xc4] sm:$0xff]
      %v2808 = vld [vmem:[%s258 + $0xcc] sm:$0xff]
      %v2809 = vld [vmem:[%s258 + $0xdc] sm:$0xff]
      %v2810 = vld [vmem:[%s258 + $0xe4] sm:$0xff]
      %v2811 = vld [vmem:[%s258 + $0xf4] sm:$0xff]
      %v2812 = vld [vmem:[%s258 + $0xfc] sm:$0xff]
      %v2813 = vld [vmem:[%s258 + $0x10c] sm:$0xff]
      %v2814 = vld [vmem:[%s258 + $0x114] sm:$0xff]
      %v2815 = vld [vmem:[%s258 + $0x124] sm:$0xff]
      %v2816 = vld [vmem:[%s258 + $0x12c] sm:$0xff]
      %v2817 = vld [vmem:[%s258 + $0x13c] sm:$0xff]
      %v2818 = vld [vmem:[%s258 + $0x144] sm:$0xff]
      %v2819 = vld [vmem:[%s258 + $0x154] sm:$0xff]
      %v2820 = vld [vmem:[%s258 + $0x15c] sm:$0xff]
      %v2821 = vld [vmem:[%s258 + $0x16c] sm:$0xff]
      %v2822 = vld [vmem:[%s258 + $0x174] sm:$0xff]
      %v2823 = vmax.f32 %v2759, %v2791
      %v2824 = vmax.f32 %v2760, %v2792
      %v2825 = vmax.f32 %v2761, %v2793
      %v2826 = vmax.f32 %v2762, %v2794
      %v2827 = vmax.f32 %v2763, %v2795
      %v2828 = vmax.f32 %v2764, %v2796
      %v2829 = vmax.f32 %v2765, %v2797
      %v2830 = vmax.f32 %v2766, %v2798
      %v2831 = vmax.f32 %v2767, %v2799
      %v2832 = vmax.f32 %v2768, %v2800
      %v2833 = vmax.f32 %v2769, %v2801
      %v2834 = vmax.f32 %v2770, %v2802
      %v2835 = vmax.f32 %v2771, %v2803
      %v2836 = vmax.f32 %v2772, %v2804
      %v2837 = vmax.f32 %v2773, %v2805
      %v2838 = vmax.f32 %v2774, %v2806
      %v2839 = vmax.f32 %v2775, %v2807
      %v2840 = vmax.f32 %v2776, %v2808
      %v2841 = vmax.f32 %v2777, %v2809
      %v2842 = vmax.f32 %v2778, %v2810
      %v2843 = vmax.f32 %v2779, %v2811
      %v2844 = vmax.f32 %v2780, %v2812
      %v2845 = vmax.f32 %v2781, %v2813
      %v2846 = vmax.f32 %v2782, %v2814
      %v2847 = vmax.f32 %v2783, %v2815
      %v2848 = vmax.f32 %v2784, %v2816
      %v2849 = vmax.f32 %v2785, %v2817
      %v2850 = vmax.f32 %v2786, %v2818
      %v2851 = vmax.f32 %v2787, %v2819
      %v2852 = vmax.f32 %v2788, %v2820
      %v2853 = vmax.f32 %v2789, %v2821
      %v2854 = vmax.f32 %v2790, %v2822
      %2855 = vst.msk [vmem:[%s226] sm:$0xff] %vm243, %v2823
      %2856 = vst.msk [vmem:[%s226 + $0x8] sm:$0xff] %vm243, %v2824
      %2857 = vst.msk [vmem:[%s226 + $0x10] sm:$0xff] %vm243, %v2825
      %2858 = vst.msk [vmem:[%s226 + $0x18] sm:$0xff] %vm243, %v2826
      %2859 = vst.msk [vmem:[%s226 + $0x20] sm:$0xff] %vm243, %v2827
      %2860 = vst.msk [vmem:[%s226 + $0x28] sm:$0xff] %vm243, %v2828
      %2861 = vst.msk [vmem:[%s226 + $0x30] sm:$0xff] %vm243, %v2829
      %2862 = vst.msk [vmem:[%s226 + $0x38] sm:$0xff] %vm243, %v2830
      %2863 = vst.msk [vmem:[%s226 + $0x40] sm:$0xff] %vm243, %v2831
      %2864 = vst.msk [vmem:[%s226 + $0x48] sm:$0xff] %vm243, %v2832
      %2865 = vst.msk [vmem:[%s226 + $0x50] sm:$0xff] %vm243, %v2833
      %2866 = vst.msk [vmem:[%s226 + $0x58] sm:$0xff] %vm243, %v2834
      %2867 = vst.msk [vmem:[%s226 + $0x60] sm:$0xff] %vm243, %v2835
      %2868 = vst.msk [vmem:[%s226 + $0x68] sm:$0xff] %vm243, %v2836
      %2869 = vst.msk [vmem:[%s226 + $0x70] sm:$0xff] %vm243, %v2837
      %2870 = vst.msk [vmem:[%s226 + $0x78] sm:$0xff] %vm243, %v2838
      %2871 = vst.msk [vmem:[%s226 + $0x80] sm:$0xff] %vm243, %v2839
      %2872 = vst.msk [vmem:[%s226 + $0x88] sm:$0xff] %vm243, %v2840
      %2873 = vst.msk [vmem:[%s226 + $0x90] sm:$0xff] %vm243, %v2841
      %2874 = vst.msk [vmem:[%s226 + $0x98] sm:$0xff] %vm243, %v2842
      %2875 = vst.msk [vmem:[%s226 + $0xa0] sm:$0xff] %vm243, %v2843
      %2876 = vst.msk [vmem:[%s226 + $0xa8] sm:$0xff] %vm243, %v2844
      %2877 = vst.msk [vmem:[%s226 + $0xb0] sm:$0xff] %vm243, %v2845
      %2878 = vst.msk [vmem:[%s226 + $0xb8] sm:$0xff] %vm243, %v2846
      %2879 = vst.msk [vmem:[%s226 + $0xc0] sm:$0xff] %vm243, %v2847
      %2880 = vst.msk [vmem:[%s226 + $0xc8] sm:$0xff] %vm243, %v2848
      %2881 = vst.msk [vmem:[%s226 + $0xd0] sm:$0xff] %vm243, %v2849
      %2882 = vst.msk [vmem:[%s226 + $0xd8] sm:$0xff] %vm243, %v2850
      %2883 = vst.msk [vmem:[%s226 + $0xe0] sm:$0xff] %vm243, %v2851
      %2884 = vst.msk [vmem:[%s226 + $0xe8] sm:$0xff] %vm243, %v2852
      %2885 = vst.msk [vmem:[%s226 + $0xf0] sm:$0xff] %vm243, %v2853
      %2886 = vst.msk [vmem:[%s226 + $0xf8] sm:$0xff] %vm243, %v2854
      %p2887 = scmp.lt.s32.totalorder %s19, 1
      %s2888 = scalar_select %p2887, %s19, 1
      %p2889 = scmp.lt.s32.totalorder %s20, 0
      %s2890 = scalar_select %p2889, %s20, 0
      %s2891 = smul.addr %s2888, 32
      %s2892 = sadd.s32 %s2890, %s2891
      %s2893 = smul.addr %s2892, 8
      %s2894 = scalar_lea.vmem %s1, %s2893
      %p2895 = scmp.lt.s32.totalorder %s19, 1
      %s2896 = scalar_select %p2895, %s19, 1
      %p2897 = scmp.lt.s32.totalorder %s20, 0
      %s2898 = scalar_select %p2897, %s20, 0
      %s2899 = smul.addr %s2896, 32
      %s2900 = sadd.s32 %s2898, %s2899
      %s2901 = smul.addr %s2900, 8
      %s2902 = scalar_lea.vmem %s2, %s2901
      %p2903 = scmp.lt.s32.totalorder %s19, 1
      %s2904 = scalar_select %p2903, %s19, 1
      %p2905 = scmp.lt.s32.totalorder %s20, 0
      %s2906 = scalar_select %p2905, %s20, 0
      %s2907 = smul.addr %s2904, 32
      %s2908 = sadd.s32 %s2906, %s2907
      %s2909 = smul.addr %s2908, 8
      %s2910 = scalar_lea.vmem %s3, %s2909
      // Predicated region
      $region25: #{tpu_custom_call.1} parent=23 // pred_check
        %p2911 = pneg %p75
      $region26: #{tpu_custom_call.1} parent=23 // pred_check_branch
        %2913 = sbr.rel (%p2911) target = $region28
      $region27: #{tpu_custom_call.1} parent=23 // pred_region
        _
      $region28: #{tpu_custom_call.1} parent=23 // pred_fallthru
        _
      // Predicated region
      $region29: #{tpu_custom_call.1} parent=23 // pred_check
        %p2914 = pneg %p103
      $region30: #{tpu_custom_call.1} parent=23 // pred_check_branch
        %2916 = sbr.rel (%p2914) target = $region32
      $region31: #{tpu_custom_call.1} parent=23 // pred_region
        _
      $region32: #{tpu_custom_call.1} parent=23 // pred_fallthru
        _
      // Predicated region
      $region33: #{tpu_custom_call.1} parent=23 // pred_check
        %p2917 = pneg %p131
      $region34: #{tpu_custom_call.1} parent=23 // pred_check_branch
        %2919 = sbr.rel (%p2917) target = $region36
      $region35: #{tpu_custom_call.1} parent=23 // pred_region
        _
      $region36: #{tpu_custom_call.1} parent=23 // pred_fallthru
        _
    $region24: #{tpu_custom_call.1} parent=5 // pred_fallthru
      _
    %p2920 = scmp.le.s32.totalorder 2, %s10
    // Predicated region
    $region37: #{tpu_custom_call.1} parent=5 // pred_check
      %p2921 = pneg %p2920
    $region38: #{tpu_custom_call.1} parent=5 // pred_check_branch
      %2923 = sbr.rel (%p2921) target = $region40
    $region39: #{tpu_custom_call.1} parent=5 // pred_region
      %s2924 = ssub.s32 %s10, 2
      // Predicated region
      $region41: #{tpu_custom_call.1} parent=39 // pred_check
        %p2925 = pneg %p81
      $region42: #{tpu_custom_call.1} parent=39 // pred_check_branch
        %2927 = sbr.rel (%p2925) target = $region44
      $region43: #{tpu_custom_call.1} parent=39 // pred_region
        %p2928 = scmp.lt.s32.totalorder %s21, 1
        %s2929 = scalar_select %p2928, %s21, 1
        %p2930 = scmp.lt.s32.totalorder %s22, 0
        %s2931 = scalar_select %p2930, %s22, 0
        %s2932 = smul.addr %s2929, 32
        %s2933 = sadd.s32 %s2931, %s2932
        %s2934 = smul.addr %s2933, 8
        %s2935 = scalar_lea.vmem %s1, %s2934
      $region44: #{tpu_custom_call.1} parent=39 // pred_fallthru
        _
      // Predicated region
      $region45: #{tpu_custom_call.1} parent=39 // pred_check
        %p2936 = pneg %p109
      $region46: #{tpu_custom_call.1} parent=39 // pred_check_branch
        %2938 = sbr.rel (%p2936) target = $region48
      $region47: #{tpu_custom_call.1} parent=39 // pred_region
        %p2939 = scmp.lt.s32.totalorder %s21, 1
        %s2940 = scalar_select %p2939, %s21, 1
        %p2941 = scmp.lt.s32.totalorder %s22, 0
        %s2942 = scalar_select %p2941, %s22, 0
        %s2943 = smul.addr %s2940, 32
        %s2944 = sadd.s32 %s2942, %s2943
        %s2945 = smul.addr %s2944, 8
        %s2946 = scalar_lea.vmem %s2, %s2945
      $region48: #{tpu_custom_call.1} parent=39 // pred_fallthru
        _
      // Predicated region
      $region49: #{tpu_custom_call.1} parent=39 // pred_check
        %p2947 = pneg %p137
      $region50: #{tpu_custom_call.1} parent=39 // pred_check_branch
        %2949 = sbr.rel (%p2947) target = $region52
      $region51: #{tpu_custom_call.1} parent=39 // pred_region
        %p2950 = scmp.lt.s32.totalorder %s21, 1
        %s2951 = scalar_select %p2950, %s21, 1
        %p2952 = scmp.lt.s32.totalorder %s22, 0
        %s2953 = scalar_select %p2952, %s22, 0
        %s2954 = smul.addr %s2951, 32
        %s2955 = sadd.s32 %s2953, %s2954
        %s2956 = smul.addr %s2955, 8
        %s2957 = scalar_lea.vmem %s3, %s2956
      $region52: #{tpu_custom_call.1} parent=39 // pred_fallthru
        _
    $region40: #{tpu_custom_call.1} parent=5 // pred_fallthru
      _
  $region6: #{tpu_custom_call.1} parent=0 // loop_footer
    %s14 = sadd.s32 1, %s10
  $region7: #{tpu_custom_call.1} parent=0 // loop_footer_branch
    %9 = sbr.rel target = $region3
  $region8: #{tpu_custom_call.1} parent=0 // loop_exit
    _

</llo_original>
